<compile_context>
chip_gen: v5e
topology: v5e:2x2
jax: 0.10.0
libtpu: 0.0.40
codegen_flags: <defaults>
</compile_context>

<pallas_src>
import functools

import jax
import jax.numpy as jnp
from jax.experimental import pallas as pl
from jax.experimental.pallas import tpu as pltpu

EPS = 1e-5
LANES = 128
SUBLANES = 8


def _round_up(x, m):
    return (x + m - 1) // m * m


def _conv3x3_flat(h, w_ref, wp):
    """3x3 'same' conv on a zero-halo-padded activation flattened to (Hp*Wp, C).

    Tap (dy, dx) needs h[row + (dy-1)*wp + (dx-1)]; we realize it as a static
    circular sublane roll (XLU) followed by a (Hp*Wp, C) @ (C, C) MXU matmul.
    Wrapped / out-of-window values only ever land on halo rows, which the
    caller masks to zero afterwards, so the circular roll is exact.
    """
    hwp = h.shape[0]
    acc = jnp.zeros(h.shape, jnp.float32)
    for tap in range(9):
        dy, dx = tap // 3, tap % 3
        off = (dy - 1) * wp + (dx - 1)
        src = h if off == 0 else pltpu.roll(h, (-off) % hwp, axis=0)
        acc = acc + jnp.dot(src, w_ref[tap],
                            preferred_element_type=jnp.float32)
    return acc


def conv1_stats_kernel(x_ref, w_ref, b_ref, mask_ref,
                       y_ref, s_ref, q_ref, *, wp):
    """conv1 (raw, pre-BN) + fused per-sample sum / sum-of-squares."""
    y = (_conv3x3_flat(x_ref[0], w_ref, wp) + b_ref[...]) * mask_ref[...]
    y_ref[0] = y
    s_ref[0] = jnp.sum(y, axis=0, keepdims=True)
    q_ref[0] = jnp.sum(y * y, axis=0, keepdims=True)


def bn_relu_conv2_stats_kernel(y1_ref, sc_ref, sh_ref, w_ref, b_ref, mask_ref,
                               y_ref, s_ref, q_ref, *, wp):
    """BN1 (folded scale/shift) + ReLU + conv2 (raw) + fused moments."""
    h = jnp.maximum(y1_ref[0] * sc_ref[...] + sh_ref[...], 0.0) * mask_ref[...]
    y = (_conv3x3_flat(h, w_ref, wp) + b_ref[...]) * mask_ref[...]
    y_ref[0] = y
    s_ref[0] = jnp.sum(y, axis=0, keepdims=True)
    q_ref[0] = jnp.sum(y * y, axis=0, keepdims=True)


def bn_residual_relu_kernel(y2_ref, sc_ref, sh_ref, x_ref, o_ref):
    """BN2 (folded) + residual add + ReLU; halo/padded lanes sliced off by wrapper."""
    o_ref[0] = jnp.maximum(
        y2_ref[0] * sc_ref[...] + sh_ref[...] + x_ref[0], 0.0)


def residual_block(x_nchw, params):
    """x_nchw: (N, C, H, W) float32, matching the PyTorch module's layout."""
    w1, b1, g1, be1, w2, b2, g2, be2 = params
    N, C, H, W = x_nchw.shape
    assert w1.shape[-1] == C, "residual add requires in_channels == out_channels"

    CP = _round_up(C, LANES)              # lane-dense channel padding
    Hp = H + 2                            # conv halo rows
    Wp = _round_up(W + 2, SUBLANES)       # conv halo + sublane-aligned width
    HWp = Hp * Wp
    inv_cnt = 1.0 / float(N * H * W)
    f32 = jnp.float32

    # NHWC, zero-padded (spatial halo + channel lanes), flattened to 2-D rows.
    x = jnp.transpose(x_nchw, (0, 2, 3, 1)).astype(f32)
    xpad = jnp.zeros((N, Hp, Wp, CP), f32).at[:, 1:H + 1, 1:W + 1, :C].set(x)
    x_flat = xpad.reshape(N, HWp, CP)

    # interior mask: 1 inside the HxW window, 0 on halo / width padding.
    mask2d = jnp.zeros((Hp, Wp), f32).at[1:H + 1, 1:W + 1].set(1.0)
    mask = jnp.broadcast_to(mask2d.reshape(HWp, 1), (HWp, CP))

    def pack_w(w):                        # (3, 3, Cin, Cout) HWIO -> (9, CP, CP)
        return jnp.zeros((9, CP, CP), f32).at[:, :C, :C].set(
            w.astype(f32).reshape(9, C, C))

    def pack_row(v):                      # (C,) -> (1, CP)
        return jnp.zeros((1, CP), f32).at[0, :C].set(v.astype(f32))

    w1p, w2p = pack_w(w1), pack_w(w2)
    b1p, b2p = pack_row(b1), pack_row(b2)

    cparams = pltpu.CompilerParams(
        dimension_semantics=("parallel",),
        vmem_limit_bytes=32 * 1024 * 1024)

    act_spec = pl.BlockSpec((1, HWp, CP), lambda n: (n, 0, 0))
    w_spec = pl.BlockSpec((9, CP, CP), lambda n: (0, 0, 0))
    row_spec = pl.BlockSpec((1, CP), lambda n: (0, 0))
    mask_spec = pl.BlockSpec((HWp, CP), lambda n: (0, 0))
    stat_spec = pl.BlockSpec((1, 1, CP), lambda n: (n, 0, 0))

    act_shape = jax.ShapeDtypeStruct((N, HWp, CP), f32)
    stat_shape = jax.ShapeDtypeStruct((N, 1, CP), f32)

    # ---- pass 1: conv1 + per-sample moments --------------------------------
    y1, s1, q1 = pl.pallas_call(
        functools.partial(conv1_stats_kernel, wp=Wp),
        grid=(N,),
        in_specs=[act_spec, w_spec, row_spec, mask_spec],
        out_specs=(act_spec, stat_spec, stat_spec),
        out_shape=(act_shape, stat_shape, stat_shape),
        compiler_params=cparams,
    )(x_flat, w1p, b1p, mask)

    def bn_fold(s, q, g, be):
        # fold training-mode batch statistics into per-channel scale / shift
        mean = jnp.sum(s[:, 0, :], axis=0) * inv_cnt
        var = jnp.maximum(
            jnp.sum(q[:, 0, :], axis=0) * inv_cnt - mean * mean, 0.0)
        scale = pack_row(g)[0] * jax.lax.rsqrt(var + EPS)
        shift = pack_row(be)[0] - mean * scale
        return scale.reshape(1, CP), shift.reshape(1, CP)

    sc1, sh1 = bn_fold(s1, q1, g1, be1)

    # ---- pass 2: BN1 + ReLU + conv2 + per-sample moments --------------------
    y2, s2, q2 = pl.pallas_call(
        functools.partial(bn_relu_conv2_stats_kernel, wp=Wp),
        grid=(N,),
        in_specs=[act_spec, row_spec, row_spec, w_spec, row_spec, mask_spec],
        out_specs=(act_spec, stat_spec, stat_spec),
        out_shape=(act_shape, stat_shape, stat_shape),
        compiler_params=cparams,
    )(y1, sc1, sh1, w2p, b2p, mask)

    sc2, sh2 = bn_fold(s2, q2, g2, be2)

    # ---- pass 3: BN2 + residual add + ReLU -----------------------------------
    out_flat = pl.pallas_call(
        bn_residual_relu_kernel,
        grid=(N,),
        in_specs=[act_spec, row_spec, row_spec, act_spec],
        out_specs=act_spec,
        out_shape=act_shape,
        compiler_params=cparams,
    )(y2, sc2, sh2, x_flat)

    out = out_flat.reshape(N, Hp, Wp, CP)[:, 1:H + 1, 1:W + 1, :C]
    return jnp.transpose(out, (0, 3, 1, 2))     # back to NCHW


def reference_forward_nhwc(x, params):
    """Pure-JAX reference (NHWC) for correctness checking."""
    w1, b1, g1, be1, w2, b2, g2, be2 = params

    def conv(y, w, b):
        return jax.lax.conv_general_dilated(
            y, w, window_strides=(1, 1), padding="SAME",
            dimension_numbers=("NHWC", "HWIO", "NHWC")) + b

    def bn(y, g, be):
        m = jnp.mean(y, axis=(0, 1, 2), keepdims=True)
        v = jnp.mean((y - m) ** 2, axis=(0, 1, 2), keepdims=True)
        return (y - m) * jax.lax.rsqrt(v + EPS) * g + be

    h = jnp.maximum(bn(conv(x, w1, b1), g1, be1), 0.0)
    h = bn(conv(h, w2, b2), g2, be2)
    return jnp.maximum(h + x, 0.0)


if __name__ == "__main__":
    # residual add requires in_channels == out_channels
    N, C, H, W = 2, 8, 16, 16
    key = jax.random.PRNGKey(0)
    ks = jax.random.split(key, 5)

    x_nchw = jax.random.normal(ks[0], (N, C, H, W), jnp.float32)

    # deterministic parameter init (PyTorch-style bounds for conv, BN defaults)
    fan_in = C * 3 * 3
    bound = 1.0 / (fan_in ** 0.5)
    w1 = jax.random.uniform(ks[1], (3, 3, C, C), jnp.float32, -bound, bound)
    b1 = jax.random.uniform(ks[2], (C,), jnp.float32, -bound, bound)
    w2 = jax.random.uniform(ks[3], (3, 3, C, C), jnp.float32, -bound, bound)
    b2 = jax.random.uniform(ks[4], (C,), jnp.float32, -bound, bound)
    g1 = jnp.ones((C,), jnp.float32)
    be1 = jnp.zeros((C,), jnp.float32)
    g2 = jnp.ones((C,), jnp.float32)
    be2 = jnp.zeros((C,), jnp.float32)
    params = (w1, b1, g1, be1, w2, b2, g2, be2)

    out = jax.block_until_ready(residual_block(x_nchw, params))

    ref_nhwc = reference_forward_nhwc(
        jnp.transpose(x_nchw, (0, 2, 3, 1)), params)
    ref = jnp.transpose(ref_nhwc, (0, 3, 1, 2))

    assert out.shape == (N, C, H, W)
    assert jnp.allclose(out, ref, atol=2e-3, rtol=2e-3), (
        "mismatch vs pure-JAX reference")

    print("KERNEL_OK")
</pallas_src>

<mosaic_0001>
module attributes {stable_mosaic.version = 11 : i64} {
  func.func @conv1_stats_kernel(%arg0: i32, %arg1: memref<1x432x128xf32, #tpu.memory_space<vmem>>, %arg2: memref<9x128x128xf32, #tpu.memory_space<vmem>>, %arg3: memref<1x128xf32, #tpu.memory_space<vmem>>, %arg4: memref<432x128xf32, #tpu.memory_space<vmem>>, %arg5: memref<1x432x128xf32, #tpu.memory_space<vmem>>, %arg6: memref<1x1x128xf32, #tpu.memory_space<vmem>>, %arg7: memref<1x1x128xf32, #tpu.memory_space<vmem>>) attributes {dimension_semantics = [#tpu.dimension_semantics<parallel>], iteration_bounds = array<i64: 2>, scalar_prefetch = 0 : i64, scratch_operands = 0 : i64, tpu.core_type = #tpu.core_type<tc>, window_params = [{transform_indices = @transform_0, window_bounds = array<i64: 1, 432, 128>}, {pipeline_mode = #tpu.pipeline_mode<synchronous>, transform_indices = @transform_1, window_bounds = array<i64: 9, 128, 128>}, {pipeline_mode = #tpu.pipeline_mode<synchronous>, transform_indices = @transform_2, window_bounds = array<i64: 1, 128>}, {pipeline_mode = #tpu.pipeline_mode<synchronous>, transform_indices = @transform_3, window_bounds = array<i64: 432, 128>}, {transform_indices = @transform_4, window_bounds = array<i64: 1, 432, 128>}, {transform_indices = @transform_5, window_bounds = array<i64: 1, 1, 128>}, {transform_indices = @transform_6, window_bounds = array<i64: 1, 1, 128>}]} {
    %c0 = arith.constant 0 : index
    %c0_0 = arith.constant 0 : index
    %c0_1 = arith.constant 0 : index
    %0 = vector.load %arg1[%c0, %c0_0, %c0_1] : memref<1x432x128xf32, #tpu.memory_space<vmem>>, vector<1x432x128xf32>
    %1 = vector.shape_cast %0 : vector<1x432x128xf32> to vector<432x128xf32>
    %cst = arith.constant 0.000000e+00 : f32
    %2 = vector.broadcast %cst : f32 to vector<432x128xf32>
    %c25_i32 = arith.constant 25 : i32
    %3 = tpu.dynamic_rotate %1 by %c25_i32 dim 0 : vector<432x128xf32>, i32 -> vector<432x128xf32>
    %c0_2 = arith.constant 0 : index
    %c0_3 = arith.constant 0 : index
    %c0_4 = arith.constant 0 : index
    %4 = vector.load %arg2[%c0_2, %c0_3, %c0_4] : memref<9x128x128xf32, #tpu.memory_space<vmem>>, vector<1x128x128xf32>
    %5 = vector.shape_cast %4 : vector<1x128x128xf32> to vector<128x128xf32>
    %cst_5 = arith.constant dense<0.000000e+00> : vector<432x128xf32>
    %6 = tpu.matmul %3, %5, %cst_5 {dimension_numbers = #tpu.dot_dimension_numbers<[1], [0], [0], [1], [0, 0, 1, 1], [], []>} : vector<432x128xf32>, vector<128x128xf32>, vector<432x128xf32> -> vector<432x128xf32>
    %7 = arith.addf %2, %6 : vector<432x128xf32>
    %c24_i32 = arith.constant 24 : i32
    %8 = tpu.dynamic_rotate %1 by %c24_i32 dim 0 : vector<432x128xf32>, i32 -> vector<432x128xf32>
    %c1 = arith.constant 1 : index
    %c0_6 = arith.constant 0 : index
    %c0_7 = arith.constant 0 : index
    %9 = vector.load %arg2[%c1, %c0_6, %c0_7] : memref<9x128x128xf32, #tpu.memory_space<vmem>>, vector<1x128x128xf32>
    %10 = vector.shape_cast %9 : vector<1x128x128xf32> to vector<128x128xf32>
    %cst_8 = arith.constant dense<0.000000e+00> : vector<432x128xf32>
    %11 = tpu.matmul %8, %10, %cst_8 {dimension_numbers = #tpu.dot_dimension_numbers<[1], [0], [0], [1], [0, 0, 1, 1], [], []>} : vector<432x128xf32>, vector<128x128xf32>, vector<432x128xf32> -> vector<432x128xf32>
    %12 = arith.addf %7, %11 : vector<432x128xf32>
    %c23_i32 = arith.constant 23 : i32
    %13 = tpu.dynamic_rotate %1 by %c23_i32 dim 0 : vector<432x128xf32>, i32 -> vector<432x128xf32>
    %c2 = arith.constant 2 : index
    %c0_9 = arith.constant 0 : index
    %c0_10 = arith.constant 0 : index
    %14 = vector.load %arg2[%c2, %c0_9, %c0_10] : memref<9x128x128xf32, #tpu.memory_space<vmem>>, vector<1x128x128xf32>
    %15 = vector.shape_cast %14 : vector<1x128x128xf32> to vector<128x128xf32>
    %cst_11 = arith.constant dense<0.000000e+00> : vector<432x128xf32>
    %16 = tpu.matmul %13, %15, %cst_11 {dimension_numbers = #tpu.dot_dimension_numbers<[1], [0], [0], [1], [0, 0, 1, 1], [], []>} : vector<432x128xf32>, vector<128x128xf32>, vector<432x128xf32> -> vector<432x128xf32>
    %17 = arith.addf %12, %16 : vector<432x128xf32>
    %c1_i32 = arith.constant 1 : i32
    %18 = tpu.dynamic_rotate %1 by %c1_i32 dim 0 : vector<432x128xf32>, i32 -> vector<432x128xf32>
    %c3 = arith.constant 3 : index
    %c0_12 = arith.constant 0 : index
    %c0_13 = arith.constant 0 : index
    %19 = vector.load %arg2[%c3, %c0_12, %c0_13] : memref<9x128x128xf32, #tpu.memory_space<vmem>>, vector<1x128x128xf32>
    %20 = vector.shape_cast %19 : vector<1x128x128xf32> to vector<128x128xf32>
    %cst_14 = arith.constant dense<0.000000e+00> : vector<432x128xf32>
    %21 = tpu.matmul %18, %20, %cst_14 {dimension_numbers = #tpu.dot_dimension_numbers<[1], [0], [0], [1], [0, 0, 1, 1], [], []>} : vector<432x128xf32>, vector<128x128xf32>, vector<432x128xf32> -> vector<432x128xf32>
    %22 = arith.addf %17, %21 : vector<432x128xf32>
    %c4 = arith.constant 4 : index
    %c0_15 = arith.constant 0 : index
    %c0_16 = arith.constant 0 : index
    %23 = vector.load %arg2[%c4, %c0_15, %c0_16] : memref<9x128x128xf32, #tpu.memory_space<vmem>>, vector<1x128x128xf32>
    %24 = vector.shape_cast %23 : vector<1x128x128xf32> to vector<128x128xf32>
    %cst_17 = arith.constant dense<0.000000e+00> : vector<432x128xf32>
    %25 = tpu.matmul %1, %24, %cst_17 {dimension_numbers = #tpu.dot_dimension_numbers<[1], [0], [0], [1], [0, 0, 1, 1], [], []>} : vector<432x128xf32>, vector<128x128xf32>, vector<432x128xf32> -> vector<432x128xf32>
    %26 = arith.addf %22, %25 : vector<432x128xf32>
    %c431_i32 = arith.constant 431 : i32
    %27 = tpu.dynamic_rotate %1 by %c431_i32 dim 0 : vector<432x128xf32>, i32 -> vector<432x128xf32>
    %c5 = arith.constant 5 : index
    %c0_18 = arith.constant 0 : index
    %c0_19 = arith.constant 0 : index
    %28 = vector.load %arg2[%c5, %c0_18, %c0_19] : memref<9x128x128xf32, #tpu.memory_space<vmem>>, vector<1x128x128xf32>
    %29 = vector.shape_cast %28 : vector<1x128x128xf32> to vector<128x128xf32>
    %cst_20 = arith.constant dense<0.000000e+00> : vector<432x128xf32>
    %30 = tpu.matmul %27, %29, %cst_20 {dimension_numbers = #tpu.dot_dimension_numbers<[1], [0], [0], [1], [0, 0, 1, 1], [], []>} : vector<432x128xf32>, vector<128x128xf32>, vector<432x128xf32> -> vector<432x128xf32>
    %31 = arith.addf %26, %30 : vector<432x128xf32>
    %c409_i32 = arith.constant 409 : i32
    %32 = tpu.dynamic_rotate %1 by %c409_i32 dim 0 : vector<432x128xf32>, i32 -> vector<432x128xf32>
    %c6 = arith.constant 6 : index
    %c0_21 = arith.constant 0 : index
    %c0_22 = arith.constant 0 : index
    %33 = vector.load %arg2[%c6, %c0_21, %c0_22] : memref<9x128x128xf32, #tpu.memory_space<vmem>>, vector<1x128x128xf32>
    %34 = vector.shape_cast %33 : vector<1x128x128xf32> to vector<128x128xf32>
    %cst_23 = arith.constant dense<0.000000e+00> : vector<432x128xf32>
    %35 = tpu.matmul %32, %34, %cst_23 {dimension_numbers = #tpu.dot_dimension_numbers<[1], [0], [0], [1], [0, 0, 1, 1], [], []>} : vector<432x128xf32>, vector<128x128xf32>, vector<432x128xf32> -> vector<432x128xf32>
    %36 = arith.addf %31, %35 : vector<432x128xf32>
    %c408_i32 = arith.constant 408 : i32
    %37 = tpu.dynamic_rotate %1 by %c408_i32 dim 0 : vector<432x128xf32>, i32 -> vector<432x128xf32>
    %c7 = arith.constant 7 : index
    %c0_24 = arith.constant 0 : index
    %c0_25 = arith.constant 0 : index
    %38 = vector.load %arg2[%c7, %c0_24, %c0_25] : memref<9x128x128xf32, #tpu.memory_space<vmem>>, vector<1x128x128xf32>
    %39 = vector.shape_cast %38 : vector<1x128x128xf32> to vector<128x128xf32>
    %cst_26 = arith.constant dense<0.000000e+00> : vector<432x128xf32>
    %40 = tpu.matmul %37, %39, %cst_26 {dimension_numbers = #tpu.dot_dimension_numbers<[1], [0], [0], [1], [0, 0, 1, 1], [], []>} : vector<432x128xf32>, vector<128x128xf32>, vector<432x128xf32> -> vector<432x128xf32>
    %41 = arith.addf %36, %40 : vector<432x128xf32>
    %c407_i32 = arith.constant 407 : i32
    %42 = tpu.dynamic_rotate %1 by %c407_i32 dim 0 : vector<432x128xf32>, i32 -> vector<432x128xf32>
    %c8 = arith.constant 8 : index
    %c0_27 = arith.constant 0 : index
    %c0_28 = arith.constant 0 : index
    %43 = vector.load %arg2[%c8, %c0_27, %c0_28] : memref<9x128x128xf32, #tpu.memory_space<vmem>>, vector<1x128x128xf32>
    %44 = vector.shape_cast %43 : vector<1x128x128xf32> to vector<128x128xf32>
    %cst_29 = arith.constant dense<0.000000e+00> : vector<432x128xf32>
    %45 = tpu.matmul %42, %44, %cst_29 {dimension_numbers = #tpu.dot_dimension_numbers<[1], [0], [0], [1], [0, 0, 1, 1], [], []>} : vector<432x128xf32>, vector<128x128xf32>, vector<432x128xf32> -> vector<432x128xf32>
    %46 = arith.addf %41, %45 : vector<432x128xf32>
    %c0_30 = arith.constant 0 : index
    %c0_31 = arith.constant 0 : index
    %47 = vector.load %arg3[%c0_30, %c0_31] : memref<1x128xf32, #tpu.memory_space<vmem>>, vector<1x128xf32>
    %48 = vector.broadcast %47 : vector<1x128xf32> to vector<432x128xf32>
    %49 = arith.addf %46, %48 : vector<432x128xf32>
    %c0_32 = arith.constant 0 : index
    %c0_33 = arith.constant 0 : index
    %50 = vector.load %arg4[%c0_32, %c0_33] : memref<432x128xf32, #tpu.memory_space<vmem>>, vector<432x128xf32>
    %51 = arith.mulf %49, %50 : vector<432x128xf32>
    %c0_34 = arith.constant 0 : index
    %c0_35 = arith.constant 0 : index
    %c0_36 = arith.constant 0 : index
    %52 = vector.load %arg5[%c0_34, %c0_35, %c0_36] : memref<1x432x128xf32, #tpu.memory_space<vmem>>, vector<1x432x128xf32>
    %53 = vector.shape_cast %52 : vector<1x432x128xf32> to vector<432x128xf32>
    %54 = vector.shape_cast %51 : vector<432x128xf32> to vector<1x432x128xf32>
    tpu.vector_store %arg5[%c0_34, %c0_35, %c0_36], %54 {strides = array<i32>} : memref<1x432x128xf32, #tpu.memory_space<vmem>>, vector<1x432x128xf32>,
    %cst_37 = arith.constant dense<0.000000e+00> : vector<128xf32>
    %55 = vector.multi_reduction <add>, %51, %cst_37 [0] : vector<432x128xf32> to vector<128xf32>
    %56 = vector.shape_cast %55 : vector<128xf32> to vector<1x128xf32>
    %c0_38 = arith.constant 0 : index
    %c0_39 = arith.constant 0 : index
    %c0_40 = arith.constant 0 : index
    %57 = vector.load %arg6[%c0_38, %c0_39, %c0_40] : memref<1x1x128xf32, #tpu.memory_space<vmem>>, vector<1x1x128xf32>
    %58 = vector.shape_cast %57 : vector<1x1x128xf32> to vector<1x128xf32>
    %59 = vector.shape_cast %56 : vector<1x128xf32> to vector<1x1x128xf32>
    tpu.vector_store %arg6[%c0_38, %c0_39, %c0_40], %59 {strides = array<i32>} : memref<1x1x128xf32, #tpu.memory_space<vmem>>, vector<1x1x128xf32>,
    %60 = arith.mulf %51, %51 : vector<432x128xf32>
    %cst_41 = arith.constant dense<0.000000e+00> : vector<128xf32>
    %61 = vector.multi_reduction <add>, %60, %cst_41 [0] : vector<432x128xf32> to vector<128xf32>
    %62 = vector.shape_cast %61 : vector<128xf32> to vector<1x128xf32>
    %c0_42 = arith.constant 0 : index
    %c0_43 = arith.constant 0 : index
    %c0_44 = arith.constant 0 : index
    %63 = vector.load %arg7[%c0_42, %c0_43, %c0_44] : memref<1x1x128xf32, #tpu.memory_space<vmem>>, vector<1x1x128xf32>
    %64 = vector.shape_cast %63 : vector<1x1x128xf32> to vector<1x128xf32>
    %65 = vector.shape_cast %62 : vector<1x128xf32> to vector<1x1x128xf32>
    tpu.vector_store %arg7[%c0_42, %c0_43, %c0_44], %65 {strides = array<i32>} : memref<1x1x128xf32, #tpu.memory_space<vmem>>, vector<1x1x128xf32>,
    return
  }
  func.func @transform_0(%arg0: i32) -> (i32, i32, i32) {
    %c0_i32 = arith.constant 0 : i32
    %c0_i32_0 = arith.constant 0 : i32
    %c0_i32_1 = arith.constant 0 : i32
    return %arg0, %c0_i32, %c0_i32_0 : i32, i32, i32
  }
  func.func @transform_1(%arg0: i32) -> (i32, i32, i32) {
    %c0_i32 = arith.constant 0 : i32
    %c0_i32_0 = arith.constant 0 : i32
    %c0_i32_1 = arith.constant 0 : i32
    %c0_i32_2 = arith.constant 0 : i32
    return %c0_i32, %c0_i32_0, %c0_i32_1 : i32, i32, i32
  }
  func.func @transform_2(%arg0: i32) -> (i32, i32) {
    %c0_i32 = arith.constant 0 : i32
    %c0_i32_0 = arith.constant 0 : i32
    %c0_i32_1 = arith.constant 0 : i32
    return %c0_i32, %c0_i32_0 : i32, i32
  }
  func.func @transform_3(%arg0: i32) -> (i32, i32) {
    %c0_i32 = arith.constant 0 : i32
    %c0_i32_0 = arith.constant 0 : i32
    %c0_i32_1 = arith.constant 0 : i32
    return %c0_i32, %c0_i32_0 : i32, i32
  }
  func.func @transform_4(%arg0: i32) -> (i32, i32, i32) {
    %c0_i32 = arith.constant 0 : i32
    %c0_i32_0 = arith.constant 0 : i32
    %c0_i32_1 = arith.constant 0 : i32
    return %arg0, %c0_i32, %c0_i32_0 : i32, i32, i32
  }
  func.func @transform_5(%arg0: i32) -> (i32, i32, i32) {
    %c0_i32 = arith.constant 0 : i32
    %c0_i32_0 = arith.constant 0 : i32
    %c0_i32_1 = arith.constant 0 : i32
    return %arg0, %c0_i32, %c0_i32_0 : i32, i32, i32
  }
  func.func @transform_6(%arg0: i32) -> (i32, i32, i32) {
    %c0_i32 = arith.constant 0 : i32
    %c0_i32_0 = arith.constant 0 : i32
    %c0_i32_1 = arith.constant 0 : i32
    return %arg0, %c0_i32, %c0_i32_0 : i32, i32, i32
  }
}

</mosaic_0001>

<llo_original>
// kernel: tpu_custom_call.1
$region0: #{tpu_custom_call.1}
  #allocation0 [shape = 'u32[]', space=smem, size = 0x4, offset = 0x4, fixed_abs, tag = 'smem constant byte address 0x4 - core index']
  #allocation1 [shape = 'u32[72,128]{1,0:T(1,128)}', space=vmem, size = 0x9000, scoped, tag = 'internal scratch']
  %s0 = inlined_call_operand.hbm [shape: f32[2,432,128], index: 0, kind: input, shape index: {}]
  %s1 = inlined_call_operand.hbm [shape: f32[9,128,128], index: 1, kind: input, shape index: {}]
  %s2 = inlined_call_operand.vmem [shape: f32[1,128], index: 2, kind: input, shape index: {}]
  %s3 = inlined_call_operand.hbm [shape: f32[432,128], index: 3, kind: input, shape index: {}]
  %s4 = inlined_call_operand.hbm [shape: f32[2,432,128], index: 4, kind: output, shape index: {0}]
  %s5 = inlined_call_operand.hbm [shape: f32[2,1,128], index: 5, kind: output, shape index: {1}]
  %s6 = inlined_call_operand.hbm [shape: f32[2,1,128], index: 6, kind: output, shape index: {2}]
  %7 = xla_tuple %s4, %s5, %s6
  %s8 = sld [smem:[#allocation0]]
  $region77: #{tpu_custom_call.1} parent=0
    _
  %s10 = ssub.s32 1, %s8
  %s11 = scalar_select 0, %s10, %s8
  $region1: #{tpu_custom_call.1} parent=0
    #allocation2 [shape = 'u8[442368]{0}', space=vmem, size = 0x6c000, scoped, tag = 'input window, operand 0']
    #allocation3 [shape = 's32[2]{0}', space=sflag, size = 0x8, scoped, tag = 'scoped memory for tpu_custom_call.1']
    #allocation4 [shape = 's32[2]{0}', space=sflag, size = 0x8, scoped, tag = 'scoped memory for tpu_custom_call.1']
    #allocation5 [shape = 'u8[589824]{0}', space=vmem, size = 0x90000, scoped, tag = 'input window, operand 1, single buffered']
    #allocation6 [shape = 's32[1]{0}', space=sflag, size = 0x4, scoped, tag = 'scoped memory for tpu_custom_call.1']
    #allocation7 [shape = 'u8[221184]{0}', space=vmem, size = 0x36000, scoped, tag = 'input window, operand 3, single buffered']
    #allocation8 [shape = 'u8[442368]{0}', space=vmem, size = 0x6c000, scoped, tag = 'output window, operand 0']
    #allocation9 [shape = 'u8[1024]{0}', space=vmem, size = 0x400, scoped, tag = 'output window, operand 1']
    #allocation10 [shape = 's32[2]{0}', space=sflag, size = 0x8, scoped, tag = 'scoped memory for tpu_custom_call.1']
    #allocation11 [shape = 'u8[1024]{0}', space=vmem, size = 0x400, scoped, tag = 'output window, operand 2']
    %12 = vsyncpa [#allocation3], 0
    %s13 = scalar_lea.sflag [#allocation3], 1
    %14 = vsyncpa %s13, 0
    %15 = vsyncpa [#allocation6], 0
    %16 = vsyncpa [#allocation4], 0
    %s17 = scalar_lea.sflag [#allocation4], 1
    %18 = vsyncpa %s17, 0
    %19 = vsyncpa [#allocation10], 0
    %s20 = scalar_lea.sflag [#allocation10], 1
    %21 = vsyncpa %s20, 0
    loop: start=0, step=1, limit=4
    $region2: #{tpu_custom_call.1} parent=1 // loop_pre_header
      _
    $region3: #{tpu_custom_call.1} parent=1 // loop_header
      %s23 = sphi 0, %s27
      %p24 = scmp.ge.s32.totalorder %s23, 4
      %s33 = sphi 0, %s35
      %s36 = sphi 0, %s33
      %s37 = sphi 0, %s36
      %s53 = sphi 0, %s37
      %s57 = sphi 0, %s57
      %s59 = sphi 0, %s57
      %s60 = sphi 0, %s59
      %s74 = sphi 0, %s60
      %s78 = sphi 0, %s78
      %s80 = sphi 0, %s78
      %s81 = sphi 0, %s80
      %s95 = sphi 0, %s81
      %s99 = sphi 0, %s99
      %s101 = sphi 0, %s99
      %s102 = sphi 0, %s101
      %s116 = sphi 0, %s102
      %s122 = sphi 0, %s124
      %s125 = sphi 0, %s122
      %s126 = sphi 0, %s125
      %s142 = sphi 0, %s126
      %s148 = sphi 0, %s150
      %s151 = sphi 0, %s148
      %s152 = sphi 0, %s151
      %s168 = sphi 0, %s152
      %s174 = sphi 0, %s176
      %s177 = sphi 0, %s174
      %s178 = sphi 0, %s177
      %s194 = sphi 0, %s178
    $region4: #{tpu_custom_call.1} parent=1 // loop_header_branch
      %26 = sbr.rel (%p24) target = $region8
    $region5: #{tpu_custom_call.1} parent=1 // loop_body
      %s28 = ssub.s32 %s23, 1
      %s29 = ssub.s32 %s23, 2
      %s30 = sadd.s32 %s23, 1
      %s31 = ssub.s32 %s23, %s30
      %p32 = scmp.eq.s32.totalorder %s31, 0
      %s34 = sadd.s32 %s33, 1
      %s35 = scalar_select %p32, %s33, %s34
      %p38 = pneg %p32
      %p39 = scmp.eq.s32.totalorder %s23, 1
      %p40 = por %p38, %p39
      %p41 = scmp.ne.s32.totalorder %s33, %s36
      %p42 = scmp.eq.s32.totalorder %s23, 0
      %p43 = por %p41, %p42
      %p44 = scmp.ne.s32.totalorder %s33, %s36
      %p45 = scmp.eq.s32.totalorder %s28, 1
      %p46 = por %p44, %p45
      %p47 = scmp.ne.s32.totalorder %s36, %s37
      %p48 = scmp.eq.s32.totalorder %s28, 0
      %p49 = por %p47, %p48
      %p50 = scmp.ne.s32.totalorder %s36, %s37
      %p51 = scmp.eq.s32.totalorder %s29, 1
      %p52 = por %p50, %p51
      %p54 = scmp.ne.s32.totalorder %s37, %s53
      %p55 = scmp.eq.s32.totalorder %s29, 0
      %p56 = por %p54, %p55
      %s58 = sadd.s32 %s57, 1
      %p61 = scmp.eq.s32.totalorder %s23, 1
      %p62 = scmp.ne.s32.totalorder %s57, %s59
      %p63 = scmp.eq.s32.totalorder %s23, 0
      %p64 = por %p62, %p63
      %p65 = scmp.ne.s32.totalorder %s57, %s59
      %p66 = scmp.eq.s32.totalorder %s28, 1
      %p67 = por %p65, %p66
      %p68 = scmp.ne.s32.totalorder %s59, %s60
      %p69 = scmp.eq.s32.totalorder %s28, 0
      %p70 = por %p68, %p69
      %p71 = scmp.ne.s32.totalorder %s59, %s60
      %p72 = scmp.eq.s32.totalorder %s29, 1
      %p73 = por %p71, %p72
      %p75 = scmp.ne.s32.totalorder %s60, %s74
      %p76 = scmp.eq.s32.totalorder %s29, 0
      %p77 = por %p75, %p76
      %s79 = sadd.s32 %s78, 1
      %p82 = scmp.eq.s32.totalorder %s23, 1
      %p83 = scmp.ne.s32.totalorder %s78, %s80
      %p84 = scmp.eq.s32.totalorder %s23, 0
      %p85 = por %p83, %p84
      %p86 = scmp.ne.s32.totalorder %s78, %s80
      %p87 = scmp.eq.s32.totalorder %s28, 1
      %p88 = por %p86, %p87
      %p89 = scmp.ne.s32.totalorder %s80, %s81
      %p90 = scmp.eq.s32.totalorder %s28, 0
      %p91 = por %p89, %p90
      %p92 = scmp.ne.s32.totalorder %s80, %s81
      %p93 = scmp.eq.s32.totalorder %s29, 1
      %p94 = por %p92, %p93
      %p96 = scmp.ne.s32.totalorder %s81, %s95
      %p97 = scmp.eq.s32.totalorder %s29, 0
      %p98 = por %p96, %p97
      %s100 = sadd.s32 %s99, 1
      %p103 = scmp.eq.s32.totalorder %s23, 1
      %p104 = scmp.ne.s32.totalorder %s99, %s101
      %p105 = scmp.eq.s32.totalorder %s23, 0
      %p106 = por %p104, %p105
      %p107 = scmp.ne.s32.totalorder %s99, %s101
      %p108 = scmp.eq.s32.totalorder %s28, 1
      %p109 = por %p107, %p108
      %p110 = scmp.ne.s32.totalorder %s101, %s102
      %p111 = scmp.eq.s32.totalorder %s28, 0
      %p112 = por %p110, %p111
      %p113 = scmp.ne.s32.totalorder %s101, %s102
      %p114 = scmp.eq.s32.totalorder %s29, 1
      %p115 = por %p113, %p114
      %p117 = scmp.ne.s32.totalorder %s102, %s116
      %p118 = scmp.eq.s32.totalorder %s29, 0
      %p119 = por %p117, %p118
      %s120 = ssub.s32 %s23, %s30
      %p121 = scmp.eq.s32.totalorder %s120, 0
      %s123 = sadd.s32 %s122, 1
      %s124 = scalar_select %p121, %s122, %s123
      %p127 = pneg %p121
      %p128 = scmp.eq.s32.totalorder %s23, 1
      %p129 = por %p127, %p128
      %p130 = scmp.ne.s32.totalorder %s122, %s125
      %p131 = scmp.eq.s32.totalorder %s23, 0
      %p132 = por %p130, %p131
      %p133 = scmp.ne.s32.totalorder %s122, %s125
      %p134 = scmp.eq.s32.totalorder %s28, 1
      %p135 = por %p133, %p134
      %p136 = scmp.ne.s32.totalorder %s125, %s126
      %p137 = scmp.eq.s32.totalorder %s28, 0
      %p138 = por %p136, %p137
      %p139 = scmp.ne.s32.totalorder %s125, %s126
      %p140 = scmp.eq.s32.totalorder %s29, 1
      %p141 = por %p139, %p140
      %p143 = scmp.ne.s32.totalorder %s126, %s142
      %p144 = scmp.eq.s32.totalorder %s29, 0
      %p145 = por %p143, %p144
      %s146 = ssub.s32 %s23, %s30
      %p147 = scmp.eq.s32.totalorder %s146, 0
      %s149 = sadd.s32 %s148, 1
      %s150 = scalar_select %p147, %s148, %s149
      %p153 = pneg %p147
      %p154 = scmp.eq.s32.totalorder %s23, 1
      %p155 = por %p153, %p154
      %p156 = scmp.ne.s32.totalorder %s148, %s151
      %p157 = scmp.eq.s32.totalorder %s23, 0
      %p158 = por %p156, %p157
      %p159 = scmp.ne.s32.totalorder %s148, %s151
      %p160 = scmp.eq.s32.totalorder %s28, 1
      %p161 = por %p159, %p160
      %p162 = scmp.ne.s32.totalorder %s151, %s152
      %p163 = scmp.eq.s32.totalorder %s28, 0
      %p164 = por %p162, %p163
      %p165 = scmp.ne.s32.totalorder %s151, %s152
      %p166 = scmp.eq.s32.totalorder %s29, 1
      %p167 = por %p165, %p166
      %p169 = scmp.ne.s32.totalorder %s152, %s168
      %p170 = scmp.eq.s32.totalorder %s29, 0
      %p171 = por %p169, %p170
      %s172 = ssub.s32 %s23, %s30
      %p173 = scmp.eq.s32.totalorder %s172, 0
      %s175 = sadd.s32 %s174, 1
      %s176 = scalar_select %p173, %s174, %s175
      %p179 = pneg %p173
      %p180 = scmp.eq.s32.totalorder %s23, 1
      %p181 = por %p179, %p180
      %p182 = scmp.ne.s32.totalorder %s174, %s177
      %p183 = scmp.eq.s32.totalorder %s23, 0
      %p184 = por %p182, %p183
      %p185 = scmp.ne.s32.totalorder %s174, %s177
      %p186 = scmp.eq.s32.totalorder %s28, 1
      %p187 = por %p185, %p186
      %p188 = scmp.ne.s32.totalorder %s177, %s178
      %p189 = scmp.eq.s32.totalorder %s28, 0
      %p190 = por %p188, %p189
      %p191 = scmp.ne.s32.totalorder %s177, %s178
      %p192 = scmp.eq.s32.totalorder %s29, 1
      %p193 = por %p191, %p192
      %p195 = scmp.ne.s32.totalorder %s178, %s194
      %p196 = scmp.eq.s32.totalorder %s29, 0
      %p197 = por %p195, %p196
      %p198 = scmp.le.s32.totalorder 1, %s23
      %p199 = scmp.lt.s32.totalorder %s23, 3
      %p200 = pnand %p198, %p199
      %p201 = pneg %p200
      // Predicated region
      $region9: #{tpu_custom_call.1} parent=5 // pred_check
        _
      $region10: #{tpu_custom_call.1} parent=5 // pred_check_branch
        %203 = sbr.rel (%p200) target = $region12
      $region11: #{tpu_custom_call.1} parent=5 // pred_region
        %s204 = ssub.s32 %s23, 1
        // Predicated region
        $region13: #{tpu_custom_call.1} parent=11 // pred_check
          %p205 = pneg %p70
        $region14: #{tpu_custom_call.1} parent=11 // pred_check_branch
          %207 = sbr.rel (%p205) target = $region16
        $region15: #{tpu_custom_call.1} parent=11 // pred_region
          %209 = vsyncadd [#allocation6], 0
          %s210 = sshll.u32 %s1, 4
          %s211 = int_to_ptr.hbm [resolvable:$true] %s210
          %s212 = sshll.u32 [#allocation5], 4
          %s213 = int_to_ptr.vmem [resolvable:$true] %s212
          %218 = dma.hbm_to_vmem [thread:$0]  %s211, 18432, %s213, [#allocation6], 128, 128, 8
        $region16: #{tpu_custom_call.1} parent=11 // pred_fallthru
          _
        // Predicated region
        $region17: #{tpu_custom_call.1} parent=11 // pred_check
          %p219 = pneg %p91
        $region18: #{tpu_custom_call.1} parent=11 // pred_check_branch
          %221 = sbr.rel (%p219) target = $region20
        $region19: #{tpu_custom_call.1} parent=11 // pred_region
          _
        $region20: #{tpu_custom_call.1} parent=11 // pred_fallthru
          _
        // Predicated region
        $region21: #{tpu_custom_call.1} parent=11 // pred_check
          %p222 = pneg %p112
        $region22: #{tpu_custom_call.1} parent=11 // pred_check_branch
          %224 = sbr.rel (%p222) target = $region24
        $region23: #{tpu_custom_call.1} parent=11 // pred_region
          %226 = vsyncadd [#allocation6], 0
          %s227 = sshll.u32 %s3, 4
          %s228 = int_to_ptr.hbm [resolvable:$true] %s227
          %s229 = sshll.u32 [#allocation7], 4
          %s230 = int_to_ptr.vmem [resolvable:$true] %s229
          %235 = dma.hbm_to_vmem [thread:$0]  %s228, 6912, %s230, [#allocation6], 128, 128, 8
        $region24: #{tpu_custom_call.1} parent=11 // pred_fallthru
          _
      $region12: #{tpu_custom_call.1} parent=5 // pred_fallthru
        _
      %p236 = scmp.lt.s32.totalorder %s23, 2
      // Predicated region
      $region25: #{tpu_custom_call.1} parent=5 // pred_check
        %p237 = pneg %p236
      $region26: #{tpu_custom_call.1} parent=5 // pred_check_branch
        %239 = sbr.rel (%p237) target = $region28
      $region27: #{tpu_custom_call.1} parent=5 // pred_region
        // Predicated region
        $region29: #{tpu_custom_call.1} parent=27 // pred_check
          %p240 = pneg %p43
        $region30: #{tpu_custom_call.1} parent=27 // pred_check_branch
          %242 = sbr.rel (%p240) target = $region32
        $region31: #{tpu_custom_call.1} parent=27 // pred_region
          %s243 = sand.u32 %s33, 1
          %s244 = scalar_lea.sflag [#allocation3], %s243
          %s245 = sand.u32 %s33, 1
          %s246 = smul.addr %s245, 432
          %s247 = scalar_lea.vmem [#allocation2], %s246
          %249 = vsyncadd %s244, 0
          %s250 = smul.addr %s23, 54
          %s251 = smul.addr %s250, 8
          %s252 = scalar_lea.hbm %s0, %s251
          %s253 = sshll.u32 %s252, 4
          %s254 = int_to_ptr.hbm [resolvable:$true] %s253
          %s255 = sshll.u32 %s247, 4
          %s256 = int_to_ptr.vmem [resolvable:$true] %s255
          %261 = dma.hbm_to_vmem [thread:$0]  %s254, 6912, %s256, %s244, 128, 128, 8
        $region32: #{tpu_custom_call.1} parent=27 // pred_fallthru
          _
      $region28: #{tpu_custom_call.1} parent=5 // pred_fallthru
        _
      %p262 = scmp.le.s32.totalorder 1, %s23
      %p263 = scmp.lt.s32.totalorder %s23, 3
      %p264 = pnand %p262, %p263
      %p265 = pneg %p264
      // Predicated region
      $region33: #{tpu_custom_call.1} parent=5 // pred_check
        _
      $region34: #{tpu_custom_call.1} parent=5 // pred_check_branch
        %267 = sbr.rel (%p264) target = $region36
      $region35: #{tpu_custom_call.1} parent=5 // pred_region
        %s268 = ssub.s32 %s23, 1
        %s269 = sand.u32 %s36, 1
        %s270 = scalar_lea.sflag [#allocation3], %s269
        %s271 = sand.u32 %s36, 1
        %s272 = smul.addr %s271, 432
        %s273 = scalar_lea.vmem [#allocation2], %s272
        // Predicated region
        $region37: #{tpu_custom_call.1} parent=35 // pred_check
          %p274 = pneg %p49
        $region38: #{tpu_custom_call.1} parent=35 // pred_check_branch
          %276 = sbr.rel (%p274) target = $region40
        $region39: #{tpu_custom_call.1} parent=35 // pred_region
          %278 = dma.done %s270, 6912
        $region40: #{tpu_custom_call.1} parent=35 // pred_fallthru
          _
        // Predicated region
        $region41: #{tpu_custom_call.1} parent=35 // pred_check
          %p279 = pneg %p70
        $region42: #{tpu_custom_call.1} parent=35 // pred_check_branch
          %281 = sbr.rel (%p279) target = $region44
        $region43: #{tpu_custom_call.1} parent=35 // pred_region
          %283 = dma.done [#allocation6], 18432
        $region44: #{tpu_custom_call.1} parent=35 // pred_fallthru
          _
        // Predicated region
        $region45: #{tpu_custom_call.1} parent=35 // pred_check
          %p284 = pneg %p112
        $region46: #{tpu_custom_call.1} parent=35 // pred_check_branch
          %286 = sbr.rel (%p284) target = $region48
        $region47: #{tpu_custom_call.1} parent=35 // pred_region
          %288 = dma.done [#allocation6], 6912
        $region48: #{tpu_custom_call.1} parent=35 // pred_fallthru
          _
        %s289 = sand.u32 %s36, 1
        %s290 = scalar_lea.sflag [#allocation3], %s289
        %s291 = sand.u32 %s36, 1
        %s292 = smul.addr %s291, 432
        %s293 = scalar_lea.vmem [#allocation2], %s292
        %p294 = pneg %p49
        %p295 = pneg %p46
        %p296 = pneg %p70
        %p297 = pneg %p67
        %p298 = pneg %p91
        %p299 = pneg %p88
        %p300 = pneg %p112
        %p301 = pneg %p109
        %p302 = pneg %p138
        %p303 = pneg %p135
        %s304 = sand.u32 %s125, 1
        %s305 = scalar_lea.sflag [#allocation4], %s304
        %s306 = sand.u32 %s125, 1
        %s307 = smul.addr %s306, 432
        %s308 = scalar_lea.vmem [#allocation8], %s307
        %p309 = pneg %p164
        %p310 = pneg %p161
        %s311 = sand.u32 %s28, 1
        %s312 = scalar_lea.sflag [#allocation10], %s311
        %s313 = sand.u32 %s151, 1
        %s314 = scalar_lea.vmem [#allocation9], %s313
        %p315 = pneg %p190
        %p316 = pneg %p187
        %s317 = sand.u32 %s28, 1
        %s318 = scalar_lea.sflag [#allocation10], %s317
        %s319 = sand.u32 %s177, 1
        %s320 = scalar_lea.vmem [#allocation11], %s319
        %v321 = vld [vmem:[%s273] sm:$0xff]
        %v322 = vld [vmem:[%s273 + $0x8] sm:$0xff]
        %v323 = vld [vmem:[%s273 + $0x10] sm:$0xff]
        %v324 = vld [vmem:[%s273 + $0x18] sm:$0xff]
        %v325 = vld [vmem:[%s273 + $0x20] sm:$0xff]
        %v326 = vld [vmem:[%s273 + $0x28] sm:$0xff]
        %v327 = vld [vmem:[%s273 + $0x30] sm:$0xff]
        %v328 = vld [vmem:[%s273 + $0x38] sm:$0xff]
        %v329 = vld [vmem:[%s273 + $0x40] sm:$0xff]
        %v330 = vld [vmem:[%s273 + $0x48] sm:$0xff]
        %v331 = vld [vmem:[%s273 + $0x50] sm:$0xff]
        %v332 = vld [vmem:[%s273 + $0x58] sm:$0xff]
        %v333 = vld [vmem:[%s273 + $0x60] sm:$0xff]
        %v334 = vld [vmem:[%s273 + $0x68] sm:$0xff]
        %v335 = vld [vmem:[%s273 + $0x70] sm:$0xff]
        %v336 = vld [vmem:[%s273 + $0x78] sm:$0xff]
        %v337 = vld [vmem:[%s273 + $0x80] sm:$0xff]
        %v338 = vld [vmem:[%s273 + $0x88] sm:$0xff]
        %v339 = vld [vmem:[%s273 + $0x90] sm:$0xff]
        %v340 = vld [vmem:[%s273 + $0x98] sm:$0xff]
        %v341 = vld [vmem:[%s273 + $0xa0] sm:$0xff]
        %v342 = vld [vmem:[%s273 + $0xa8] sm:$0xff]
        %v343 = vld [vmem:[%s273 + $0xb0] sm:$0xff]
        %v344 = vld [vmem:[%s273 + $0xb8] sm:$0xff]
        %v345 = vld [vmem:[%s273 + $0xc0] sm:$0xff]
        %v346 = vld [vmem:[%s273 + $0xc8] sm:$0xff]
        %v347 = vld [vmem:[%s273 + $0xd0] sm:$0xff]
        %v348 = vld [vmem:[%s273 + $0xd8] sm:$0xff]
        %v349 = vld [vmem:[%s273 + $0xe0] sm:$0xff]
        %v350 = vld [vmem:[%s273 + $0xe8] sm:$0xff]
        %v351 = vld [vmem:[%s273 + $0xf0] sm:$0xff]
        %v352 = vld [vmem:[%s273 + $0xf8] sm:$0xff]
        %v353 = vld [vmem:[%s273 + $0x100] sm:$0xff]
        %v354 = vld [vmem:[%s273 + $0x108] sm:$0xff]
        %v355 = vld [vmem:[%s273 + $0x110] sm:$0xff]
        %v356 = vld [vmem:[%s273 + $0x118] sm:$0xff]
        %v357 = vld [vmem:[%s273 + $0x120] sm:$0xff]
        %v358 = vld [vmem:[%s273 + $0x128] sm:$0xff]
        %v359 = vld [vmem:[%s273 + $0x130] sm:$0xff]
        %v360 = vld [vmem:[%s273 + $0x138] sm:$0xff]
        %v361 = vld [vmem:[%s273 + $0x140] sm:$0xff]
        %v362 = vld [vmem:[%s273 + $0x148] sm:$0xff]
        %v363 = vld [vmem:[%s273 + $0x150] sm:$0xff]
        %v364 = vld [vmem:[%s273 + $0x158] sm:$0xff]
        %v365 = vld [vmem:[%s273 + $0x160] sm:$0xff]
        %v366 = vld [vmem:[%s273 + $0x168] sm:$0xff]
        %v367 = vld [vmem:[%s273 + $0x170] sm:$0xff]
        %v368 = vld [vmem:[%s273 + $0x178] sm:$0xff]
        %v369 = vld [vmem:[%s273 + $0x180] sm:$0xff]
        %v370 = vld [vmem:[%s273 + $0x188] sm:$0xff]
        %v371 = vld [vmem:[%s273 + $0x190] sm:$0xff]
        %v372 = vld [vmem:[%s273 + $0x198] sm:$0xff]
        %v373 = vld [vmem:[%s273 + $0x1a0] sm:$0xff]
        %v374 = vld [vmem:[%s273 + $0x1a8] sm:$0xff]
        %v375 = vrot.slane %v321, 7
        %v376 = vrot.slane %v322, 7
        %v377 = vrot.slane %v323, 7
        %v378 = vrot.slane %v324, 7
        %v379 = vrot.slane %v325, 7
        %v380 = vrot.slane %v326, 7
        %v381 = vrot.slane %v327, 7
        %v382 = vrot.slane %v328, 7
        %v383 = vrot.slane %v329, 7
        %v384 = vrot.slane %v330, 7
        %v385 = vrot.slane %v331, 7
        %v386 = vrot.slane %v332, 7
        %v387 = vrot.slane %v333, 7
        %v388 = vrot.slane %v334, 7
        %v389 = vrot.slane %v335, 7
        %v390 = vrot.slane %v336, 7
        %v391 = vrot.slane %v337, 7
        %v392 = vrot.slane %v338, 7
        %v393 = vrot.slane %v339, 7
        %v394 = vrot.slane %v340, 7
        %v395 = vrot.slane %v341, 7
        %v396 = vrot.slane %v342, 7
        %v397 = vrot.slane %v343, 7
        %v398 = vrot.slane %v344, 7
        %v399 = vrot.slane %v345, 7
        %v400 = vrot.slane %v346, 7
        %v401 = vrot.slane %v347, 7
        %v402 = vrot.slane %v348, 7
        %v403 = vrot.slane %v349, 7
        %v404 = vrot.slane %v350, 7
        %v405 = vrot.slane %v351, 7
        %v406 = vrot.slane %v352, 7
        %v407 = vrot.slane %v353, 7
        %v408 = vrot.slane %v354, 7
        %v409 = vrot.slane %v355, 7
        %v410 = vrot.slane %v356, 7
        %v411 = vrot.slane %v357, 7
        %v412 = vrot.slane %v358, 7
        %v413 = vrot.slane %v359, 7
        %v414 = vrot.slane %v360, 7
        %v415 = vrot.slane %v361, 7
        %v416 = vrot.slane %v362, 7
        %v417 = vrot.slane %v363, 7
        %v418 = vrot.slane %v364, 7
        %v419 = vrot.slane %v365, 7
        %v420 = vrot.slane %v366, 7
        %v421 = vrot.slane %v367, 7
        %v422 = vrot.slane %v368, 7
        %v423 = vrot.slane %v369, 7
        %v424 = vrot.slane %v370, 7
        %v425 = vrot.slane %v371, 7
        %v426 = vrot.slane %v372, 7
        %v427 = vrot.slane %v373, 7
        %v428 = vrot.slane %v374, 7
        %v429 = vlaneseq
        %v430 = vshrl.u32 %v429, 7
        %vm431 = vcmp.lt.s32.totalorder %v430, 1
        %v432 = vsel %vm431, %v427, %v428
        %v433 = vsel %vm431, %v426, %v427
        %v434 = vsel %vm431, %v425, %v426
        %v435 = vsel %vm431, %v424, %v425
        %v436 = vsel %vm431, %v423, %v424
        %v437 = vsel %vm431, %v422, %v423
        %v438 = vsel %vm431, %v421, %v422
        %v439 = vsel %vm431, %v420, %v421
        %v440 = vsel %vm431, %v419, %v420
        %v441 = vsel %vm431, %v418, %v419
        %v442 = vsel %vm431, %v417, %v418
        %v443 = vsel %vm431, %v416, %v417
        %v444 = vsel %vm431, %v415, %v416
        %v445 = vsel %vm431, %v414, %v415
        %v446 = vsel %vm431, %v413, %v414
        %v447 = vsel %vm431, %v412, %v413
        %v448 = vsel %vm431, %v411, %v412
        %v449 = vsel %vm431, %v410, %v411
        %v450 = vsel %vm431, %v409, %v410
        %v451 = vsel %vm431, %v408, %v409
        %v452 = vsel %vm431, %v407, %v408
        %v453 = vsel %vm431, %v406, %v407
        %v454 = vsel %vm431, %v405, %v406
        %v455 = vsel %vm431, %v404, %v405
        %v456 = vsel %vm431, %v403, %v404
        %v457 = vsel %vm431, %v402, %v403
        %v458 = vsel %vm431, %v401, %v402
        %v459 = vsel %vm431, %v400, %v401
        %v460 = vsel %vm431, %v399, %v400
        %v461 = vsel %vm431, %v398, %v399
        %v462 = vsel %vm431, %v397, %v398
        %v463 = vsel %vm431, %v396, %v397
        %v464 = vsel %vm431, %v395, %v396
        %v465 = vsel %vm431, %v394, %v395
        %v466 = vsel %vm431, %v393, %v394
        %v467 = vsel %vm431, %v392, %v393
        %v468 = vsel %vm431, %v391, %v392
        %v469 = vsel %vm431, %v390, %v391
        %v470 = vsel %vm431, %v389, %v390
        %v471 = vsel %vm431, %v388, %v389
        %v472 = vsel %vm431, %v387, %v388
        %v473 = vsel %vm431, %v386, %v387
        %v474 = vsel %vm431, %v385, %v386
        %v475 = vsel %vm431, %v384, %v385
        %v476 = vsel %vm431, %v383, %v384
        %v477 = vsel %vm431, %v382, %v383
        %v478 = vsel %vm431, %v381, %v382
        %v479 = vsel %vm431, %v380, %v381
        %v480 = vsel %vm431, %v379, %v380
        %v481 = vsel %vm431, %v378, %v379
        %v482 = vsel %vm431, %v377, %v378
        %v483 = vsel %vm431, %v376, %v377
        %v484 = vsel %vm431, %v375, %v376
        %v485 = vsel %vm431, %v428, %v375
        %v486 = vld [vmem:[#allocation5] sm:$0xff]
        %v487 = vld [vmem:[#allocation5 + $0x8] sm:$0xff]
        %v488 = vld [vmem:[#allocation5 + $0x10] sm:$0xff]
        %v489 = vld [vmem:[#allocation5 + $0x18] sm:$0xff]
        %v490 = vld [vmem:[#allocation5 + $0x20] sm:$0xff]
        %v491 = vld [vmem:[#allocation5 + $0x28] sm:$0xff]
        %v492 = vld [vmem:[#allocation5 + $0x30] sm:$0xff]
        %v493 = vld [vmem:[#allocation5 + $0x38] sm:$0xff]
        %v494 = vld [vmem:[#allocation5 + $0x40] sm:$0xff]
        %v495 = vld [vmem:[#allocation5 + $0x48] sm:$0xff]
        %v496 = vld [vmem:[#allocation5 + $0x50] sm:$0xff]
        %v497 = vld [vmem:[#allocation5 + $0x58] sm:$0xff]
        %v498 = vld [vmem:[#allocation5 + $0x60] sm:$0xff]
        %v499 = vld [vmem:[#allocation5 + $0x68] sm:$0xff]
        %v500 = vld [vmem:[#allocation5 + $0x70] sm:$0xff]
        %v501 = vld [vmem:[#allocation5 + $0x78] sm:$0xff]
        %s502 = scalar_lea.vmem [#allocation5], 128
        %v503 = vld [vmem:[%s502] sm:$0xff]
        %v504 = vld [vmem:[%s502 + $0x8] sm:$0xff]
        %v505 = vld [vmem:[%s502 + $0x10] sm:$0xff]
        %v506 = vld [vmem:[%s502 + $0x18] sm:$0xff]
        %v507 = vld [vmem:[%s502 + $0x20] sm:$0xff]
        %v508 = vld [vmem:[%s502 + $0x28] sm:$0xff]
        %v509 = vld [vmem:[%s502 + $0x30] sm:$0xff]
        %v510 = vld [vmem:[%s502 + $0x38] sm:$0xff]
        %v511 = vld [vmem:[%s502 + $0x40] sm:$0xff]
        %v512 = vld [vmem:[%s502 + $0x48] sm:$0xff]
        %v513 = vld [vmem:[%s502 + $0x50] sm:$0xff]
        %v514 = vld [vmem:[%s502 + $0x58] sm:$0xff]
        %v515 = vld [vmem:[%s502 + $0x60] sm:$0xff]
        %v516 = vld [vmem:[%s502 + $0x68] sm:$0xff]
        %v517 = vld [vmem:[%s502 + $0x70] sm:$0xff]
        %v518 = vld [vmem:[%s502 + $0x78] sm:$0xff]
        %519 = vmatpush.msra.mxu0 %v518
        %520 = vmatpush.msra.mxu0 %v517
        %521 = vmatpush.msra.mxu0 %v516
        %522 = vmatpush.msra.mxu0 %v515
        %523 = vmatpush.msra.mxu0 %v514
        %524 = vmatpush.msra.mxu0 %v513
        %525 = vmatpush.msra.mxu0 %v512
        %526 = vmatpush.msra.mxu0 %v511
        %527 = vmatpush.msra.mxu0 %v510
        %528 = vmatpush.msra.mxu0 %v509
        %529 = vmatpush.msra.mxu0 %v508
        %530 = vmatpush.msra.mxu0 %v507
        %531 = vmatpush.msra.mxu0 %v506
        %532 = vmatpush.msra.mxu0 %v505
        %533 = vmatpush.msra.mxu0 %v504
        %534 = vmatpush.msra.mxu0 %v503
        %535 = vmatmul.f32.gmra.mxu0 %v372
        %v536 = vpop.f32.mrf.mxu0
        %v537 = vadd.f32 0.0, %v536
        %538 = vmatmul.f32.gmra.mxu0 %v373
        %v539 = vpop.f32.mrf.mxu0
        %v540 = vadd.f32 0.0, %v539
        %541 = vmatmul.f32.gmra.mxu0 %v374
        %v542 = vpop.f32.mrf.mxu0
        %v543 = vadd.f32 0.0, %v542
        %544 = vmatmul.f32.gmra.mxu0 %v321
        %v545 = vpop.f32.mrf.mxu0
        %v546 = vadd.f32 0.0, %v545
        %547 = vmatmul.f32.gmra.mxu0 %v322
        %v548 = vpop.f32.mrf.mxu0
        %v549 = vadd.f32 0.0, %v548
        %550 = vmatmul.f32.gmra.mxu0 %v323
        %v551 = vpop.f32.mrf.mxu0
        %v552 = vadd.f32 0.0, %v551
        %553 = vmatmul.f32.gmra.mxu0 %v324
        %v554 = vpop.f32.mrf.mxu0
        %v555 = vadd.f32 0.0, %v554
        %556 = vmatmul.f32.gmra.mxu0 %v325
        %v557 = vpop.f32.mrf.mxu0
        %v558 = vadd.f32 0.0, %v557
        %559 = vmatmul.f32.gmra.mxu0 %v326
        %v560 = vpop.f32.mrf.mxu0
        %v561 = vadd.f32 0.0, %v560
        %562 = vmatmul.f32.gmra.mxu0 %v327
        %v563 = vpop.f32.mrf.mxu0
        %v564 = vadd.f32 0.0, %v563
        %565 = vmatmul.f32.gmra.mxu0 %v328
        %v566 = vpop.f32.mrf.mxu0
        %v567 = vadd.f32 0.0, %v566
        %568 = vmatmul.f32.gmra.mxu0 %v329
        %v569 = vpop.f32.mrf.mxu0
        %v570 = vadd.f32 0.0, %v569
        %571 = vmatmul.f32.gmra.mxu0 %v330
        %v572 = vpop.f32.mrf.mxu0
        %v573 = vadd.f32 0.0, %v572
        %574 = vmatmul.f32.gmra.mxu0 %v331
        %v575 = vpop.f32.mrf.mxu0
        %v576 = vadd.f32 0.0, %v575
        %577 = vmatmul.f32.gmra.mxu0 %v332
        %v578 = vpop.f32.mrf.mxu0
        %v579 = vadd.f32 0.0, %v578
        %580 = vmatmul.f32.gmra.mxu0 %v333
        %v581 = vpop.f32.mrf.mxu0
        %v582 = vadd.f32 0.0, %v581
        %583 = vmatmul.f32.gmra.mxu0 %v334
        %v584 = vpop.f32.mrf.mxu0
        %v585 = vadd.f32 0.0, %v584
        %586 = vmatmul.f32.gmra.mxu0 %v335
        %v587 = vpop.f32.mrf.mxu0
        %v588 = vadd.f32 0.0, %v587
        %589 = vmatmul.f32.gmra.mxu0 %v336
        %v590 = vpop.f32.mrf.mxu0
        %v591 = vadd.f32 0.0, %v590
        %592 = vmatmul.f32.gmra.mxu0 %v337
        %v593 = vpop.f32.mrf.mxu0
        %v594 = vadd.f32 0.0, %v593
        %595 = vmatmul.f32.gmra.mxu0 %v338
        %v596 = vpop.f32.mrf.mxu0
        %v597 = vadd.f32 0.0, %v596
        %598 = vmatmul.f32.gmra.mxu0 %v339
        %v599 = vpop.f32.mrf.mxu0
        %v600 = vadd.f32 0.0, %v599
        %601 = vmatmul.f32.gmra.mxu0 %v340
        %v602 = vpop.f32.mrf.mxu0
        %v603 = vadd.f32 0.0, %v602
        %604 = vmatmul.f32.gmra.mxu0 %v341
        %v605 = vpop.f32.mrf.mxu0
        %v606 = vadd.f32 0.0, %v605
        %607 = vmatmul.f32.gmra.mxu0 %v342
        %v608 = vpop.f32.mrf.mxu0
        %v609 = vadd.f32 0.0, %v608
        %610 = vmatmul.f32.gmra.mxu0 %v343
        %v611 = vpop.f32.mrf.mxu0
        %v612 = vadd.f32 0.0, %v611
        %613 = vmatmul.f32.gmra.mxu0 %v344
        %v614 = vpop.f32.mrf.mxu0
        %v615 = vadd.f32 0.0, %v614
        %616 = vmatmul.f32.gmra.mxu0 %v345
        %v617 = vpop.f32.mrf.mxu0
        %v618 = vadd.f32 0.0, %v617
        %619 = vmatmul.f32.gmra.mxu0 %v346
        %v620 = vpop.f32.mrf.mxu0
        %v621 = vadd.f32 0.0, %v620
        %622 = vmatmul.f32.gmra.mxu0 %v347
        %v623 = vpop.f32.mrf.mxu0
        %v624 = vadd.f32 0.0, %v623
        %625 = vmatmul.f32.gmra.mxu0 %v348
        %v626 = vpop.f32.mrf.mxu0
        %v627 = vadd.f32 0.0, %v626
        %628 = vmatmul.f32.gmra.mxu0 %v349
        %v629 = vpop.f32.mrf.mxu0
        %v630 = vadd.f32 0.0, %v629
        %631 = vmatmul.f32.gmra.mxu0 %v350
        %v632 = vpop.f32.mrf.mxu0
        %v633 = vadd.f32 0.0, %v632
        %634 = vmatmul.f32.gmra.mxu0 %v351
        %v635 = vpop.f32.mrf.mxu0
        %v636 = vadd.f32 0.0, %v635
        %637 = vmatmul.f32.gmra.mxu0 %v352
        %v638 = vpop.f32.mrf.mxu0
        %v639 = vadd.f32 0.0, %v638
        %640 = vmatmul.f32.gmra.mxu0 %v353
        %v641 = vpop.f32.mrf.mxu0
        %v642 = vadd.f32 0.0, %v641
        %643 = vmatmul.f32.gmra.mxu0 %v354
        %v644 = vpop.f32.mrf.mxu0
        %v645 = vadd.f32 0.0, %v644
        %646 = vmatmul.f32.gmra.mxu0 %v355
        %v647 = vpop.f32.mrf.mxu0
        %v648 = vadd.f32 0.0, %v647
        %649 = vmatmul.f32.gmra.mxu0 %v356
        %v650 = vpop.f32.mrf.mxu0
        %v651 = vadd.f32 0.0, %v650
        %652 = vmatmul.f32.gmra.mxu0 %v357
        %v653 = vpop.f32.mrf.mxu0
        %v654 = vadd.f32 0.0, %v653
        %655 = vmatmul.f32.gmra.mxu0 %v358
        %v656 = vpop.f32.mrf.mxu0
        %v657 = vadd.f32 0.0, %v656
        %658 = vmatmul.f32.gmra.mxu0 %v359
        %v659 = vpop.f32.mrf.mxu0
        %v660 = vadd.f32 0.0, %v659
        %661 = vmatmul.f32.gmra.mxu0 %v360
        %v662 = vpop.f32.mrf.mxu0
        %v663 = vadd.f32 0.0, %v662
        %664 = vmatmul.f32.gmra.mxu0 %v361
        %v665 = vpop.f32.mrf.mxu0
        %v666 = vadd.f32 0.0, %v665
        %667 = vmatmul.f32.gmra.mxu0 %v362
        %v668 = vpop.f32.mrf.mxu0
        %v669 = vadd.f32 0.0, %v668
        %670 = vmatmul.f32.gmra.mxu0 %v363
        %v671 = vpop.f32.mrf.mxu0
        %v672 = vadd.f32 0.0, %v671
        %673 = vmatmul.f32.gmra.mxu0 %v364
        %v674 = vpop.f32.mrf.mxu0
        %v675 = vadd.f32 0.0, %v674
        %676 = vmatmul.f32.gmra.mxu0 %v365
        %v677 = vpop.f32.mrf.mxu0
        %v678 = vadd.f32 0.0, %v677
        %679 = vmatmul.f32.gmra.mxu0 %v366
        %v680 = vpop.f32.mrf.mxu0
        %v681 = vadd.f32 0.0, %v680
        %682 = vmatmul.f32.gmra.mxu0 %v367
        %v683 = vpop.f32.mrf.mxu0
        %v684 = vadd.f32 0.0, %v683
        %685 = vmatmul.f32.gmra.mxu0 %v368
        %v686 = vpop.f32.mrf.mxu0
        %v687 = vadd.f32 0.0, %v686
        %688 = vmatmul.f32.gmra.mxu0 %v369
        %v689 = vpop.f32.mrf.mxu0
        %v690 = vadd.f32 0.0, %v689
        %691 = vmatmul.f32.gmra.mxu0 %v370
        %v692 = vpop.f32.mrf.mxu0
        %v693 = vadd.f32 0.0, %v692
        %694 = vmatmul.f32.gmra.mxu0 %v371
        %v695 = vpop.f32.mrf.mxu0
        %v696 = vadd.f32 0.0, %v695
        %697 = vdwg.mxu0
        %698 = vmatpush.msra.mxu0 %v501
        %699 = vmatpush.msra.mxu0 %v500
        %700 = vmatpush.msra.mxu0 %v499
        %701 = vmatpush.msra.mxu0 %v498
        %702 = vmatpush.msra.mxu0 %v497
        %703 = vmatpush.msra.mxu0 %v496
        %704 = vmatpush.msra.mxu0 %v495
        %705 = vmatpush.msra.mxu0 %v494
        %706 = vmatpush.msra.mxu0 %v493
        %707 = vmatpush.msra.mxu0 %v492
        %708 = vmatpush.msra.mxu0 %v491
        %709 = vmatpush.msra.mxu0 %v490
        %710 = vmatpush.msra.mxu0 %v489
        %711 = vmatpush.msra.mxu0 %v488
        %712 = vmatpush.msra.mxu0 %v487
        %713 = vmatpush.msra.mxu0 %v486
        %714 = vmatmul.f32.gmra.mxu0 %v434
        %v715 = vpop.f32.mrf.mxu0
        %v716 = vadd.f32 %v537, %v715
        %717 = vmatmul.f32.gmra.mxu0 %v433
        %v718 = vpop.f32.mrf.mxu0
        %v719 = vadd.f32 %v540, %v718
        %720 = vmatmul.f32.gmra.mxu0 %v432
        %v721 = vpop.f32.mrf.mxu0
        %v722 = vadd.f32 %v543, %v721
        %723 = vmatmul.f32.gmra.mxu0 %v485
        %v724 = vpop.f32.mrf.mxu0
        %v725 = vadd.f32 %v546, %v724
        %726 = vmatmul.f32.gmra.mxu0 %v484
        %v727 = vpop.f32.mrf.mxu0
        %v728 = vadd.f32 %v549, %v727
        %729 = vmatmul.f32.gmra.mxu0 %v483
        %v730 = vpop.f32.mrf.mxu0
        %v731 = vadd.f32 %v552, %v730
        %732 = vmatmul.f32.gmra.mxu0 %v482
        %v733 = vpop.f32.mrf.mxu0
        %v734 = vadd.f32 %v555, %v733
        %735 = vmatmul.f32.gmra.mxu0 %v481
        %v736 = vpop.f32.mrf.mxu0
        %v737 = vadd.f32 %v558, %v736
        %738 = vmatmul.f32.gmra.mxu0 %v480
        %v739 = vpop.f32.mrf.mxu0
        %v740 = vadd.f32 %v561, %v739
        %741 = vmatmul.f32.gmra.mxu0 %v479
        %v742 = vpop.f32.mrf.mxu0
        %v743 = vadd.f32 %v564, %v742
        %744 = vmatmul.f32.gmra.mxu0 %v478
        %v745 = vpop.f32.mrf.mxu0
        %v746 = vadd.f32 %v567, %v745
        %747 = vmatmul.f32.gmra.mxu0 %v477
        %v748 = vpop.f32.mrf.mxu0
        %v749 = vadd.f32 %v570, %v748
        %750 = vmatmul.f32.gmra.mxu0 %v476
        %v751 = vpop.f32.mrf.mxu0
        %v752 = vadd.f32 %v573, %v751
        %753 = vmatmul.f32.gmra.mxu0 %v475
        %v754 = vpop.f32.mrf.mxu0
        %v755 = vadd.f32 %v576, %v754
        %756 = vmatmul.f32.gmra.mxu0 %v474
        %v757 = vpop.f32.mrf.mxu0
        %v758 = vadd.f32 %v579, %v757
        %759 = vmatmul.f32.gmra.mxu0 %v473
        %v760 = vpop.f32.mrf.mxu0
        %v761 = vadd.f32 %v582, %v760
        %762 = vmatmul.f32.gmra.mxu0 %v472
        %v763 = vpop.f32.mrf.mxu0
        %v764 = vadd.f32 %v585, %v763
        %765 = vmatmul.f32.gmra.mxu0 %v471
        %v766 = vpop.f32.mrf.mxu0
        %v767 = vadd.f32 %v588, %v766
        %768 = vmatmul.f32.gmra.mxu0 %v470
        %v769 = vpop.f32.mrf.mxu0
        %v770 = vadd.f32 %v591, %v769
        %771 = vmatmul.f32.gmra.mxu0 %v469
        %v772 = vpop.f32.mrf.mxu0
        %v773 = vadd.f32 %v594, %v772
        %774 = vmatmul.f32.gmra.mxu0 %v468
        %v775 = vpop.f32.mrf.mxu0
        %v776 = vadd.f32 %v597, %v775
        %777 = vmatmul.f32.gmra.mxu0 %v467
        %v778 = vpop.f32.mrf.mxu0
        %v779 = vadd.f32 %v600, %v778
        %780 = vmatmul.f32.gmra.mxu0 %v466
        %v781 = vpop.f32.mrf.mxu0
        %v782 = vadd.f32 %v603, %v781
        %783 = vmatmul.f32.gmra.mxu0 %v465
        %v784 = vpop.f32.mrf.mxu0
        %v785 = vadd.f32 %v606, %v784
        %786 = vmatmul.f32.gmra.mxu0 %v464
        %v787 = vpop.f32.mrf.mxu0
        %v788 = vadd.f32 %v609, %v787
        %789 = vmatmul.f32.gmra.mxu0 %v463
        %v790 = vpop.f32.mrf.mxu0
        %v791 = vadd.f32 %v612, %v790
        %792 = vmatmul.f32.gmra.mxu0 %v462
        %v793 = vpop.f32.mrf.mxu0
        %v794 = vadd.f32 %v615, %v793
        %795 = vmatmul.f32.gmra.mxu0 %v461
        %v796 = vpop.f32.mrf.mxu0
        %v797 = vadd.f32 %v618, %v796
        %798 = vmatmul.f32.gmra.mxu0 %v460
        %v799 = vpop.f32.mrf.mxu0
        %v800 = vadd.f32 %v621, %v799
        %801 = vmatmul.f32.gmra.mxu0 %v459
        %v802 = vpop.f32.mrf.mxu0
        %v803 = vadd.f32 %v624, %v802
        %804 = vmatmul.f32.gmra.mxu0 %v458
        %v805 = vpop.f32.mrf.mxu0
        %v806 = vadd.f32 %v627, %v805
        %807 = vmatmul.f32.gmra.mxu0 %v457
        %v808 = vpop.f32.mrf.mxu0
        %v809 = vadd.f32 %v630, %v808
        %810 = vmatmul.f32.gmra.mxu0 %v456
        %v811 = vpop.f32.mrf.mxu0
        %v812 = vadd.f32 %v633, %v811
        %813 = vmatmul.f32.gmra.mxu0 %v455
        %v814 = vpop.f32.mrf.mxu0
        %v815 = vadd.f32 %v636, %v814
        %816 = vmatmul.f32.gmra.mxu0 %v454
        %v817 = vpop.f32.mrf.mxu0
        %v818 = vadd.f32 %v639, %v817
        %819 = vmatmul.f32.gmra.mxu0 %v453
        %v820 = vpop.f32.mrf.mxu0
        %v821 = vadd.f32 %v642, %v820
        %822 = vmatmul.f32.gmra.mxu0 %v452
        %v823 = vpop.f32.mrf.mxu0
        %v824 = vadd.f32 %v645, %v823
        %825 = vmatmul.f32.gmra.mxu0 %v451
        %v826 = vpop.f32.mrf.mxu0
        %v827 = vadd.f32 %v648, %v826
        %828 = vmatmul.f32.gmra.mxu0 %v450
        %v829 = vpop.f32.mrf.mxu0
        %v830 = vadd.f32 %v651, %v829
        %831 = vmatmul.f32.gmra.mxu0 %v449
        %v832 = vpop.f32.mrf.mxu0
        %v833 = vadd.f32 %v654, %v832
        %834 = vmatmul.f32.gmra.mxu0 %v448
        %v835 = vpop.f32.mrf.mxu0
        %v836 = vadd.f32 %v657, %v835
        %837 = vmatmul.f32.gmra.mxu0 %v447
        %v838 = vpop.f32.mrf.mxu0
        %v839 = vadd.f32 %v660, %v838
        %840 = vmatmul.f32.gmra.mxu0 %v446
        %v841 = vpop.f32.mrf.mxu0
        %v842 = vadd.f32 %v663, %v841
        %843 = vmatmul.f32.gmra.mxu0 %v445
        %v844 = vpop.f32.mrf.mxu0
        %v845 = vadd.f32 %v666, %v844
        %846 = vmatmul.f32.gmra.mxu0 %v444
        %v847 = vpop.f32.mrf.mxu0
        %v848 = vadd.f32 %v669, %v847
        %849 = vmatmul.f32.gmra.mxu0 %v443
        %v850 = vpop.f32.mrf.mxu0
        %v851 = vadd.f32 %v672, %v850
        %852 = vmatmul.f32.gmra.mxu0 %v442
        %v853 = vpop.f32.mrf.mxu0
        %v854 = vadd.f32 %v675, %v853
        %855 = vmatmul.f32.gmra.mxu0 %v441
        %v856 = vpop.f32.mrf.mxu0
        %v857 = vadd.f32 %v678, %v856
        %858 = vmatmul.f32.gmra.mxu0 %v440
        %v859 = vpop.f32.mrf.mxu0
        %v860 = vadd.f32 %v681, %v859
        %861 = vmatmul.f32.gmra.mxu0 %v439
        %v862 = vpop.f32.mrf.mxu0
        %v863 = vadd.f32 %v684, %v862
        %864 = vmatmul.f32.gmra.mxu0 %v438
        %v865 = vpop.f32.mrf.mxu0
        %v866 = vadd.f32 %v687, %v865
        %867 = vmatmul.f32.gmra.mxu0 %v437
        %v868 = vpop.f32.mrf.mxu0
        %v869 = vadd.f32 %v690, %v868
        %870 = vmatmul.f32.gmra.mxu0 %v436
        %v871 = vpop.f32.mrf.mxu0
        %v872 = vadd.f32 %v693, %v871
        %873 = vmatmul.f32.gmra.mxu0 %v435
        %v874 = vpop.f32.mrf.mxu0
        %v875 = vadd.f32 %v696, %v874
        %876 = vdwg.mxu0
        %v877 = vrot.slane %v321, 1
        %v878 = vrot.slane %v322, 1
        %v879 = vrot.slane %v323, 1
        %v880 = vrot.slane %v324, 1
        %v881 = vrot.slane %v325, 1
        %v882 = vrot.slane %v326, 1
        %v883 = vrot.slane %v327, 1
        %v884 = vrot.slane %v328, 1
        %v885 = vrot.slane %v329, 1
        %v886 = vrot.slane %v330, 1
        %v887 = vrot.slane %v331, 1
        %v888 = vrot.slane %v332, 1
        %v889 = vrot.slane %v333, 1
        %v890 = vrot.slane %v334, 1
        %v891 = vrot.slane %v335, 1
        %v892 = vrot.slane %v336, 1
        %v893 = vrot.slane %v337, 1
        %v894 = vrot.slane %v338, 1
        %v895 = vrot.slane %v339, 1
        %v896 = vrot.slane %v340, 1
        %v897 = vrot.slane %v341, 1
        %v898 = vrot.slane %v342, 1
        %v899 = vrot.slane %v343, 1
        %v900 = vrot.slane %v344, 1
        %v901 = vrot.slane %v345, 1
        %v902 = vrot.slane %v346, 1
        %v903 = vrot.slane %v347, 1
        %v904 = vrot.slane %v348, 1
        %v905 = vrot.slane %v349, 1
        %v906 = vrot.slane %v350, 1
        %v907 = vrot.slane %v351, 1
        %v908 = vrot.slane %v352, 1
        %v909 = vrot.slane %v353, 1
        %v910 = vrot.slane %v354, 1
        %v911 = vrot.slane %v355, 1
        %v912 = vrot.slane %v356, 1
        %v913 = vrot.slane %v357, 1
        %v914 = vrot.slane %v358, 1
        %v915 = vrot.slane %v359, 1
        %v916 = vrot.slane %v360, 1
        %v917 = vrot.slane %v361, 1
        %v918 = vrot.slane %v362, 1
        %v919 = vrot.slane %v363, 1
        %v920 = vrot.slane %v364, 1
        %v921 = vrot.slane %v365, 1
        %v922 = vrot.slane %v366, 1
        %v923 = vrot.slane %v367, 1
        %v924 = vrot.slane %v368, 1
        %v925 = vrot.slane %v369, 1
        %v926 = vrot.slane %v370, 1
        %v927 = vrot.slane %v371, 1
        %v928 = vrot.slane %v372, 1
        %v929 = vrot.slane %v373, 1
        %v930 = vrot.slane %v374, 1
        %vm931 = vcmp.lt.s32.totalorder %v430, 7
        %v932 = vsel %vm931, %v929, %v930
        %v933 = vsel %vm931, %v928, %v929
        %v934 = vsel %vm931, %v927, %v928
        %v935 = vsel %vm931, %v926, %v927
        %v936 = vsel %vm931, %v925, %v926
        %v937 = vsel %vm931, %v924, %v925
        %v938 = vsel %vm931, %v923, %v924
        %v939 = vsel %vm931, %v922, %v923
        %v940 = vsel %vm931, %v921, %v922
        %v941 = vsel %vm931, %v920, %v921
        %v942 = vsel %vm931, %v919, %v920
        %v943 = vsel %vm931, %v918, %v919
        %v944 = vsel %vm931, %v917, %v918
        %v945 = vsel %vm931, %v916, %v917
        %v946 = vsel %vm931, %v915, %v916
        %v947 = vsel %vm931, %v914, %v915
        %v948 = vsel %vm931, %v913, %v914
        %v949 = vsel %vm931, %v912, %v913
        %v950 = vsel %vm931, %v911, %v912
        %v951 = vsel %vm931, %v910, %v911
        %v952 = vsel %vm931, %v909, %v910
        %v953 = vsel %vm931, %v908, %v909
        %v954 = vsel %vm931, %v907, %v908
        %v955 = vsel %vm931, %v906, %v907
        %v956 = vsel %vm931, %v905, %v906
        %v957 = vsel %vm931, %v904, %v905
        %v958 = vsel %vm931, %v903, %v904
        %v959 = vsel %vm931, %v902, %v903
        %v960 = vsel %vm931, %v901, %v902
        %v961 = vsel %vm931, %v900, %v901
        %v962 = vsel %vm931, %v899, %v900
        %v963 = vsel %vm931, %v898, %v899
        %v964 = vsel %vm931, %v897, %v898
        %v965 = vsel %vm931, %v896, %v897
        %v966 = vsel %vm931, %v895, %v896
        %v967 = vsel %vm931, %v894, %v895
        %v968 = vsel %vm931, %v893, %v894
        %v969 = vsel %vm931, %v892, %v893
        %v970 = vsel %vm931, %v891, %v892
        %v971 = vsel %vm931, %v890, %v891
        %v972 = vsel %vm931, %v889, %v890
        %v973 = vsel %vm931, %v888, %v889
        %v974 = vsel %vm931, %v887, %v888
        %v975 = vsel %vm931, %v886, %v887
        %v976 = vsel %vm931, %v885, %v886
        %v977 = vsel %vm931, %v884, %v885
        %v978 = vsel %vm931, %v883, %v884
        %v979 = vsel %vm931, %v882, %v883
        %v980 = vsel %vm931, %v881, %v882
        %v981 = vsel %vm931, %v880, %v881
        %v982 = vsel %vm931, %v879, %v880
        %v983 = vsel %vm931, %v878, %v879
        %v984 = vsel %vm931, %v877, %v878
        %v985 = vsel %vm931, %v930, %v877
        %s986 = scalar_lea.vmem [#allocation5], 256
        %v987 = vld [vmem:[%s986] sm:$0xff]
        %v988 = vld [vmem:[%s986 + $0x8] sm:$0xff]
        %v989 = vld [vmem:[%s986 + $0x10] sm:$0xff]
        %v990 = vld [vmem:[%s986 + $0x18] sm:$0xff]
        %v991 = vld [vmem:[%s986 + $0x20] sm:$0xff]
        %v992 = vld [vmem:[%s986 + $0x28] sm:$0xff]
        %v993 = vld [vmem:[%s986 + $0x30] sm:$0xff]
        %v994 = vld [vmem:[%s986 + $0x38] sm:$0xff]
        %v995 = vld [vmem:[%s986 + $0x40] sm:$0xff]
        %v996 = vld [vmem:[%s986 + $0x48] sm:$0xff]
        %v997 = vld [vmem:[%s986 + $0x50] sm:$0xff]
        %v998 = vld [vmem:[%s986 + $0x58] sm:$0xff]
        %v999 = vld [vmem:[%s986 + $0x60] sm:$0xff]
        %v1000 = vld [vmem:[%s986 + $0x68] sm:$0xff]
        %v1001 = vld [vmem:[%s986 + $0x70] sm:$0xff]
        %v1002 = vld [vmem:[%s986 + $0x78] sm:$0xff]
        %1003 = vmatpush.msra.mxu0 %v1002
        %1004 = vmatpush.msra.mxu0 %v1001
        %1005 = vmatpush.msra.mxu0 %v1000
        %1006 = vmatpush.msra.mxu0 %v999
        %1007 = vmatpush.msra.mxu0 %v998
        %1008 = vmatpush.msra.mxu0 %v997
        %1009 = vmatpush.msra.mxu0 %v996
        %1010 = vmatpush.msra.mxu0 %v995
        %1011 = vmatpush.msra.mxu0 %v994
        %1012 = vmatpush.msra.mxu0 %v993
        %1013 = vmatpush.msra.mxu0 %v992
        %1014 = vmatpush.msra.mxu0 %v991
        %1015 = vmatpush.msra.mxu0 %v990
        %1016 = vmatpush.msra.mxu0 %v989
        %1017 = vmatpush.msra.mxu0 %v988
        %1018 = vmatpush.msra.mxu0 %v987
        %1019 = vmatmul.f32.gmra.mxu0 %v933
        %v1020 = vpop.f32.mrf.mxu0
        %v1021 = vadd.f32 0.0, %v1020
        %1022 = vmatmul.f32.gmra.mxu0 %v932
        %v1023 = vpop.f32.mrf.mxu0
        %v1024 = vadd.f32 0.0, %v1023
        %1025 = vmatmul.f32.gmra.mxu0 %v985
        %v1026 = vpop.f32.mrf.mxu0
        %v1027 = vadd.f32 0.0, %v1026
        %1028 = vmatmul.f32.gmra.mxu0 %v984
        %v1029 = vpop.f32.mrf.mxu0
        %v1030 = vadd.f32 0.0, %v1029
        %1031 = vmatmul.f32.gmra.mxu0 %v983
        %v1032 = vpop.f32.mrf.mxu0
        %v1033 = vadd.f32 0.0, %v1032
        %1034 = vmatmul.f32.gmra.mxu0 %v982
        %v1035 = vpop.f32.mrf.mxu0
        %v1036 = vadd.f32 0.0, %v1035
        %1037 = vmatmul.f32.gmra.mxu0 %v981
        %v1038 = vpop.f32.mrf.mxu0
        %v1039 = vadd.f32 0.0, %v1038
        %1040 = vmatmul.f32.gmra.mxu0 %v980
        %v1041 = vpop.f32.mrf.mxu0
        %v1042 = vadd.f32 0.0, %v1041
        %1043 = vmatmul.f32.gmra.mxu0 %v979
        %v1044 = vpop.f32.mrf.mxu0
        %v1045 = vadd.f32 0.0, %v1044
        %1046 = vmatmul.f32.gmra.mxu0 %v978
        %v1047 = vpop.f32.mrf.mxu0
        %v1048 = vadd.f32 0.0, %v1047
        %1049 = vmatmul.f32.gmra.mxu0 %v977
        %v1050 = vpop.f32.mrf.mxu0
        %v1051 = vadd.f32 0.0, %v1050
        %1052 = vmatmul.f32.gmra.mxu0 %v976
        %v1053 = vpop.f32.mrf.mxu0
        %v1054 = vadd.f32 0.0, %v1053
        %1055 = vmatmul.f32.gmra.mxu0 %v975
        %v1056 = vpop.f32.mrf.mxu0
        %v1057 = vadd.f32 0.0, %v1056
        %1058 = vmatmul.f32.gmra.mxu0 %v974
        %v1059 = vpop.f32.mrf.mxu0
        %v1060 = vadd.f32 0.0, %v1059
        %1061 = vmatmul.f32.gmra.mxu0 %v973
        %v1062 = vpop.f32.mrf.mxu0
        %v1063 = vadd.f32 0.0, %v1062
        %1064 = vmatmul.f32.gmra.mxu0 %v972
        %v1065 = vpop.f32.mrf.mxu0
        %v1066 = vadd.f32 0.0, %v1065
        %1067 = vmatmul.f32.gmra.mxu0 %v971
        %v1068 = vpop.f32.mrf.mxu0
        %v1069 = vadd.f32 0.0, %v1068
        %1070 = vmatmul.f32.gmra.mxu0 %v970
        %v1071 = vpop.f32.mrf.mxu0
        %v1072 = vadd.f32 0.0, %v1071
        %1073 = vmatmul.f32.gmra.mxu0 %v969
        %v1074 = vpop.f32.mrf.mxu0
        %v1075 = vadd.f32 0.0, %v1074
        %1076 = vmatmul.f32.gmra.mxu0 %v968
        %v1077 = vpop.f32.mrf.mxu0
        %v1078 = vadd.f32 0.0, %v1077
        %1079 = vmatmul.f32.gmra.mxu0 %v967
        %v1080 = vpop.f32.mrf.mxu0
        %v1081 = vadd.f32 0.0, %v1080
        %1082 = vmatmul.f32.gmra.mxu0 %v966
        %v1083 = vpop.f32.mrf.mxu0
        %v1084 = vadd.f32 0.0, %v1083
        %1085 = vmatmul.f32.gmra.mxu0 %v965
        %v1086 = vpop.f32.mrf.mxu0
        %v1087 = vadd.f32 0.0, %v1086
        %1088 = vmatmul.f32.gmra.mxu0 %v964
        %v1089 = vpop.f32.mrf.mxu0
        %v1090 = vadd.f32 0.0, %v1089
        %1091 = vmatmul.f32.gmra.mxu0 %v963
        %v1092 = vpop.f32.mrf.mxu0
        %v1093 = vadd.f32 0.0, %v1092
        %1094 = vmatmul.f32.gmra.mxu0 %v962
        %v1095 = vpop.f32.mrf.mxu0
        %v1096 = vadd.f32 0.0, %v1095
        %1097 = vmatmul.f32.gmra.mxu0 %v961
        %v1098 = vpop.f32.mrf.mxu0
        %v1099 = vadd.f32 0.0, %v1098
        %1100 = vmatmul.f32.gmra.mxu0 %v960
        %v1101 = vpop.f32.mrf.mxu0
        %v1102 = vadd.f32 0.0, %v1101
        %1103 = vmatmul.f32.gmra.mxu0 %v959
        %v1104 = vpop.f32.mrf.mxu0
        %v1105 = vadd.f32 0.0, %v1104
        %1106 = vmatmul.f32.gmra.mxu0 %v958
        %v1107 = vpop.f32.mrf.mxu0
        %v1108 = vadd.f32 0.0, %v1107
        %1109 = vmatmul.f32.gmra.mxu0 %v957
        %v1110 = vpop.f32.mrf.mxu0
        %v1111 = vadd.f32 0.0, %v1110
        %1112 = vmatmul.f32.gmra.mxu0 %v956
        %v1113 = vpop.f32.mrf.mxu0
        %v1114 = vadd.f32 0.0, %v1113
        %1115 = vmatmul.f32.gmra.mxu0 %v955
        %v1116 = vpop.f32.mrf.mxu0
        %v1117 = vadd.f32 0.0, %v1116
        %1118 = vmatmul.f32.gmra.mxu0 %v954
        %v1119 = vpop.f32.mrf.mxu0
        %v1120 = vadd.f32 0.0, %v1119
        %1121 = vmatmul.f32.gmra.mxu0 %v953
        %v1122 = vpop.f32.mrf.mxu0
        %v1123 = vadd.f32 0.0, %v1122
        %1124 = vmatmul.f32.gmra.mxu0 %v952
        %v1125 = vpop.f32.mrf.mxu0
        %v1126 = vadd.f32 0.0, %v1125
        %1127 = vmatmul.f32.gmra.mxu0 %v951
        %v1128 = vpop.f32.mrf.mxu0
        %v1129 = vadd.f32 0.0, %v1128
        %1130 = vmatmul.f32.gmra.mxu0 %v950
        %v1131 = vpop.f32.mrf.mxu0
        %v1132 = vadd.f32 0.0, %v1131
        %1133 = vmatmul.f32.gmra.mxu0 %v949
        %v1134 = vpop.f32.mrf.mxu0
        %v1135 = vadd.f32 0.0, %v1134
        %1136 = vmatmul.f32.gmra.mxu0 %v948
        %v1137 = vpop.f32.mrf.mxu0
        %v1138 = vadd.f32 0.0, %v1137
        %1139 = vmatmul.f32.gmra.mxu0 %v947
        %v1140 = vpop.f32.mrf.mxu0
        %v1141 = vadd.f32 0.0, %v1140
        %1142 = vmatmul.f32.gmra.mxu0 %v946
        %v1143 = vpop.f32.mrf.mxu0
        %v1144 = vadd.f32 0.0, %v1143
        %1145 = vmatmul.f32.gmra.mxu0 %v945
        %v1146 = vpop.f32.mrf.mxu0
        %v1147 = vadd.f32 0.0, %v1146
        %1148 = vmatmul.f32.gmra.mxu0 %v944
        %v1149 = vpop.f32.mrf.mxu0
        %v1150 = vadd.f32 0.0, %v1149
        %1151 = vmatmul.f32.gmra.mxu0 %v943
        %v1152 = vpop.f32.mrf.mxu0
        %v1153 = vadd.f32 0.0, %v1152
        %1154 = vmatmul.f32.gmra.mxu0 %v942
        %v1155 = vpop.f32.mrf.mxu0
        %v1156 = vadd.f32 0.0, %v1155
        %1157 = vmatmul.f32.gmra.mxu0 %v941
        %v1158 = vpop.f32.mrf.mxu0
        %v1159 = vadd.f32 0.0, %v1158
        %1160 = vmatmul.f32.gmra.mxu0 %v940
        %v1161 = vpop.f32.mrf.mxu0
        %v1162 = vadd.f32 0.0, %v1161
        %1163 = vmatmul.f32.gmra.mxu0 %v939
        %v1164 = vpop.f32.mrf.mxu0
        %v1165 = vadd.f32 0.0, %v1164
        %1166 = vmatmul.f32.gmra.mxu0 %v938
        %v1167 = vpop.f32.mrf.mxu0
        %v1168 = vadd.f32 0.0, %v1167
        %1169 = vmatmul.f32.gmra.mxu0 %v937
        %v1170 = vpop.f32.mrf.mxu0
        %v1171 = vadd.f32 0.0, %v1170
        %1172 = vmatmul.f32.gmra.mxu0 %v936
        %v1173 = vpop.f32.mrf.mxu0
        %v1174 = vadd.f32 0.0, %v1173
        %1175 = vmatmul.f32.gmra.mxu0 %v935
        %v1176 = vpop.f32.mrf.mxu0
        %v1177 = vadd.f32 0.0, %v1176
        %1178 = vmatmul.f32.gmra.mxu0 %v934
        %v1179 = vpop.f32.mrf.mxu0
        %v1180 = vadd.f32 0.0, %v1179
        %1181 = vdwg.mxu0
        %v1182 = vadd.f32 %v716, %v1021
        %v1183 = vadd.f32 %v719, %v1024
        %v1184 = vadd.f32 %v722, %v1027
        %v1185 = vadd.f32 %v725, %v1030
        %v1186 = vadd.f32 %v728, %v1033
        %v1187 = vadd.f32 %v731, %v1036
        %v1188 = vadd.f32 %v734, %v1039
        %v1189 = vadd.f32 %v737, %v1042
        %v1190 = vadd.f32 %v740, %v1045
        %v1191 = vadd.f32 %v743, %v1048
        %v1192 = vadd.f32 %v746, %v1051
        %v1193 = vadd.f32 %v749, %v1054
        %v1194 = vadd.f32 %v752, %v1057
        %v1195 = vadd.f32 %v755, %v1060
        %v1196 = vadd.f32 %v758, %v1063
        %v1197 = vadd.f32 %v761, %v1066
        %v1198 = vadd.f32 %v764, %v1069
        %v1199 = vadd.f32 %v767, %v1072
        %v1200 = vadd.f32 %v770, %v1075
        %v1201 = vadd.f32 %v773, %v1078
        %v1202 = vadd.f32 %v776, %v1081
        %v1203 = vadd.f32 %v779, %v1084
        %v1204 = vadd.f32 %v782, %v1087
        %v1205 = vadd.f32 %v785, %v1090
        %v1206 = vadd.f32 %v788, %v1093
        %v1207 = vadd.f32 %v791, %v1096
        %v1208 = vadd.f32 %v794, %v1099
        %v1209 = vadd.f32 %v797, %v1102
        %v1210 = vadd.f32 %v800, %v1105
        %v1211 = vadd.f32 %v803, %v1108
        %v1212 = vadd.f32 %v806, %v1111
        %v1213 = vadd.f32 %v809, %v1114
        %v1214 = vadd.f32 %v812, %v1117
        %v1215 = vadd.f32 %v815, %v1120
        %v1216 = vadd.f32 %v818, %v1123
        %v1217 = vadd.f32 %v821, %v1126
        %v1218 = vadd.f32 %v824, %v1129
        %v1219 = vadd.f32 %v827, %v1132
        %v1220 = vadd.f32 %v830, %v1135
        %v1221 = vadd.f32 %v833, %v1138
        %v1222 = vadd.f32 %v836, %v1141
        %v1223 = vadd.f32 %v839, %v1144
        %v1224 = vadd.f32 %v842, %v1147
        %v1225 = vadd.f32 %v845, %v1150
        %v1226 = vadd.f32 %v848, %v1153
        %v1227 = vadd.f32 %v851, %v1156
        %v1228 = vadd.f32 %v854, %v1159
        %v1229 = vadd.f32 %v857, %v1162
        %v1230 = vadd.f32 %v860, %v1165
        %v1231 = vadd.f32 %v863, %v1168
        %v1232 = vadd.f32 %v866, %v1171
        %v1233 = vadd.f32 %v869, %v1174
        %v1234 = vadd.f32 %v872, %v1177
        %v1235 = vadd.f32 %v875, %v1180
        %s1236 = scalar_lea.vmem [#allocation5], 384
        %v1237 = vld [vmem:[%s1236] sm:$0xff]
        %v1238 = vld [vmem:[%s1236 + $0x8] sm:$0xff]
        %v1239 = vld [vmem:[%s1236 + $0x10] sm:$0xff]
        %v1240 = vld [vmem:[%s1236 + $0x18] sm:$0xff]
        %v1241 = vld [vmem:[%s1236 + $0x20] sm:$0xff]
        %v1242 = vld [vmem:[%s1236 + $0x28] sm:$0xff]
        %v1243 = vld [vmem:[%s1236 + $0x30] sm:$0xff]
        %v1244 = vld [vmem:[%s1236 + $0x38] sm:$0xff]
        %v1245 = vld [vmem:[%s1236 + $0x40] sm:$0xff]
        %v1246 = vld [vmem:[%s1236 + $0x48] sm:$0xff]
        %v1247 = vld [vmem:[%s1236 + $0x50] sm:$0xff]
        %v1248 = vld [vmem:[%s1236 + $0x58] sm:$0xff]
        %v1249 = vld [vmem:[%s1236 + $0x60] sm:$0xff]
        %v1250 = vld [vmem:[%s1236 + $0x68] sm:$0xff]
        %v1251 = vld [vmem:[%s1236 + $0x70] sm:$0xff]
        %v1252 = vld [vmem:[%s1236 + $0x78] sm:$0xff]
        %1253 = vmatpush.msra.mxu0 %v1252
        %1254 = vmatpush.msra.mxu0 %v1251
        %1255 = vmatpush.msra.mxu0 %v1250
        %1256 = vmatpush.msra.mxu0 %v1249
        %1257 = vmatpush.msra.mxu0 %v1248
        %1258 = vmatpush.msra.mxu0 %v1247
        %1259 = vmatpush.msra.mxu0 %v1246
        %1260 = vmatpush.msra.mxu0 %v1245
        %1261 = vmatpush.msra.mxu0 %v1244
        %1262 = vmatpush.msra.mxu0 %v1243
        %1263 = vmatpush.msra.mxu0 %v1242
        %1264 = vmatpush.msra.mxu0 %v1241
        %1265 = vmatpush.msra.mxu0 %v1240
        %1266 = vmatpush.msra.mxu0 %v1239
        %1267 = vmatpush.msra.mxu0 %v1238
        %1268 = vmatpush.msra.mxu0 %v1237
        %1269 = vmatmul.f32.gmra.mxu0 %v485
        %v1270 = vpop.f32.mrf.mxu0
        %v1271 = vadd.f32 0.0, %v1270
        %1272 = vmatmul.f32.gmra.mxu0 %v484
        %v1273 = vpop.f32.mrf.mxu0
        %v1274 = vadd.f32 0.0, %v1273
        %1275 = vmatmul.f32.gmra.mxu0 %v483
        %v1276 = vpop.f32.mrf.mxu0
        %v1277 = vadd.f32 0.0, %v1276
        %1278 = vmatmul.f32.gmra.mxu0 %v482
        %v1279 = vpop.f32.mrf.mxu0
        %v1280 = vadd.f32 0.0, %v1279
        %1281 = vmatmul.f32.gmra.mxu0 %v481
        %v1282 = vpop.f32.mrf.mxu0
        %v1283 = vadd.f32 0.0, %v1282
        %1284 = vmatmul.f32.gmra.mxu0 %v480
        %v1285 = vpop.f32.mrf.mxu0
        %v1286 = vadd.f32 0.0, %v1285
        %1287 = vmatmul.f32.gmra.mxu0 %v479
        %v1288 = vpop.f32.mrf.mxu0
        %v1289 = vadd.f32 0.0, %v1288
        %1290 = vmatmul.f32.gmra.mxu0 %v478
        %v1291 = vpop.f32.mrf.mxu0
        %v1292 = vadd.f32 0.0, %v1291
        %1293 = vmatmul.f32.gmra.mxu0 %v477
        %v1294 = vpop.f32.mrf.mxu0
        %v1295 = vadd.f32 0.0, %v1294
        %1296 = vmatmul.f32.gmra.mxu0 %v476
        %v1297 = vpop.f32.mrf.mxu0
        %v1298 = vadd.f32 0.0, %v1297
        %1299 = vmatmul.f32.gmra.mxu0 %v475
        %v1300 = vpop.f32.mrf.mxu0
        %v1301 = vadd.f32 0.0, %v1300
        %1302 = vmatmul.f32.gmra.mxu0 %v474
        %v1303 = vpop.f32.mrf.mxu0
        %v1304 = vadd.f32 0.0, %v1303
        %1305 = vmatmul.f32.gmra.mxu0 %v473
        %v1306 = vpop.f32.mrf.mxu0
        %v1307 = vadd.f32 0.0, %v1306
        %1308 = vmatmul.f32.gmra.mxu0 %v472
        %v1309 = vpop.f32.mrf.mxu0
        %v1310 = vadd.f32 0.0, %v1309
        %1311 = vmatmul.f32.gmra.mxu0 %v471
        %v1312 = vpop.f32.mrf.mxu0
        %v1313 = vadd.f32 0.0, %v1312
        %1314 = vmatmul.f32.gmra.mxu0 %v470
        %v1315 = vpop.f32.mrf.mxu0
        %v1316 = vadd.f32 0.0, %v1315
        %1317 = vmatmul.f32.gmra.mxu0 %v469
        %v1318 = vpop.f32.mrf.mxu0
        %v1319 = vadd.f32 0.0, %v1318
        %1320 = vmatmul.f32.gmra.mxu0 %v468
        %v1321 = vpop.f32.mrf.mxu0
        %v1322 = vadd.f32 0.0, %v1321
        %1323 = vmatmul.f32.gmra.mxu0 %v467
        %v1324 = vpop.f32.mrf.mxu0
        %v1325 = vadd.f32 0.0, %v1324
        %1326 = vmatmul.f32.gmra.mxu0 %v466
        %v1327 = vpop.f32.mrf.mxu0
        %v1328 = vadd.f32 0.0, %v1327
        %1329 = vmatmul.f32.gmra.mxu0 %v465
        %v1330 = vpop.f32.mrf.mxu0
        %v1331 = vadd.f32 0.0, %v1330
        %1332 = vmatmul.f32.gmra.mxu0 %v464
        %v1333 = vpop.f32.mrf.mxu0
        %v1334 = vadd.f32 0.0, %v1333
        %1335 = vmatmul.f32.gmra.mxu0 %v463
        %v1336 = vpop.f32.mrf.mxu0
        %v1337 = vadd.f32 0.0, %v1336
        %1338 = vmatmul.f32.gmra.mxu0 %v462
        %v1339 = vpop.f32.mrf.mxu0
        %v1340 = vadd.f32 0.0, %v1339
        %1341 = vmatmul.f32.gmra.mxu0 %v461
        %v1342 = vpop.f32.mrf.mxu0
        %v1343 = vadd.f32 0.0, %v1342
        %1344 = vmatmul.f32.gmra.mxu0 %v460
        %v1345 = vpop.f32.mrf.mxu0
        %v1346 = vadd.f32 0.0, %v1345
        %1347 = vmatmul.f32.gmra.mxu0 %v459
        %v1348 = vpop.f32.mrf.mxu0
        %v1349 = vadd.f32 0.0, %v1348
        %1350 = vmatmul.f32.gmra.mxu0 %v458
        %v1351 = vpop.f32.mrf.mxu0
        %v1352 = vadd.f32 0.0, %v1351
        %1353 = vmatmul.f32.gmra.mxu0 %v457
        %v1354 = vpop.f32.mrf.mxu0
        %v1355 = vadd.f32 0.0, %v1354
        %1356 = vmatmul.f32.gmra.mxu0 %v456
        %v1357 = vpop.f32.mrf.mxu0
        %v1358 = vadd.f32 0.0, %v1357
        %1359 = vmatmul.f32.gmra.mxu0 %v455
        %v1360 = vpop.f32.mrf.mxu0
        %v1361 = vadd.f32 0.0, %v1360
        %1362 = vmatmul.f32.gmra.mxu0 %v454
        %v1363 = vpop.f32.mrf.mxu0
        %v1364 = vadd.f32 0.0, %v1363
        %1365 = vmatmul.f32.gmra.mxu0 %v453
        %v1366 = vpop.f32.mrf.mxu0
        %v1367 = vadd.f32 0.0, %v1366
        %1368 = vmatmul.f32.gmra.mxu0 %v452
        %v1369 = vpop.f32.mrf.mxu0
        %v1370 = vadd.f32 0.0, %v1369
        %1371 = vmatmul.f32.gmra.mxu0 %v451
        %v1372 = vpop.f32.mrf.mxu0
        %v1373 = vadd.f32 0.0, %v1372
        %1374 = vmatmul.f32.gmra.mxu0 %v450
        %v1375 = vpop.f32.mrf.mxu0
        %v1376 = vadd.f32 0.0, %v1375
        %1377 = vmatmul.f32.gmra.mxu0 %v449
        %v1378 = vpop.f32.mrf.mxu0
        %v1379 = vadd.f32 0.0, %v1378
        %1380 = vmatmul.f32.gmra.mxu0 %v448
        %v1381 = vpop.f32.mrf.mxu0
        %v1382 = vadd.f32 0.0, %v1381
        %1383 = vmatmul.f32.gmra.mxu0 %v447
        %v1384 = vpop.f32.mrf.mxu0
        %v1385 = vadd.f32 0.0, %v1384
        %1386 = vmatmul.f32.gmra.mxu0 %v446
        %v1387 = vpop.f32.mrf.mxu0
        %v1388 = vadd.f32 0.0, %v1387
        %1389 = vmatmul.f32.gmra.mxu0 %v445
        %v1390 = vpop.f32.mrf.mxu0
        %v1391 = vadd.f32 0.0, %v1390
        %1392 = vmatmul.f32.gmra.mxu0 %v444
        %v1393 = vpop.f32.mrf.mxu0
        %v1394 = vadd.f32 0.0, %v1393
        %1395 = vmatmul.f32.gmra.mxu0 %v443
        %v1396 = vpop.f32.mrf.mxu0
        %v1397 = vadd.f32 0.0, %v1396
        %1398 = vmatmul.f32.gmra.mxu0 %v442
        %v1399 = vpop.f32.mrf.mxu0
        %v1400 = vadd.f32 0.0, %v1399
        %1401 = vmatmul.f32.gmra.mxu0 %v441
        %v1402 = vpop.f32.mrf.mxu0
        %v1403 = vadd.f32 0.0, %v1402
        %1404 = vmatmul.f32.gmra.mxu0 %v440
        %v1405 = vpop.f32.mrf.mxu0
        %v1406 = vadd.f32 0.0, %v1405
        %1407 = vmatmul.f32.gmra.mxu0 %v439
        %v1408 = vpop.f32.mrf.mxu0
        %v1409 = vadd.f32 0.0, %v1408
        %1410 = vmatmul.f32.gmra.mxu0 %v438
        %v1411 = vpop.f32.mrf.mxu0
        %v1412 = vadd.f32 0.0, %v1411
        %1413 = vmatmul.f32.gmra.mxu0 %v437
        %v1414 = vpop.f32.mrf.mxu0
        %v1415 = vadd.f32 0.0, %v1414
        %1416 = vmatmul.f32.gmra.mxu0 %v436
        %v1417 = vpop.f32.mrf.mxu0
        %v1418 = vadd.f32 0.0, %v1417
        %1419 = vmatmul.f32.gmra.mxu0 %v435
        %v1420 = vpop.f32.mrf.mxu0
        %v1421 = vadd.f32 0.0, %v1420
        %1422 = vmatmul.f32.gmra.mxu0 %v434
        %v1423 = vpop.f32.mrf.mxu0
        %v1424 = vadd.f32 0.0, %v1423
        %1425 = vmatmul.f32.gmra.mxu0 %v433
        %v1426 = vpop.f32.mrf.mxu0
        %v1427 = vadd.f32 0.0, %v1426
        %1428 = vmatmul.f32.gmra.mxu0 %v432
        %v1429 = vpop.f32.mrf.mxu0
        %v1430 = vadd.f32 0.0, %v1429
        %1431 = vdwg.mxu0
        %v1432 = vadd.f32 %v1182, %v1271
        %v1433 = vadd.f32 %v1183, %v1274
        %v1434 = vadd.f32 %v1184, %v1277
        %v1435 = vadd.f32 %v1185, %v1280
        %v1436 = vadd.f32 %v1186, %v1283
        %v1437 = vadd.f32 %v1187, %v1286
        %v1438 = vadd.f32 %v1188, %v1289
        %v1439 = vadd.f32 %v1189, %v1292
        %v1440 = vadd.f32 %v1190, %v1295
        %v1441 = vadd.f32 %v1191, %v1298
        %v1442 = vadd.f32 %v1192, %v1301
        %v1443 = vadd.f32 %v1193, %v1304
        %v1444 = vadd.f32 %v1194, %v1307
        %v1445 = vadd.f32 %v1195, %v1310
        %v1446 = vadd.f32 %v1196, %v1313
        %v1447 = vadd.f32 %v1197, %v1316
        %v1448 = vadd.f32 %v1198, %v1319
        %v1449 = vadd.f32 %v1199, %v1322
        %v1450 = vadd.f32 %v1200, %v1325
        %v1451 = vadd.f32 %v1201, %v1328
        %v1452 = vadd.f32 %v1202, %v1331
        %v1453 = vadd.f32 %v1203, %v1334
        %v1454 = vadd.f32 %v1204, %v1337
        %v1455 = vadd.f32 %v1205, %v1340
        %v1456 = vadd.f32 %v1206, %v1343
        %v1457 = vadd.f32 %v1207, %v1346
        %v1458 = vadd.f32 %v1208, %v1349
        %v1459 = vadd.f32 %v1209, %v1352
        %v1460 = vadd.f32 %v1210, %v1355
        %v1461 = vadd.f32 %v1211, %v1358
        %v1462 = vadd.f32 %v1212, %v1361
        %v1463 = vadd.f32 %v1213, %v1364
        %v1464 = vadd.f32 %v1214, %v1367
        %v1465 = vadd.f32 %v1215, %v1370
        %v1466 = vadd.f32 %v1216, %v1373
        %v1467 = vadd.f32 %v1217, %v1376
        %v1468 = vadd.f32 %v1218, %v1379
        %v1469 = vadd.f32 %v1219, %v1382
        %v1470 = vadd.f32 %v1220, %v1385
        %v1471 = vadd.f32 %v1221, %v1388
        %v1472 = vadd.f32 %v1222, %v1391
        %v1473 = vadd.f32 %v1223, %v1394
        %v1474 = vadd.f32 %v1224, %v1397
        %v1475 = vadd.f32 %v1225, %v1400
        %v1476 = vadd.f32 %v1226, %v1403
        %v1477 = vadd.f32 %v1227, %v1406
        %v1478 = vadd.f32 %v1228, %v1409
        %v1479 = vadd.f32 %v1229, %v1412
        %v1480 = vadd.f32 %v1230, %v1415
        %v1481 = vadd.f32 %v1231, %v1418
        %v1482 = vadd.f32 %v1232, %v1421
        %v1483 = vadd.f32 %v1233, %v1424
        %v1484 = vadd.f32 %v1234, %v1427
        %v1485 = vadd.f32 %v1235, %v1430
        %s1486 = scalar_lea.vmem [#allocation5], 512
        %v1487 = vld [vmem:[%s1486] sm:$0xff]
        %v1488 = vld [vmem:[%s1486 + $0x8] sm:$0xff]
        %v1489 = vld [vmem:[%s1486 + $0x10] sm:$0xff]
        %v1490 = vld [vmem:[%s1486 + $0x18] sm:$0xff]
        %v1491 = vld [vmem:[%s1486 + $0x20] sm:$0xff]
        %v1492 = vld [vmem:[%s1486 + $0x28] sm:$0xff]
        %v1493 = vld [vmem:[%s1486 + $0x30] sm:$0xff]
        %v1494 = vld [vmem:[%s1486 + $0x38] sm:$0xff]
        %v1495 = vld [vmem:[%s1486 + $0x40] sm:$0xff]
        %v1496 = vld [vmem:[%s1486 + $0x48] sm:$0xff]
        %v1497 = vld [vmem:[%s1486 + $0x50] sm:$0xff]
        %v1498 = vld [vmem:[%s1486 + $0x58] sm:$0xff]
        %v1499 = vld [vmem:[%s1486 + $0x60] sm:$0xff]
        %v1500 = vld [vmem:[%s1486 + $0x68] sm:$0xff]
        %v1501 = vld [vmem:[%s1486 + $0x70] sm:$0xff]
        %v1502 = vld [vmem:[%s1486 + $0x78] sm:$0xff]
        %1503 = vmatpush.msra.mxu0 %v1502
        %1504 = vmatpush.msra.mxu0 %v1501
        %1505 = vmatpush.msra.mxu0 %v1500
        %1506 = vmatpush.msra.mxu0 %v1499
        %1507 = vmatpush.msra.mxu0 %v1498
        %1508 = vmatpush.msra.mxu0 %v1497
        %1509 = vmatpush.msra.mxu0 %v1496
        %1510 = vmatpush.msra.mxu0 %v1495
        %1511 = vmatpush.msra.mxu0 %v1494
        %1512 = vmatpush.msra.mxu0 %v1493
        %1513 = vmatpush.msra.mxu0 %v1492
        %1514 = vmatpush.msra.mxu0 %v1491
        %1515 = vmatpush.msra.mxu0 %v1490
        %1516 = vmatpush.msra.mxu0 %v1489
        %1517 = vmatpush.msra.mxu0 %v1488
        %1518 = vmatpush.msra.mxu0 %v1487
        %1519 = vmatmul.f32.gmra.mxu0 %v321
        %v1520 = vpop.f32.mrf.mxu0
        %v1521 = vadd.f32 0.0, %v1520
        %1522 = vmatmul.f32.gmra.mxu0 %v322
        %v1523 = vpop.f32.mrf.mxu0
        %v1524 = vadd.f32 0.0, %v1523
        %1525 = vmatmul.f32.gmra.mxu0 %v323
        %v1526 = vpop.f32.mrf.mxu0
        %v1527 = vadd.f32 0.0, %v1526
        %1528 = vmatmul.f32.gmra.mxu0 %v324
        %v1529 = vpop.f32.mrf.mxu0
        %v1530 = vadd.f32 0.0, %v1529
        %1531 = vmatmul.f32.gmra.mxu0 %v325
        %v1532 = vpop.f32.mrf.mxu0
        %v1533 = vadd.f32 0.0, %v1532
        %1534 = vmatmul.f32.gmra.mxu0 %v326
        %v1535 = vpop.f32.mrf.mxu0
        %v1536 = vadd.f32 0.0, %v1535
        %1537 = vmatmul.f32.gmra.mxu0 %v327
        %v1538 = vpop.f32.mrf.mxu0
        %v1539 = vadd.f32 0.0, %v1538
        %1540 = vmatmul.f32.gmra.mxu0 %v328
        %v1541 = vpop.f32.mrf.mxu0
        %v1542 = vadd.f32 0.0, %v1541
        %1543 = vmatmul.f32.gmra.mxu0 %v329
        %v1544 = vpop.f32.mrf.mxu0
        %v1545 = vadd.f32 0.0, %v1544
        %1546 = vmatmul.f32.gmra.mxu0 %v330
        %v1547 = vpop.f32.mrf.mxu0
        %v1548 = vadd.f32 0.0, %v1547
        %1549 = vmatmul.f32.gmra.mxu0 %v331
        %v1550 = vpop.f32.mrf.mxu0
        %v1551 = vadd.f32 0.0, %v1550
        %1552 = vmatmul.f32.gmra.mxu0 %v332
        %v1553 = vpop.f32.mrf.mxu0
        %v1554 = vadd.f32 0.0, %v1553
        %1555 = vmatmul.f32.gmra.mxu0 %v333
        %v1556 = vpop.f32.mrf.mxu0
        %v1557 = vadd.f32 0.0, %v1556
        %1558 = vmatmul.f32.gmra.mxu0 %v334
        %v1559 = vpop.f32.mrf.mxu0
        %v1560 = vadd.f32 0.0, %v1559
        %1561 = vmatmul.f32.gmra.mxu0 %v335
        %v1562 = vpop.f32.mrf.mxu0
        %v1563 = vadd.f32 0.0, %v1562
        %1564 = vmatmul.f32.gmra.mxu0 %v336
        %v1565 = vpop.f32.mrf.mxu0
        %v1566 = vadd.f32 0.0, %v1565
        %1567 = vmatmul.f32.gmra.mxu0 %v337
        %v1568 = vpop.f32.mrf.mxu0
        %v1569 = vadd.f32 0.0, %v1568
        %1570 = vmatmul.f32.gmra.mxu0 %v338
        %v1571 = vpop.f32.mrf.mxu0
        %v1572 = vadd.f32 0.0, %v1571
        %1573 = vmatmul.f32.gmra.mxu0 %v339
        %v1574 = vpop.f32.mrf.mxu0
        %v1575 = vadd.f32 0.0, %v1574
        %1576 = vmatmul.f32.gmra.mxu0 %v340
        %v1577 = vpop.f32.mrf.mxu0
        %v1578 = vadd.f32 0.0, %v1577
        %1579 = vmatmul.f32.gmra.mxu0 %v341
        %v1580 = vpop.f32.mrf.mxu0
        %v1581 = vadd.f32 0.0, %v1580
        %1582 = vmatmul.f32.gmra.mxu0 %v342
        %v1583 = vpop.f32.mrf.mxu0
        %v1584 = vadd.f32 0.0, %v1583
        %1585 = vmatmul.f32.gmra.mxu0 %v343
        %v1586 = vpop.f32.mrf.mxu0
        %v1587 = vadd.f32 0.0, %v1586
        %1588 = vmatmul.f32.gmra.mxu0 %v344
        %v1589 = vpop.f32.mrf.mxu0
        %v1590 = vadd.f32 0.0, %v1589
        %1591 = vmatmul.f32.gmra.mxu0 %v345
        %v1592 = vpop.f32.mrf.mxu0
        %v1593 = vadd.f32 0.0, %v1592
        %1594 = vmatmul.f32.gmra.mxu0 %v346
        %v1595 = vpop.f32.mrf.mxu0
        %v1596 = vadd.f32 0.0, %v1595
        %1597 = vmatmul.f32.gmra.mxu0 %v347
        %v1598 = vpop.f32.mrf.mxu0
        %v1599 = vadd.f32 0.0, %v1598
        %1600 = vmatmul.f32.gmra.mxu0 %v348
        %v1601 = vpop.f32.mrf.mxu0
        %v1602 = vadd.f32 0.0, %v1601
        %1603 = vmatmul.f32.gmra.mxu0 %v349
        %v1604 = vpop.f32.mrf.mxu0
        %v1605 = vadd.f32 0.0, %v1604
        %1606 = vmatmul.f32.gmra.mxu0 %v350
        %v1607 = vpop.f32.mrf.mxu0
        %v1608 = vadd.f32 0.0, %v1607
        %1609 = vmatmul.f32.gmra.mxu0 %v351
        %v1610 = vpop.f32.mrf.mxu0
        %v1611 = vadd.f32 0.0, %v1610
        %1612 = vmatmul.f32.gmra.mxu0 %v352
        %v1613 = vpop.f32.mrf.mxu0
        %v1614 = vadd.f32 0.0, %v1613
        %1615 = vmatmul.f32.gmra.mxu0 %v353
        %v1616 = vpop.f32.mrf.mxu0
        %v1617 = vadd.f32 0.0, %v1616
        %1618 = vmatmul.f32.gmra.mxu0 %v354
        %v1619 = vpop.f32.mrf.mxu0
        %v1620 = vadd.f32 0.0, %v1619
        %1621 = vmatmul.f32.gmra.mxu0 %v355
        %v1622 = vpop.f32.mrf.mxu0
        %v1623 = vadd.f32 0.0, %v1622
        %1624 = vmatmul.f32.gmra.mxu0 %v356
        %v1625 = vpop.f32.mrf.mxu0
        %v1626 = vadd.f32 0.0, %v1625
        %1627 = vmatmul.f32.gmra.mxu0 %v357
        %v1628 = vpop.f32.mrf.mxu0
        %v1629 = vadd.f32 0.0, %v1628
        %1630 = vmatmul.f32.gmra.mxu0 %v358
        %v1631 = vpop.f32.mrf.mxu0
        %v1632 = vadd.f32 0.0, %v1631
        %1633 = vmatmul.f32.gmra.mxu0 %v359
        %v1634 = vpop.f32.mrf.mxu0
        %v1635 = vadd.f32 0.0, %v1634
        %1636 = vmatmul.f32.gmra.mxu0 %v360
        %v1637 = vpop.f32.mrf.mxu0
        %v1638 = vadd.f32 0.0, %v1637
        %1639 = vmatmul.f32.gmra.mxu0 %v361
        %v1640 = vpop.f32.mrf.mxu0
        %v1641 = vadd.f32 0.0, %v1640
        %1642 = vmatmul.f32.gmra.mxu0 %v362
        %v1643 = vpop.f32.mrf.mxu0
        %v1644 = vadd.f32 0.0, %v1643
        %1645 = vmatmul.f32.gmra.mxu0 %v363
        %v1646 = vpop.f32.mrf.mxu0
        %v1647 = vadd.f32 0.0, %v1646
        %1648 = vmatmul.f32.gmra.mxu0 %v364
        %v1649 = vpop.f32.mrf.mxu0
        %v1650 = vadd.f32 0.0, %v1649
        %1651 = vmatmul.f32.gmra.mxu0 %v365
        %v1652 = vpop.f32.mrf.mxu0
        %v1653 = vadd.f32 0.0, %v1652
        %1654 = vmatmul.f32.gmra.mxu0 %v366
        %v1655 = vpop.f32.mrf.mxu0
        %v1656 = vadd.f32 0.0, %v1655
        %1657 = vmatmul.f32.gmra.mxu0 %v367
        %v1658 = vpop.f32.mrf.mxu0
        %v1659 = vadd.f32 0.0, %v1658
        %1660 = vmatmul.f32.gmra.mxu0 %v368
        %v1661 = vpop.f32.mrf.mxu0
        %v1662 = vadd.f32 0.0, %v1661
        %1663 = vmatmul.f32.gmra.mxu0 %v369
        %v1664 = vpop.f32.mrf.mxu0
        %v1665 = vadd.f32 0.0, %v1664
        %1666 = vmatmul.f32.gmra.mxu0 %v370
        %v1667 = vpop.f32.mrf.mxu0
        %v1668 = vadd.f32 0.0, %v1667
        %1669 = vmatmul.f32.gmra.mxu0 %v371
        %v1670 = vpop.f32.mrf.mxu0
        %v1671 = vadd.f32 0.0, %v1670
        %1672 = vmatmul.f32.gmra.mxu0 %v372
        %v1673 = vpop.f32.mrf.mxu0
        %v1674 = vadd.f32 0.0, %v1673
        %1675 = vmatmul.f32.gmra.mxu0 %v373
        %v1676 = vpop.f32.mrf.mxu0
        %v1677 = vadd.f32 0.0, %v1676
        %1678 = vmatmul.f32.gmra.mxu0 %v374
        %v1679 = vpop.f32.mrf.mxu0
        %v1680 = vadd.f32 0.0, %v1679
        %1681 = vdwg.mxu0
        %v1682 = vadd.f32 %v1432, %v1521
        %v1683 = vadd.f32 %v1433, %v1524
        %v1684 = vadd.f32 %v1434, %v1527
        %v1685 = vadd.f32 %v1435, %v1530
        %v1686 = vadd.f32 %v1436, %v1533
        %v1687 = vadd.f32 %v1437, %v1536
        %v1688 = vadd.f32 %v1438, %v1539
        %v1689 = vadd.f32 %v1439, %v1542
        %v1690 = vadd.f32 %v1440, %v1545
        %v1691 = vadd.f32 %v1441, %v1548
        %v1692 = vadd.f32 %v1442, %v1551
        %v1693 = vadd.f32 %v1443, %v1554
        %v1694 = vadd.f32 %v1444, %v1557
        %v1695 = vadd.f32 %v1445, %v1560
        %v1696 = vadd.f32 %v1446, %v1563
        %v1697 = vadd.f32 %v1447, %v1566
        %v1698 = vadd.f32 %v1448, %v1569
        %v1699 = vadd.f32 %v1449, %v1572
        %v1700 = vadd.f32 %v1450, %v1575
        %v1701 = vadd.f32 %v1451, %v1578
        %v1702 = vadd.f32 %v1452, %v1581
        %v1703 = vadd.f32 %v1453, %v1584
        %v1704 = vadd.f32 %v1454, %v1587
        %v1705 = vadd.f32 %v1455, %v1590
        %v1706 = vadd.f32 %v1456, %v1593
        %v1707 = vadd.f32 %v1457, %v1596
        %v1708 = vadd.f32 %v1458, %v1599
        %v1709 = vadd.f32 %v1459, %v1602
        %v1710 = vadd.f32 %v1460, %v1605
        %v1711 = vadd.f32 %v1461, %v1608
        %v1712 = vadd.f32 %v1462, %v1611
        %v1713 = vadd.f32 %v1463, %v1614
        %v1714 = vadd.f32 %v1464, %v1617
        %v1715 = vadd.f32 %v1465, %v1620
        %v1716 = vadd.f32 %v1466, %v1623
        %v1717 = vadd.f32 %v1467, %v1626
        %v1718 = vadd.f32 %v1468, %v1629
        %v1719 = vadd.f32 %v1469, %v1632
        %v1720 = vadd.f32 %v1470, %v1635
        %v1721 = vadd.f32 %v1471, %v1638
        %v1722 = vadd.f32 %v1472, %v1641
        %v1723 = vadd.f32 %v1473, %v1644
        %v1724 = vadd.f32 %v1474, %v1647
        %v1725 = vadd.f32 %v1475, %v1650
        %v1726 = vadd.f32 %v1476, %v1653
        %v1727 = vadd.f32 %v1477, %v1656
        %v1728 = vadd.f32 %v1478, %v1659
        %v1729 = vadd.f32 %v1479, %v1662
        %v1730 = vadd.f32 %v1480, %v1665
        %v1731 = vadd.f32 %v1481, %v1668
        %v1732 = vadd.f32 %v1482, %v1671
        %v1733 = vadd.f32 %v1483, %v1674
        %v1734 = vadd.f32 %v1484, %v1677
        %v1735 = vadd.f32 %v1485, %v1680
        %s1736 = scalar_lea.vmem [#allocation5], 640
        %v1737 = vld [vmem:[%s1736] sm:$0xff]
        %v1738 = vld [vmem:[%s1736 + $0x8] sm:$0xff]
        %v1739 = vld [vmem:[%s1736 + $0x10] sm:$0xff]
        %v1740 = vld [vmem:[%s1736 + $0x18] sm:$0xff]
        %v1741 = vld [vmem:[%s1736 + $0x20] sm:$0xff]
        %v1742 = vld [vmem:[%s1736 + $0x28] sm:$0xff]
        %v1743 = vld [vmem:[%s1736 + $0x30] sm:$0xff]
        %v1744 = vld [vmem:[%s1736 + $0x38] sm:$0xff]
        %v1745 = vld [vmem:[%s1736 + $0x40] sm:$0xff]
        %v1746 = vld [vmem:[%s1736 + $0x48] sm:$0xff]
        %v1747 = vld [vmem:[%s1736 + $0x50] sm:$0xff]
        %v1748 = vld [vmem:[%s1736 + $0x58] sm:$0xff]
        %v1749 = vld [vmem:[%s1736 + $0x60] sm:$0xff]
        %v1750 = vld [vmem:[%s1736 + $0x68] sm:$0xff]
        %v1751 = vld [vmem:[%s1736 + $0x70] sm:$0xff]
        %v1752 = vld [vmem:[%s1736 + $0x78] sm:$0xff]
        %1753 = vmatpush.msra.mxu0 %v1752
        %1754 = vmatpush.msra.mxu0 %v1751
        %1755 = vmatpush.msra.mxu0 %v1750
        %1756 = vmatpush.msra.mxu0 %v1749
        %1757 = vmatpush.msra.mxu0 %v1748
        %1758 = vmatpush.msra.mxu0 %v1747
        %1759 = vmatpush.msra.mxu0 %v1746
        %1760 = vmatpush.msra.mxu0 %v1745
        %1761 = vmatpush.msra.mxu0 %v1744
        %1762 = vmatpush.msra.mxu0 %v1743
        %1763 = vmatpush.msra.mxu0 %v1742
        %1764 = vmatpush.msra.mxu0 %v1741
        %1765 = vmatpush.msra.mxu0 %v1740
        %1766 = vmatpush.msra.mxu0 %v1739
        %1767 = vmatpush.msra.mxu0 %v1738
        %1768 = vmatpush.msra.mxu0 %v1737
        %1769 = vmatmul.f32.gmra.mxu0 %v984
        %v1770 = vpop.f32.mrf.mxu0
        %v1771 = vadd.f32 0.0, %v1770
        %1772 = vmatmul.f32.gmra.mxu0 %v983
        %v1773 = vpop.f32.mrf.mxu0
        %v1774 = vadd.f32 0.0, %v1773
        %1775 = vmatmul.f32.gmra.mxu0 %v982
        %v1776 = vpop.f32.mrf.mxu0
        %v1777 = vadd.f32 0.0, %v1776
        %1778 = vmatmul.f32.gmra.mxu0 %v981
        %v1779 = vpop.f32.mrf.mxu0
        %v1780 = vadd.f32 0.0, %v1779
        %1781 = vmatmul.f32.gmra.mxu0 %v980
        %v1782 = vpop.f32.mrf.mxu0
        %v1783 = vadd.f32 0.0, %v1782
        %1784 = vmatmul.f32.gmra.mxu0 %v979
        %v1785 = vpop.f32.mrf.mxu0
        %v1786 = vadd.f32 0.0, %v1785
        %1787 = vmatmul.f32.gmra.mxu0 %v978
        %v1788 = vpop.f32.mrf.mxu0
        %v1789 = vadd.f32 0.0, %v1788
        %1790 = vmatmul.f32.gmra.mxu0 %v977
        %v1791 = vpop.f32.mrf.mxu0
        %v1792 = vadd.f32 0.0, %v1791
        %1793 = vmatmul.f32.gmra.mxu0 %v976
        %v1794 = vpop.f32.mrf.mxu0
        %v1795 = vadd.f32 0.0, %v1794
        %1796 = vmatmul.f32.gmra.mxu0 %v975
        %v1797 = vpop.f32.mrf.mxu0
        %v1798 = vadd.f32 0.0, %v1797
        %1799 = vmatmul.f32.gmra.mxu0 %v974
        %v1800 = vpop.f32.mrf.mxu0
        %v1801 = vadd.f32 0.0, %v1800
        %1802 = vmatmul.f32.gmra.mxu0 %v973
        %v1803 = vpop.f32.mrf.mxu0
        %v1804 = vadd.f32 0.0, %v1803
        %1805 = vmatmul.f32.gmra.mxu0 %v972
        %v1806 = vpop.f32.mrf.mxu0
        %v1807 = vadd.f32 0.0, %v1806
        %1808 = vmatmul.f32.gmra.mxu0 %v971
        %v1809 = vpop.f32.mrf.mxu0
        %v1810 = vadd.f32 0.0, %v1809
        %1811 = vmatmul.f32.gmra.mxu0 %v970
        %v1812 = vpop.f32.mrf.mxu0
        %v1813 = vadd.f32 0.0, %v1812
        %1814 = vmatmul.f32.gmra.mxu0 %v969
        %v1815 = vpop.f32.mrf.mxu0
        %v1816 = vadd.f32 0.0, %v1815
        %1817 = vmatmul.f32.gmra.mxu0 %v968
        %v1818 = vpop.f32.mrf.mxu0
        %v1819 = vadd.f32 0.0, %v1818
        %1820 = vmatmul.f32.gmra.mxu0 %v967
        %v1821 = vpop.f32.mrf.mxu0
        %v1822 = vadd.f32 0.0, %v1821
        %1823 = vmatmul.f32.gmra.mxu0 %v966
        %v1824 = vpop.f32.mrf.mxu0
        %v1825 = vadd.f32 0.0, %v1824
        %1826 = vmatmul.f32.gmra.mxu0 %v965
        %v1827 = vpop.f32.mrf.mxu0
        %v1828 = vadd.f32 0.0, %v1827
        %1829 = vmatmul.f32.gmra.mxu0 %v964
        %v1830 = vpop.f32.mrf.mxu0
        %v1831 = vadd.f32 0.0, %v1830
        %1832 = vmatmul.f32.gmra.mxu0 %v963
        %v1833 = vpop.f32.mrf.mxu0
        %v1834 = vadd.f32 0.0, %v1833
        %1835 = vmatmul.f32.gmra.mxu0 %v962
        %v1836 = vpop.f32.mrf.mxu0
        %v1837 = vadd.f32 0.0, %v1836
        %1838 = vmatmul.f32.gmra.mxu0 %v961
        %v1839 = vpop.f32.mrf.mxu0
        %v1840 = vadd.f32 0.0, %v1839
        %1841 = vmatmul.f32.gmra.mxu0 %v960
        %v1842 = vpop.f32.mrf.mxu0
        %v1843 = vadd.f32 0.0, %v1842
        %1844 = vmatmul.f32.gmra.mxu0 %v959
        %v1845 = vpop.f32.mrf.mxu0
        %v1846 = vadd.f32 0.0, %v1845
        %1847 = vmatmul.f32.gmra.mxu0 %v958
        %v1848 = vpop.f32.mrf.mxu0
        %v1849 = vadd.f32 0.0, %v1848
        %1850 = vmatmul.f32.gmra.mxu0 %v957
        %v1851 = vpop.f32.mrf.mxu0
        %v1852 = vadd.f32 0.0, %v1851
        %1853 = vmatmul.f32.gmra.mxu0 %v956
        %v1854 = vpop.f32.mrf.mxu0
        %v1855 = vadd.f32 0.0, %v1854
        %1856 = vmatmul.f32.gmra.mxu0 %v955
        %v1857 = vpop.f32.mrf.mxu0
        %v1858 = vadd.f32 0.0, %v1857
        %1859 = vmatmul.f32.gmra.mxu0 %v954
        %v1860 = vpop.f32.mrf.mxu0
        %v1861 = vadd.f32 0.0, %v1860
        %1862 = vmatmul.f32.gmra.mxu0 %v953
        %v1863 = vpop.f32.mrf.mxu0
        %v1864 = vadd.f32 0.0, %v1863
        %1865 = vmatmul.f32.gmra.mxu0 %v952
        %v1866 = vpop.f32.mrf.mxu0
        %v1867 = vadd.f32 0.0, %v1866
        %1868 = vmatmul.f32.gmra.mxu0 %v951
        %v1869 = vpop.f32.mrf.mxu0
        %v1870 = vadd.f32 0.0, %v1869
        %1871 = vmatmul.f32.gmra.mxu0 %v950
        %v1872 = vpop.f32.mrf.mxu0
        %v1873 = vadd.f32 0.0, %v1872
        %1874 = vmatmul.f32.gmra.mxu0 %v949
        %v1875 = vpop.f32.mrf.mxu0
        %v1876 = vadd.f32 0.0, %v1875
        %1877 = vmatmul.f32.gmra.mxu0 %v948
        %v1878 = vpop.f32.mrf.mxu0
        %v1879 = vadd.f32 0.0, %v1878
        %1880 = vmatmul.f32.gmra.mxu0 %v947
        %v1881 = vpop.f32.mrf.mxu0
        %v1882 = vadd.f32 0.0, %v1881
        %1883 = vmatmul.f32.gmra.mxu0 %v946
        %v1884 = vpop.f32.mrf.mxu0
        %v1885 = vadd.f32 0.0, %v1884
        %1886 = vmatmul.f32.gmra.mxu0 %v945
        %v1887 = vpop.f32.mrf.mxu0
        %v1888 = vadd.f32 0.0, %v1887
        %1889 = vmatmul.f32.gmra.mxu0 %v944
        %v1890 = vpop.f32.mrf.mxu0
        %v1891 = vadd.f32 0.0, %v1890
        %1892 = vmatmul.f32.gmra.mxu0 %v943
        %v1893 = vpop.f32.mrf.mxu0
        %v1894 = vadd.f32 0.0, %v1893
        %1895 = vmatmul.f32.gmra.mxu0 %v942
        %v1896 = vpop.f32.mrf.mxu0
        %v1897 = vadd.f32 0.0, %v1896
        %1898 = vmatmul.f32.gmra.mxu0 %v941
        %v1899 = vpop.f32.mrf.mxu0
        %v1900 = vadd.f32 0.0, %v1899
        %1901 = vmatmul.f32.gmra.mxu0 %v940
        %v1902 = vpop.f32.mrf.mxu0
        %v1903 = vadd.f32 0.0, %v1902
        %1904 = vmatmul.f32.gmra.mxu0 %v939
        %v1905 = vpop.f32.mrf.mxu0
        %v1906 = vadd.f32 0.0, %v1905
        %1907 = vmatmul.f32.gmra.mxu0 %v938
        %v1908 = vpop.f32.mrf.mxu0
        %v1909 = vadd.f32 0.0, %v1908
        %1910 = vmatmul.f32.gmra.mxu0 %v937
        %v1911 = vpop.f32.mrf.mxu0
        %v1912 = vadd.f32 0.0, %v1911
        %1913 = vmatmul.f32.gmra.mxu0 %v936
        %v1914 = vpop.f32.mrf.mxu0
        %v1915 = vadd.f32 0.0, %v1914
        %1916 = vmatmul.f32.gmra.mxu0 %v935
        %v1917 = vpop.f32.mrf.mxu0
        %v1918 = vadd.f32 0.0, %v1917
        %1919 = vmatmul.f32.gmra.mxu0 %v934
        %v1920 = vpop.f32.mrf.mxu0
        %v1921 = vadd.f32 0.0, %v1920
        %1922 = vmatmul.f32.gmra.mxu0 %v933
        %v1923 = vpop.f32.mrf.mxu0
        %v1924 = vadd.f32 0.0, %v1923
        %1925 = vmatmul.f32.gmra.mxu0 %v932
        %v1926 = vpop.f32.mrf.mxu0
        %v1927 = vadd.f32 0.0, %v1926
        %1928 = vmatmul.f32.gmra.mxu0 %v985
        %v1929 = vpop.f32.mrf.mxu0
        %v1930 = vadd.f32 0.0, %v1929
        %1931 = vdwg.mxu0
        %v1932 = vadd.f32 %v1682, %v1771
        %v1933 = vadd.f32 %v1683, %v1774
        %v1934 = vadd.f32 %v1684, %v1777
        %v1935 = vadd.f32 %v1685, %v1780
        %v1936 = vadd.f32 %v1686, %v1783
        %v1937 = vadd.f32 %v1687, %v1786
        %v1938 = vadd.f32 %v1688, %v1789
        %v1939 = vadd.f32 %v1689, %v1792
        %v1940 = vadd.f32 %v1690, %v1795
        %v1941 = vadd.f32 %v1691, %v1798
        %v1942 = vadd.f32 %v1692, %v1801
        %v1943 = vadd.f32 %v1693, %v1804
        %v1944 = vadd.f32 %v1694, %v1807
        %v1945 = vadd.f32 %v1695, %v1810
        %v1946 = vadd.f32 %v1696, %v1813
        %v1947 = vadd.f32 %v1697, %v1816
        %v1948 = vadd.f32 %v1698, %v1819
        %v1949 = vadd.f32 %v1699, %v1822
        %v1950 = vadd.f32 %v1700, %v1825
        %v1951 = vadd.f32 %v1701, %v1828
        %v1952 = vadd.f32 %v1702, %v1831
        %v1953 = vadd.f32 %v1703, %v1834
        %v1954 = vadd.f32 %v1704, %v1837
        %v1955 = vadd.f32 %v1705, %v1840
        %v1956 = vadd.f32 %v1706, %v1843
        %v1957 = vadd.f32 %v1707, %v1846
        %v1958 = vadd.f32 %v1708, %v1849
        %v1959 = vadd.f32 %v1709, %v1852
        %v1960 = vadd.f32 %v1710, %v1855
        %v1961 = vadd.f32 %v1711, %v1858
        %v1962 = vadd.f32 %v1712, %v1861
        %v1963 = vadd.f32 %v1713, %v1864
        %v1964 = vadd.f32 %v1714, %v1867
        %v1965 = vadd.f32 %v1715, %v1870
        %v1966 = vadd.f32 %v1716, %v1873
        %v1967 = vadd.f32 %v1717, %v1876
        %v1968 = vadd.f32 %v1718, %v1879
        %v1969 = vadd.f32 %v1719, %v1882
        %v1970 = vadd.f32 %v1720, %v1885
        %v1971 = vadd.f32 %v1721, %v1888
        %v1972 = vadd.f32 %v1722, %v1891
        %v1973 = vadd.f32 %v1723, %v1894
        %v1974 = vadd.f32 %v1724, %v1897
        %v1975 = vadd.f32 %v1725, %v1900
        %v1976 = vadd.f32 %v1726, %v1903
        %v1977 = vadd.f32 %v1727, %v1906
        %v1978 = vadd.f32 %v1728, %v1909
        %v1979 = vadd.f32 %v1729, %v1912
        %v1980 = vadd.f32 %v1730, %v1915
        %v1981 = vadd.f32 %v1731, %v1918
        %v1982 = vadd.f32 %v1732, %v1921
        %v1983 = vadd.f32 %v1733, %v1924
        %v1984 = vadd.f32 %v1734, %v1927
        %v1985 = vadd.f32 %v1735, %v1930
        %s1986 = scalar_lea.vmem [#allocation5], 768
        %v1987 = vld [vmem:[%s1986] sm:$0xff]
        %v1988 = vld [vmem:[%s1986 + $0x8] sm:$0xff]
        %v1989 = vld [vmem:[%s1986 + $0x10] sm:$0xff]
        %v1990 = vld [vmem:[%s1986 + $0x18] sm:$0xff]
        %v1991 = vld [vmem:[%s1986 + $0x20] sm:$0xff]
        %v1992 = vld [vmem:[%s1986 + $0x28] sm:$0xff]
        %v1993 = vld [vmem:[%s1986 + $0x30] sm:$0xff]
        %v1994 = vld [vmem:[%s1986 + $0x38] sm:$0xff]
        %v1995 = vld [vmem:[%s1986 + $0x40] sm:$0xff]
        %v1996 = vld [vmem:[%s1986 + $0x48] sm:$0xff]
        %v1997 = vld [vmem:[%s1986 + $0x50] sm:$0xff]
        %v1998 = vld [vmem:[%s1986 + $0x58] sm:$0xff]
        %v1999 = vld [vmem:[%s1986 + $0x60] sm:$0xff]
        %v2000 = vld [vmem:[%s1986 + $0x68] sm:$0xff]
        %v2001 = vld [vmem:[%s1986 + $0x70] sm:$0xff]
        %v2002 = vld [vmem:[%s1986 + $0x78] sm:$0xff]
        %2003 = vmatpush.msra.mxu0 %v2002
        %2004 = vmatpush.msra.mxu0 %v2001
        %2005 = vmatpush.msra.mxu0 %v2000
        %2006 = vmatpush.msra.mxu0 %v1999
        %2007 = vmatpush.msra.mxu0 %v1998
        %2008 = vmatpush.msra.mxu0 %v1997
        %2009 = vmatpush.msra.mxu0 %v1996
        %2010 = vmatpush.msra.mxu0 %v1995
        %2011 = vmatpush.msra.mxu0 %v1994
        %2012 = vmatpush.msra.mxu0 %v1993
        %2013 = vmatpush.msra.mxu0 %v1992
        %2014 = vmatpush.msra.mxu0 %v1991
        %2015 = vmatpush.msra.mxu0 %v1990
        %2016 = vmatpush.msra.mxu0 %v1989
        %2017 = vmatpush.msra.mxu0 %v1988
        %2018 = vmatpush.msra.mxu0 %v1987
        %2019 = vmatmul.f32.gmra.mxu0 %v482
        %v2020 = vpop.f32.mrf.mxu0
        %v2021 = vadd.f32 0.0, %v2020
        %2022 = vmatmul.f32.gmra.mxu0 %v481
        %v2023 = vpop.f32.mrf.mxu0
        %v2024 = vadd.f32 0.0, %v2023
        %2025 = vmatmul.f32.gmra.mxu0 %v480
        %v2026 = vpop.f32.mrf.mxu0
        %v2027 = vadd.f32 0.0, %v2026
        %2028 = vmatmul.f32.gmra.mxu0 %v479
        %v2029 = vpop.f32.mrf.mxu0
        %v2030 = vadd.f32 0.0, %v2029
        %2031 = vmatmul.f32.gmra.mxu0 %v478
        %v2032 = vpop.f32.mrf.mxu0
        %v2033 = vadd.f32 0.0, %v2032
        %2034 = vmatmul.f32.gmra.mxu0 %v477
        %v2035 = vpop.f32.mrf.mxu0
        %v2036 = vadd.f32 0.0, %v2035
        %2037 = vmatmul.f32.gmra.mxu0 %v476
        %v2038 = vpop.f32.mrf.mxu0
        %v2039 = vadd.f32 0.0, %v2038
        %2040 = vmatmul.f32.gmra.mxu0 %v475
        %v2041 = vpop.f32.mrf.mxu0
        %v2042 = vadd.f32 0.0, %v2041
        %2043 = vmatmul.f32.gmra.mxu0 %v474
        %v2044 = vpop.f32.mrf.mxu0
        %v2045 = vadd.f32 0.0, %v2044
        %2046 = vmatmul.f32.gmra.mxu0 %v473
        %v2047 = vpop.f32.mrf.mxu0
        %v2048 = vadd.f32 0.0, %v2047
        %2049 = vmatmul.f32.gmra.mxu0 %v472
        %v2050 = vpop.f32.mrf.mxu0
        %v2051 = vadd.f32 0.0, %v2050
        %2052 = vmatmul.f32.gmra.mxu0 %v471
        %v2053 = vpop.f32.mrf.mxu0
        %v2054 = vadd.f32 0.0, %v2053
        %2055 = vmatmul.f32.gmra.mxu0 %v470
        %v2056 = vpop.f32.mrf.mxu0
        %v2057 = vadd.f32 0.0, %v2056
        %2058 = vmatmul.f32.gmra.mxu0 %v469
        %v2059 = vpop.f32.mrf.mxu0
        %v2060 = vadd.f32 0.0, %v2059
        %2061 = vmatmul.f32.gmra.mxu0 %v468
        %v2062 = vpop.f32.mrf.mxu0
        %v2063 = vadd.f32 0.0, %v2062
        %2064 = vmatmul.f32.gmra.mxu0 %v467
        %v2065 = vpop.f32.mrf.mxu0
        %v2066 = vadd.f32 0.0, %v2065
        %2067 = vmatmul.f32.gmra.mxu0 %v466
        %v2068 = vpop.f32.mrf.mxu0
        %v2069 = vadd.f32 0.0, %v2068
        %2070 = vmatmul.f32.gmra.mxu0 %v465
        %v2071 = vpop.f32.mrf.mxu0
        %v2072 = vadd.f32 0.0, %v2071
        %2073 = vmatmul.f32.gmra.mxu0 %v464
        %v2074 = vpop.f32.mrf.mxu0
        %v2075 = vadd.f32 0.0, %v2074
        %2076 = vmatmul.f32.gmra.mxu0 %v463
        %v2077 = vpop.f32.mrf.mxu0
        %v2078 = vadd.f32 0.0, %v2077
        %2079 = vmatmul.f32.gmra.mxu0 %v462
        %v2080 = vpop.f32.mrf.mxu0
        %v2081 = vadd.f32 0.0, %v2080
        %2082 = vmatmul.f32.gmra.mxu0 %v461
        %v2083 = vpop.f32.mrf.mxu0
        %v2084 = vadd.f32 0.0, %v2083
        %2085 = vmatmul.f32.gmra.mxu0 %v460
        %v2086 = vpop.f32.mrf.mxu0
        %v2087 = vadd.f32 0.0, %v2086
        %2088 = vmatmul.f32.gmra.mxu0 %v459
        %v2089 = vpop.f32.mrf.mxu0
        %v2090 = vadd.f32 0.0, %v2089
        %2091 = vmatmul.f32.gmra.mxu0 %v458
        %v2092 = vpop.f32.mrf.mxu0
        %v2093 = vadd.f32 0.0, %v2092
        %2094 = vmatmul.f32.gmra.mxu0 %v457
        %v2095 = vpop.f32.mrf.mxu0
        %v2096 = vadd.f32 0.0, %v2095
        %2097 = vmatmul.f32.gmra.mxu0 %v456
        %v2098 = vpop.f32.mrf.mxu0
        %v2099 = vadd.f32 0.0, %v2098
        %2100 = vmatmul.f32.gmra.mxu0 %v455
        %v2101 = vpop.f32.mrf.mxu0
        %v2102 = vadd.f32 0.0, %v2101
        %2103 = vmatmul.f32.gmra.mxu0 %v454
        %v2104 = vpop.f32.mrf.mxu0
        %v2105 = vadd.f32 0.0, %v2104
        %2106 = vmatmul.f32.gmra.mxu0 %v453
        %v2107 = vpop.f32.mrf.mxu0
        %v2108 = vadd.f32 0.0, %v2107
        %2109 = vmatmul.f32.gmra.mxu0 %v452
        %v2110 = vpop.f32.mrf.mxu0
        %v2111 = vadd.f32 0.0, %v2110
        %2112 = vmatmul.f32.gmra.mxu0 %v451
        %v2113 = vpop.f32.mrf.mxu0
        %v2114 = vadd.f32 0.0, %v2113
        %2115 = vmatmul.f32.gmra.mxu0 %v450
        %v2116 = vpop.f32.mrf.mxu0
        %v2117 = vadd.f32 0.0, %v2116
        %2118 = vmatmul.f32.gmra.mxu0 %v449
        %v2119 = vpop.f32.mrf.mxu0
        %v2120 = vadd.f32 0.0, %v2119
        %2121 = vmatmul.f32.gmra.mxu0 %v448
        %v2122 = vpop.f32.mrf.mxu0
        %v2123 = vadd.f32 0.0, %v2122
        %2124 = vmatmul.f32.gmra.mxu0 %v447
        %v2125 = vpop.f32.mrf.mxu0
        %v2126 = vadd.f32 0.0, %v2125
        %2127 = vmatmul.f32.gmra.mxu0 %v446
        %v2128 = vpop.f32.mrf.mxu0
        %v2129 = vadd.f32 0.0, %v2128
        %2130 = vmatmul.f32.gmra.mxu0 %v445
        %v2131 = vpop.f32.mrf.mxu0
        %v2132 = vadd.f32 0.0, %v2131
        %2133 = vmatmul.f32.gmra.mxu0 %v444
        %v2134 = vpop.f32.mrf.mxu0
        %v2135 = vadd.f32 0.0, %v2134
        %2136 = vmatmul.f32.gmra.mxu0 %v443
        %v2137 = vpop.f32.mrf.mxu0
        %v2138 = vadd.f32 0.0, %v2137
        %2139 = vmatmul.f32.gmra.mxu0 %v442
        %v2140 = vpop.f32.mrf.mxu0
        %v2141 = vadd.f32 0.0, %v2140
        %2142 = vmatmul.f32.gmra.mxu0 %v441
        %v2143 = vpop.f32.mrf.mxu0
        %v2144 = vadd.f32 0.0, %v2143
        %2145 = vmatmul.f32.gmra.mxu0 %v440
        %v2146 = vpop.f32.mrf.mxu0
        %v2147 = vadd.f32 0.0, %v2146
        %2148 = vmatmul.f32.gmra.mxu0 %v439
        %v2149 = vpop.f32.mrf.mxu0
        %v2150 = vadd.f32 0.0, %v2149
        %2151 = vmatmul.f32.gmra.mxu0 %v438
        %v2152 = vpop.f32.mrf.mxu0
        %v2153 = vadd.f32 0.0, %v2152
        %2154 = vmatmul.f32.gmra.mxu0 %v437
        %v2155 = vpop.f32.mrf.mxu0
        %v2156 = vadd.f32 0.0, %v2155
        %2157 = vmatmul.f32.gmra.mxu0 %v436
        %v2158 = vpop.f32.mrf.mxu0
        %v2159 = vadd.f32 0.0, %v2158
        %2160 = vmatmul.f32.gmra.mxu0 %v435
        %v2161 = vpop.f32.mrf.mxu0
        %v2162 = vadd.f32 0.0, %v2161
        %2163 = vmatmul.f32.gmra.mxu0 %v434
        %v2164 = vpop.f32.mrf.mxu0
        %v2165 = vadd.f32 0.0, %v2164
        %2166 = vmatmul.f32.gmra.mxu0 %v433
        %v2167 = vpop.f32.mrf.mxu0
        %v2168 = vadd.f32 0.0, %v2167
        %2169 = vmatmul.f32.gmra.mxu0 %v432
        %v2170 = vpop.f32.mrf.mxu0
        %v2171 = vadd.f32 0.0, %v2170
        %2172 = vmatmul.f32.gmra.mxu0 %v485
        %v2173 = vpop.f32.mrf.mxu0
        %v2174 = vadd.f32 0.0, %v2173
        %2175 = vmatmul.f32.gmra.mxu0 %v484
        %v2176 = vpop.f32.mrf.mxu0
        %v2177 = vadd.f32 0.0, %v2176
        %2178 = vmatmul.f32.gmra.mxu0 %v483
        %v2179 = vpop.f32.mrf.mxu0
        %v2180 = vadd.f32 0.0, %v2179
        %2181 = vdwg.mxu0
        %v2182 = vadd.f32 %v1932, %v2021
        %v2183 = vadd.f32 %v1933, %v2024
        %v2184 = vadd.f32 %v1934, %v2027
        %v2185 = vadd.f32 %v1935, %v2030
        %v2186 = vadd.f32 %v1936, %v2033
        %v2187 = vadd.f32 %v1937, %v2036
        %v2188 = vadd.f32 %v1938, %v2039
        %v2189 = vadd.f32 %v1939, %v2042
        %v2190 = vadd.f32 %v1940, %v2045
        %v2191 = vadd.f32 %v1941, %v2048
        %v2192 = vadd.f32 %v1942, %v2051
        %v2193 = vadd.f32 %v1943, %v2054
        %v2194 = vadd.f32 %v1944, %v2057
        %v2195 = vadd.f32 %v1945, %v2060
        %v2196 = vadd.f32 %v1946, %v2063
        %v2197 = vadd.f32 %v1947, %v2066
        %v2198 = vadd.f32 %v1948, %v2069
        %v2199 = vadd.f32 %v1949, %v2072
        %v2200 = vadd.f32 %v1950, %v2075
        %v2201 = vadd.f32 %v1951, %v2078
        %v2202 = vadd.f32 %v1952, %v2081
        %v2203 = vadd.f32 %v1953, %v2084
        %v2204 = vadd.f32 %v1954, %v2087
        %v2205 = vadd.f32 %v1955, %v2090
        %v2206 = vadd.f32 %v1956, %v2093
        %v2207 = vadd.f32 %v1957, %v2096
        %v2208 = vadd.f32 %v1958, %v2099
        %v2209 = vadd.f32 %v1959, %v2102
        %v2210 = vadd.f32 %v1960, %v2105
        %v2211 = vadd.f32 %v1961, %v2108
        %v2212 = vadd.f32 %v1962, %v2111
        %v2213 = vadd.f32 %v1963, %v2114
        %v2214 = vadd.f32 %v1964, %v2117
        %v2215 = vadd.f32 %v1965, %v2120
        %v2216 = vadd.f32 %v1966, %v2123
        %v2217 = vadd.f32 %v1967, %v2126
        %v2218 = vadd.f32 %v1968, %v2129
        %v2219 = vadd.f32 %v1969, %v2132
        %v2220 = vadd.f32 %v1970, %v2135
        %v2221 = vadd.f32 %v1971, %v2138
        %v2222 = vadd.f32 %v1972, %v2141
        %v2223 = vadd.f32 %v1973, %v2144
        %v2224 = vadd.f32 %v1974, %v2147
        %v2225 = vadd.f32 %v1975, %v2150
        %v2226 = vadd.f32 %v1976, %v2153
        %v2227 = vadd.f32 %v1977, %v2156
        %v2228 = vadd.f32 %v1978, %v2159
        %v2229 = vadd.f32 %v1979, %v2162
        %v2230 = vadd.f32 %v1980, %v2165
        %v2231 = vadd.f32 %v1981, %v2168
        %v2232 = vadd.f32 %v1982, %v2171
        %v2233 = vadd.f32 %v1983, %v2174
        %v2234 = vadd.f32 %v1984, %v2177
        %v2235 = vadd.f32 %v1985, %v2180
        %s2236 = scalar_lea.vmem [#allocation5], 896
        %v2237 = vld [vmem:[%s2236] sm:$0xff]
        %v2238 = vld [vmem:[%s2236 + $0x8] sm:$0xff]
        %v2239 = vld [vmem:[%s2236 + $0x10] sm:$0xff]
        %v2240 = vld [vmem:[%s2236 + $0x18] sm:$0xff]
        %v2241 = vld [vmem:[%s2236 + $0x20] sm:$0xff]
        %v2242 = vld [vmem:[%s2236 + $0x28] sm:$0xff]
        %v2243 = vld [vmem:[%s2236 + $0x30] sm:$0xff]
        %v2244 = vld [vmem:[%s2236 + $0x38] sm:$0xff]
        %v2245 = vld [vmem:[%s2236 + $0x40] sm:$0xff]
        %v2246 = vld [vmem:[%s2236 + $0x48] sm:$0xff]
        %v2247 = vld [vmem:[%s2236 + $0x50] sm:$0xff]
        %v2248 = vld [vmem:[%s2236 + $0x58] sm:$0xff]
        %v2249 = vld [vmem:[%s2236 + $0x60] sm:$0xff]
        %v2250 = vld [vmem:[%s2236 + $0x68] sm:$0xff]
        %v2251 = vld [vmem:[%s2236 + $0x70] sm:$0xff]
        %v2252 = vld [vmem:[%s2236 + $0x78] sm:$0xff]
        %2253 = vmatpush.msra.mxu0 %v2252
        %2254 = vmatpush.msra.mxu0 %v2251
        %2255 = vmatpush.msra.mxu0 %v2250
        %2256 = vmatpush.msra.mxu0 %v2249
        %2257 = vmatpush.msra.mxu0 %v2248
        %2258 = vmatpush.msra.mxu0 %v2247
        %2259 = vmatpush.msra.mxu0 %v2246
        %2260 = vmatpush.msra.mxu0 %v2245
        %2261 = vmatpush.msra.mxu0 %v2244
        %2262 = vmatpush.msra.mxu0 %v2243
        %2263 = vmatpush.msra.mxu0 %v2242
        %2264 = vmatpush.msra.mxu0 %v2241
        %2265 = vmatpush.msra.mxu0 %v2240
        %2266 = vmatpush.msra.mxu0 %v2239
        %2267 = vmatpush.msra.mxu0 %v2238
        %2268 = vmatpush.msra.mxu0 %v2237
        %2269 = vmatmul.f32.gmra.mxu0 %v324
        %v2270 = vpop.f32.mrf.mxu0
        %v2271 = vadd.f32 0.0, %v2270
        %2272 = vmatmul.f32.gmra.mxu0 %v325
        %v2273 = vpop.f32.mrf.mxu0
        %v2274 = vadd.f32 0.0, %v2273
        %2275 = vmatmul.f32.gmra.mxu0 %v326
        %v2276 = vpop.f32.mrf.mxu0
        %v2277 = vadd.f32 0.0, %v2276
        %2278 = vmatmul.f32.gmra.mxu0 %v327
        %v2279 = vpop.f32.mrf.mxu0
        %v2280 = vadd.f32 0.0, %v2279
        %2281 = vmatmul.f32.gmra.mxu0 %v328
        %v2282 = vpop.f32.mrf.mxu0
        %v2283 = vadd.f32 0.0, %v2282
        %2284 = vmatmul.f32.gmra.mxu0 %v329
        %v2285 = vpop.f32.mrf.mxu0
        %v2286 = vadd.f32 0.0, %v2285
        %2287 = vmatmul.f32.gmra.mxu0 %v330
        %v2288 = vpop.f32.mrf.mxu0
        %v2289 = vadd.f32 0.0, %v2288
        %2290 = vmatmul.f32.gmra.mxu0 %v331
        %v2291 = vpop.f32.mrf.mxu0
        %v2292 = vadd.f32 0.0, %v2291
        %2293 = vmatmul.f32.gmra.mxu0 %v332
        %v2294 = vpop.f32.mrf.mxu0
        %v2295 = vadd.f32 0.0, %v2294
        %2296 = vmatmul.f32.gmra.mxu0 %v333
        %v2297 = vpop.f32.mrf.mxu0
        %v2298 = vadd.f32 0.0, %v2297
        %2299 = vmatmul.f32.gmra.mxu0 %v334
        %v2300 = vpop.f32.mrf.mxu0
        %v2301 = vadd.f32 0.0, %v2300
        %2302 = vmatmul.f32.gmra.mxu0 %v335
        %v2303 = vpop.f32.mrf.mxu0
        %v2304 = vadd.f32 0.0, %v2303
        %2305 = vmatmul.f32.gmra.mxu0 %v336
        %v2306 = vpop.f32.mrf.mxu0
        %v2307 = vadd.f32 0.0, %v2306
        %2308 = vmatmul.f32.gmra.mxu0 %v337
        %v2309 = vpop.f32.mrf.mxu0
        %v2310 = vadd.f32 0.0, %v2309
        %2311 = vmatmul.f32.gmra.mxu0 %v338
        %v2312 = vpop.f32.mrf.mxu0
        %v2313 = vadd.f32 0.0, %v2312
        %2314 = vmatmul.f32.gmra.mxu0 %v339
        %v2315 = vpop.f32.mrf.mxu0
        %v2316 = vadd.f32 0.0, %v2315
        %2317 = vmatmul.f32.gmra.mxu0 %v340
        %v2318 = vpop.f32.mrf.mxu0
        %v2319 = vadd.f32 0.0, %v2318
        %2320 = vmatmul.f32.gmra.mxu0 %v341
        %v2321 = vpop.f32.mrf.mxu0
        %v2322 = vadd.f32 0.0, %v2321
        %2323 = vmatmul.f32.gmra.mxu0 %v342
        %v2324 = vpop.f32.mrf.mxu0
        %v2325 = vadd.f32 0.0, %v2324
        %2326 = vmatmul.f32.gmra.mxu0 %v343
        %v2327 = vpop.f32.mrf.mxu0
        %v2328 = vadd.f32 0.0, %v2327
        %2329 = vmatmul.f32.gmra.mxu0 %v344
        %v2330 = vpop.f32.mrf.mxu0
        %v2331 = vadd.f32 0.0, %v2330
        %2332 = vmatmul.f32.gmra.mxu0 %v345
        %v2333 = vpop.f32.mrf.mxu0
        %v2334 = vadd.f32 0.0, %v2333
        %2335 = vmatmul.f32.gmra.mxu0 %v346
        %v2336 = vpop.f32.mrf.mxu0
        %v2337 = vadd.f32 0.0, %v2336
        %2338 = vmatmul.f32.gmra.mxu0 %v347
        %v2339 = vpop.f32.mrf.mxu0
        %v2340 = vadd.f32 0.0, %v2339
        %2341 = vmatmul.f32.gmra.mxu0 %v348
        %v2342 = vpop.f32.mrf.mxu0
        %v2343 = vadd.f32 0.0, %v2342
        %2344 = vmatmul.f32.gmra.mxu0 %v349
        %v2345 = vpop.f32.mrf.mxu0
        %v2346 = vadd.f32 0.0, %v2345
        %2347 = vmatmul.f32.gmra.mxu0 %v350
        %v2348 = vpop.f32.mrf.mxu0
        %v2349 = vadd.f32 0.0, %v2348
        %2350 = vmatmul.f32.gmra.mxu0 %v351
        %v2351 = vpop.f32.mrf.mxu0
        %v2352 = vadd.f32 0.0, %v2351
        %2353 = vmatmul.f32.gmra.mxu0 %v352
        %v2354 = vpop.f32.mrf.mxu0
        %v2355 = vadd.f32 0.0, %v2354
        %2356 = vmatmul.f32.gmra.mxu0 %v353
        %v2357 = vpop.f32.mrf.mxu0
        %v2358 = vadd.f32 0.0, %v2357
        %2359 = vmatmul.f32.gmra.mxu0 %v354
        %v2360 = vpop.f32.mrf.mxu0
        %v2361 = vadd.f32 0.0, %v2360
        %2362 = vmatmul.f32.gmra.mxu0 %v355
        %v2363 = vpop.f32.mrf.mxu0
        %v2364 = vadd.f32 0.0, %v2363
        %2365 = vmatmul.f32.gmra.mxu0 %v356
        %v2366 = vpop.f32.mrf.mxu0
        %v2367 = vadd.f32 0.0, %v2366
        %2368 = vmatmul.f32.gmra.mxu0 %v357
        %v2369 = vpop.f32.mrf.mxu0
        %v2370 = vadd.f32 0.0, %v2369
        %2371 = vmatmul.f32.gmra.mxu0 %v358
        %v2372 = vpop.f32.mrf.mxu0
        %v2373 = vadd.f32 0.0, %v2372
        %2374 = vmatmul.f32.gmra.mxu0 %v359
        %v2375 = vpop.f32.mrf.mxu0
        %v2376 = vadd.f32 0.0, %v2375
        %2377 = vmatmul.f32.gmra.mxu0 %v360
        %v2378 = vpop.f32.mrf.mxu0
        %v2379 = vadd.f32 0.0, %v2378
        %2380 = vmatmul.f32.gmra.mxu0 %v361
        %v2381 = vpop.f32.mrf.mxu0
        %v2382 = vadd.f32 0.0, %v2381
        %2383 = vmatmul.f32.gmra.mxu0 %v362
        %v2384 = vpop.f32.mrf.mxu0
        %v2385 = vadd.f32 0.0, %v2384
        %2386 = vmatmul.f32.gmra.mxu0 %v363
        %v2387 = vpop.f32.mrf.mxu0
        %v2388 = vadd.f32 0.0, %v2387
        %2389 = vmatmul.f32.gmra.mxu0 %v364
        %v2390 = vpop.f32.mrf.mxu0
        %v2391 = vadd.f32 0.0, %v2390
        %2392 = vmatmul.f32.gmra.mxu0 %v365
        %v2393 = vpop.f32.mrf.mxu0
        %v2394 = vadd.f32 0.0, %v2393
        %2395 = vmatmul.f32.gmra.mxu0 %v366
        %v2396 = vpop.f32.mrf.mxu0
        %v2397 = vadd.f32 0.0, %v2396
        %2398 = vmatmul.f32.gmra.mxu0 %v367
        %v2399 = vpop.f32.mrf.mxu0
        %v2400 = vadd.f32 0.0, %v2399
        %2401 = vmatmul.f32.gmra.mxu0 %v368
        %v2402 = vpop.f32.mrf.mxu0
        %v2403 = vadd.f32 0.0, %v2402
        %2404 = vmatmul.f32.gmra.mxu0 %v369
        %v2405 = vpop.f32.mrf.mxu0
        %v2406 = vadd.f32 0.0, %v2405
        %2407 = vmatmul.f32.gmra.mxu0 %v370
        %v2408 = vpop.f32.mrf.mxu0
        %v2409 = vadd.f32 0.0, %v2408
        %2410 = vmatmul.f32.gmra.mxu0 %v371
        %v2411 = vpop.f32.mrf.mxu0
        %v2412 = vadd.f32 0.0, %v2411
        %2413 = vmatmul.f32.gmra.mxu0 %v372
        %v2414 = vpop.f32.mrf.mxu0
        %v2415 = vadd.f32 0.0, %v2414
        %2416 = vmatmul.f32.gmra.mxu0 %v373
        %v2417 = vpop.f32.mrf.mxu0
        %v2418 = vadd.f32 0.0, %v2417
        %2419 = vmatmul.f32.gmra.mxu0 %v374
        %v2420 = vpop.f32.mrf.mxu0
        %v2421 = vadd.f32 0.0, %v2420
        %2422 = vmatmul.f32.gmra.mxu0 %v321
        %v2423 = vpop.f32.mrf.mxu0
        %v2424 = vadd.f32 0.0, %v2423
        %2425 = vmatmul.f32.gmra.mxu0 %v322
        %v2426 = vpop.f32.mrf.mxu0
        %v2427 = vadd.f32 0.0, %v2426
        %2428 = vmatmul.f32.gmra.mxu0 %v323
        %v2429 = vpop.f32.mrf.mxu0
        %v2430 = vadd.f32 0.0, %v2429
        %2431 = vdwg.mxu0
        %v2432 = vadd.f32 %v2182, %v2271
        %v2433 = vadd.f32 %v2183, %v2274
        %v2434 = vadd.f32 %v2184, %v2277
        %v2435 = vadd.f32 %v2185, %v2280
        %v2436 = vadd.f32 %v2186, %v2283
        %v2437 = vadd.f32 %v2187, %v2286
        %v2438 = vadd.f32 %v2188, %v2289
        %v2439 = vadd.f32 %v2189, %v2292
        %v2440 = vadd.f32 %v2190, %v2295
        %v2441 = vadd.f32 %v2191, %v2298
        %v2442 = vadd.f32 %v2192, %v2301
        %v2443 = vadd.f32 %v2193, %v2304
        %v2444 = vadd.f32 %v2194, %v2307
        %v2445 = vadd.f32 %v2195, %v2310
        %v2446 = vadd.f32 %v2196, %v2313
        %v2447 = vadd.f32 %v2197, %v2316
        %v2448 = vadd.f32 %v2198, %v2319
        %v2449 = vadd.f32 %v2199, %v2322
        %v2450 = vadd.f32 %v2200, %v2325
        %v2451 = vadd.f32 %v2201, %v2328
        %v2452 = vadd.f32 %v2202, %v2331
        %v2453 = vadd.f32 %v2203, %v2334
        %v2454 = vadd.f32 %v2204, %v2337
        %v2455 = vadd.f32 %v2205, %v2340
        %v2456 = vadd.f32 %v2206, %v2343
        %v2457 = vadd.f32 %v2207, %v2346
        %v2458 = vadd.f32 %v2208, %v2349
        %v2459 = vadd.f32 %v2209, %v2352
        %v2460 = vadd.f32 %v2210, %v2355
        %v2461 = vadd.f32 %v2211, %v2358
        %v2462 = vadd.f32 %v2212, %v2361
        %v2463 = vadd.f32 %v2213, %v2364
        %v2464 = vadd.f32 %v2214, %v2367
        %v2465 = vadd.f32 %v2215, %v2370
        %v2466 = vadd.f32 %v2216, %v2373
        %v2467 = vadd.f32 %v2217, %v2376
        %v2468 = vadd.f32 %v2218, %v2379
        %v2469 = vadd.f32 %v2219, %v2382
        %v2470 = vadd.f32 %v2220, %v2385
        %v2471 = vadd.f32 %v2221, %v2388
        %v2472 = vadd.f32 %v2222, %v2391
        %v2473 = vadd.f32 %v2223, %v2394
        %v2474 = vadd.f32 %v2224, %v2397
        %v2475 = vadd.f32 %v2225, %v2400
        %v2476 = vadd.f32 %v2226, %v2403
        %v2477 = vadd.f32 %v2227, %v2406
        %v2478 = vadd.f32 %v2228, %v2409
        %v2479 = vadd.f32 %v2229, %v2412
        %v2480 = vadd.f32 %v2230, %v2415
        %v2481 = vadd.f32 %v2231, %v2418
        %v2482 = vadd.f32 %v2232, %v2421
        %v2483 = vadd.f32 %v2233, %v2424
        %v2484 = vadd.f32 %v2234, %v2427
        %v2485 = vadd.f32 %v2235, %v2430
        %s2486 = scalar_lea.vmem [#allocation5], 1024
        %v2487 = vld [vmem:[%s2486] sm:$0xff]
        %v2488 = vld [vmem:[%s2486 + $0x8] sm:$0xff]
        %v2489 = vld [vmem:[%s2486 + $0x10] sm:$0xff]
        %v2490 = vld [vmem:[%s2486 + $0x18] sm:$0xff]
        %v2491 = vld [vmem:[%s2486 + $0x20] sm:$0xff]
        %v2492 = vld [vmem:[%s2486 + $0x28] sm:$0xff]
        %v2493 = vld [vmem:[%s2486 + $0x30] sm:$0xff]
        %v2494 = vld [vmem:[%s2486 + $0x38] sm:$0xff]
        %v2495 = vld [vmem:[%s2486 + $0x40] sm:$0xff]
        %v2496 = vld [vmem:[%s2486 + $0x48] sm:$0xff]
        %v2497 = vld [vmem:[%s2486 + $0x50] sm:$0xff]
        %v2498 = vld [vmem:[%s2486 + $0x58] sm:$0xff]
        %v2499 = vld [vmem:[%s2486 + $0x60] sm:$0xff]
        %v2500 = vld [vmem:[%s2486 + $0x68] sm:$0xff]
        %v2501 = vld [vmem:[%s2486 + $0x70] sm:$0xff]
        %v2502 = vld [vmem:[%s2486 + $0x78] sm:$0xff]
        %2503 = vmatpush.msra.mxu0 %v2502
        %2504 = vmatpush.msra.mxu0 %v2501
        %2505 = vmatpush.msra.mxu0 %v2500
        %2506 = vmatpush.msra.mxu0 %v2499
        %2507 = vmatpush.msra.mxu0 %v2498
        %2508 = vmatpush.msra.mxu0 %v2497
        %2509 = vmatpush.msra.mxu0 %v2496
        %2510 = vmatpush.msra.mxu0 %v2495
        %2511 = vmatpush.msra.mxu0 %v2494
        %2512 = vmatpush.msra.mxu0 %v2493
        %2513 = vmatpush.msra.mxu0 %v2492
        %2514 = vmatpush.msra.mxu0 %v2491
        %2515 = vmatpush.msra.mxu0 %v2490
        %2516 = vmatpush.msra.mxu0 %v2489
        %2517 = vmatpush.msra.mxu0 %v2488
        %2518 = vmatpush.msra.mxu0 %v2487
        %2519 = vmatmul.f32.gmra.mxu0 %v981
        %v2520 = vpop.f32.mrf.mxu0
        %v2521 = vadd.f32 0.0, %v2520
        %2522 = vmatmul.f32.gmra.mxu0 %v980
        %v2523 = vpop.f32.mrf.mxu0
        %v2524 = vadd.f32 0.0, %v2523
        %2525 = vmatmul.f32.gmra.mxu0 %v979
        %v2526 = vpop.f32.mrf.mxu0
        %v2527 = vadd.f32 0.0, %v2526
        %2528 = vmatmul.f32.gmra.mxu0 %v978
        %v2529 = vpop.f32.mrf.mxu0
        %v2530 = vadd.f32 0.0, %v2529
        %2531 = vmatmul.f32.gmra.mxu0 %v977
        %v2532 = vpop.f32.mrf.mxu0
        %v2533 = vadd.f32 0.0, %v2532
        %2534 = vmatmul.f32.gmra.mxu0 %v976
        %v2535 = vpop.f32.mrf.mxu0
        %v2536 = vadd.f32 0.0, %v2535
        %2537 = vmatmul.f32.gmra.mxu0 %v975
        %v2538 = vpop.f32.mrf.mxu0
        %v2539 = vadd.f32 0.0, %v2538
        %2540 = vmatmul.f32.gmra.mxu0 %v974
        %v2541 = vpop.f32.mrf.mxu0
        %v2542 = vadd.f32 0.0, %v2541
        %2543 = vmatmul.f32.gmra.mxu0 %v973
        %v2544 = vpop.f32.mrf.mxu0
        %v2545 = vadd.f32 0.0, %v2544
        %2546 = vmatmul.f32.gmra.mxu0 %v972
        %v2547 = vpop.f32.mrf.mxu0
        %v2548 = vadd.f32 0.0, %v2547
        %2549 = vmatmul.f32.gmra.mxu0 %v971
        %v2550 = vpop.f32.mrf.mxu0
        %v2551 = vadd.f32 0.0, %v2550
        %2552 = vmatmul.f32.gmra.mxu0 %v970
        %v2553 = vpop.f32.mrf.mxu0
        %v2554 = vadd.f32 0.0, %v2553
        %2555 = vmatmul.f32.gmra.mxu0 %v969
        %v2556 = vpop.f32.mrf.mxu0
        %v2557 = vadd.f32 0.0, %v2556
        %2558 = vmatmul.f32.gmra.mxu0 %v968
        %v2559 = vpop.f32.mrf.mxu0
        %v2560 = vadd.f32 0.0, %v2559
        %2561 = vmatmul.f32.gmra.mxu0 %v967
        %v2562 = vpop.f32.mrf.mxu0
        %v2563 = vadd.f32 0.0, %v2562
        %2564 = vmatmul.f32.gmra.mxu0 %v966
        %v2565 = vpop.f32.mrf.mxu0
        %v2566 = vadd.f32 0.0, %v2565
        %2567 = vmatmul.f32.gmra.mxu0 %v965
        %v2568 = vpop.f32.mrf.mxu0
        %v2569 = vadd.f32 0.0, %v2568
        %2570 = vmatmul.f32.gmra.mxu0 %v964
        %v2571 = vpop.f32.mrf.mxu0
        %v2572 = vadd.f32 0.0, %v2571
        %2573 = vmatmul.f32.gmra.mxu0 %v963
        %v2574 = vpop.f32.mrf.mxu0
        %v2575 = vadd.f32 0.0, %v2574
        %2576 = vmatmul.f32.gmra.mxu0 %v962
        %v2577 = vpop.f32.mrf.mxu0
        %v2578 = vadd.f32 0.0, %v2577
        %2579 = vmatmul.f32.gmra.mxu0 %v961
        %v2580 = vpop.f32.mrf.mxu0
        %v2581 = vadd.f32 0.0, %v2580
        %2582 = vmatmul.f32.gmra.mxu0 %v960
        %v2583 = vpop.f32.mrf.mxu0
        %v2584 = vadd.f32 0.0, %v2583
        %2585 = vmatmul.f32.gmra.mxu0 %v959
        %v2586 = vpop.f32.mrf.mxu0
        %v2587 = vadd.f32 0.0, %v2586
        %2588 = vmatmul.f32.gmra.mxu0 %v958
        %v2589 = vpop.f32.mrf.mxu0
        %v2590 = vadd.f32 0.0, %v2589
        %2591 = vmatmul.f32.gmra.mxu0 %v957
        %v2592 = vpop.f32.mrf.mxu0
        %v2593 = vadd.f32 0.0, %v2592
        %2594 = vmatmul.f32.gmra.mxu0 %v956
        %v2595 = vpop.f32.mrf.mxu0
        %v2596 = vadd.f32 0.0, %v2595
        %2597 = vmatmul.f32.gmra.mxu0 %v955
        %v2598 = vpop.f32.mrf.mxu0
        %v2599 = vadd.f32 0.0, %v2598
        %2600 = vmatmul.f32.gmra.mxu0 %v954
        %v2601 = vpop.f32.mrf.mxu0
        %v2602 = vadd.f32 0.0, %v2601
        %2603 = vmatmul.f32.gmra.mxu0 %v953
        %v2604 = vpop.f32.mrf.mxu0
        %v2605 = vadd.f32 0.0, %v2604
        %2606 = vmatmul.f32.gmra.mxu0 %v952
        %v2607 = vpop.f32.mrf.mxu0
        %v2608 = vadd.f32 0.0, %v2607
        %2609 = vmatmul.f32.gmra.mxu0 %v951
        %v2610 = vpop.f32.mrf.mxu0
        %v2611 = vadd.f32 0.0, %v2610
        %2612 = vmatmul.f32.gmra.mxu0 %v950
        %v2613 = vpop.f32.mrf.mxu0
        %v2614 = vadd.f32 0.0, %v2613
        %2615 = vmatmul.f32.gmra.mxu0 %v949
        %v2616 = vpop.f32.mrf.mxu0
        %v2617 = vadd.f32 0.0, %v2616
        %2618 = vmatmul.f32.gmra.mxu0 %v948
        %v2619 = vpop.f32.mrf.mxu0
        %v2620 = vadd.f32 0.0, %v2619
        %2621 = vmatmul.f32.gmra.mxu0 %v947
        %v2622 = vpop.f32.mrf.mxu0
        %v2623 = vadd.f32 0.0, %v2622
        %2624 = vmatmul.f32.gmra.mxu0 %v946
        %v2625 = vpop.f32.mrf.mxu0
        %v2626 = vadd.f32 0.0, %v2625
        %2627 = vmatmul.f32.gmra.mxu0 %v945
        %v2628 = vpop.f32.mrf.mxu0
        %v2629 = vadd.f32 0.0, %v2628
        %2630 = vmatmul.f32.gmra.mxu0 %v944
        %v2631 = vpop.f32.mrf.mxu0
        %v2632 = vadd.f32 0.0, %v2631
        %2633 = vmatmul.f32.gmra.mxu0 %v943
        %v2634 = vpop.f32.mrf.mxu0
        %v2635 = vadd.f32 0.0, %v2634
        %2636 = vmatmul.f32.gmra.mxu0 %v942
        %v2637 = vpop.f32.mrf.mxu0
        %v2638 = vadd.f32 0.0, %v2637
        %2639 = vmatmul.f32.gmra.mxu0 %v941
        %v2640 = vpop.f32.mrf.mxu0
        %v2641 = vadd.f32 0.0, %v2640
        %2642 = vmatmul.f32.gmra.mxu0 %v940
        %v2643 = vpop.f32.mrf.mxu0
        %v2644 = vadd.f32 0.0, %v2643
        %2645 = vmatmul.f32.gmra.mxu0 %v939
        %v2646 = vpop.f32.mrf.mxu0
        %v2647 = vadd.f32 0.0, %v2646
        %2648 = vmatmul.f32.gmra.mxu0 %v938
        %v2649 = vpop.f32.mrf.mxu0
        %v2650 = vadd.f32 0.0, %v2649
        %2651 = vmatmul.f32.gmra.mxu0 %v937
        %v2652 = vpop.f32.mrf.mxu0
        %v2653 = vadd.f32 0.0, %v2652
        %2654 = vmatmul.f32.gmra.mxu0 %v936
        %v2655 = vpop.f32.mrf.mxu0
        %v2656 = vadd.f32 0.0, %v2655
        %2657 = vmatmul.f32.gmra.mxu0 %v935
        %v2658 = vpop.f32.mrf.mxu0
        %v2659 = vadd.f32 0.0, %v2658
        %2660 = vmatmul.f32.gmra.mxu0 %v934
        %v2661 = vpop.f32.mrf.mxu0
        %v2662 = vadd.f32 0.0, %v2661
        %2663 = vmatmul.f32.gmra.mxu0 %v933
        %v2664 = vpop.f32.mrf.mxu0
        %v2665 = vadd.f32 0.0, %v2664
        %2666 = vmatmul.f32.gmra.mxu0 %v932
        %v2667 = vpop.f32.mrf.mxu0
        %v2668 = vadd.f32 0.0, %v2667
        %2669 = vmatmul.f32.gmra.mxu0 %v985
        %v2670 = vpop.f32.mrf.mxu0
        %v2671 = vadd.f32 0.0, %v2670
        %2672 = vmatmul.f32.gmra.mxu0 %v984
        %v2673 = vpop.f32.mrf.mxu0
        %v2674 = vadd.f32 0.0, %v2673
        %2675 = vmatmul.f32.gmra.mxu0 %v983
        %v2676 = vpop.f32.mrf.mxu0
        %v2677 = vadd.f32 0.0, %v2676
        %2678 = vmatmul.f32.gmra.mxu0 %v982
        %v2679 = vpop.f32.mrf.mxu0
        %v2680 = vadd.f32 0.0, %v2679
        %2681 = vdwg.mxu0
        %v2682 = vadd.f32 %v2432, %v2521
        %v2683 = vadd.f32 %v2433, %v2524
        %v2684 = vadd.f32 %v2434, %v2527
        %v2685 = vadd.f32 %v2435, %v2530
        %v2686 = vadd.f32 %v2436, %v2533
        %v2687 = vadd.f32 %v2437, %v2536
        %v2688 = vadd.f32 %v2438, %v2539
        %v2689 = vadd.f32 %v2439, %v2542
        %v2690 = vadd.f32 %v2440, %v2545
        %v2691 = vadd.f32 %v2441, %v2548
        %v2692 = vadd.f32 %v2442, %v2551
        %v2693 = vadd.f32 %v2443, %v2554
        %v2694 = vadd.f32 %v2444, %v2557
        %v2695 = vadd.f32 %v2445, %v2560
        %v2696 = vadd.f32 %v2446, %v2563
        %v2697 = vadd.f32 %v2447, %v2566
        %v2698 = vadd.f32 %v2448, %v2569
        %v2699 = vadd.f32 %v2449, %v2572
        %v2700 = vadd.f32 %v2450, %v2575
        %v2701 = vadd.f32 %v2451, %v2578
        %v2702 = vadd.f32 %v2452, %v2581
        %v2703 = vadd.f32 %v2453, %v2584
        %v2704 = vadd.f32 %v2454, %v2587
        %v2705 = vadd.f32 %v2455, %v2590
        %v2706 = vadd.f32 %v2456, %v2593
        %v2707 = vadd.f32 %v2457, %v2596
        %v2708 = vadd.f32 %v2458, %v2599
        %v2709 = vadd.f32 %v2459, %v2602
        %v2710 = vadd.f32 %v2460, %v2605
        %v2711 = vadd.f32 %v2461, %v2608
        %v2712 = vadd.f32 %v2462, %v2611
        %v2713 = vadd.f32 %v2463, %v2614
        %v2714 = vadd.f32 %v2464, %v2617
        %v2715 = vadd.f32 %v2465, %v2620
        %v2716 = vadd.f32 %v2466, %v2623
        %v2717 = vadd.f32 %v2467, %v2626
        %v2718 = vadd.f32 %v2468, %v2629
        %v2719 = vadd.f32 %v2469, %v2632
        %v2720 = vadd.f32 %v2470, %v2635
        %v2721 = vadd.f32 %v2471, %v2638
        %v2722 = vadd.f32 %v2472, %v2641
        %v2723 = vadd.f32 %v2473, %v2644
        %v2724 = vadd.f32 %v2474, %v2647
        %v2725 = vadd.f32 %v2475, %v2650
        %v2726 = vadd.f32 %v2476, %v2653
        %v2727 = vadd.f32 %v2477, %v2656
        %v2728 = vadd.f32 %v2478, %v2659
        %v2729 = vadd.f32 %v2479, %v2662
        %v2730 = vadd.f32 %v2480, %v2665
        %v2731 = vadd.f32 %v2481, %v2668
        %v2732 = vadd.f32 %v2482, %v2671
        %v2733 = vadd.f32 %v2483, %v2674
        %v2734 = vadd.f32 %v2484, %v2677
        %v2735 = vadd.f32 %v2485, %v2680
        %v2736 = vld [vmem:[%s2] sm:$0x1]
        %v2738 = vperm.slane %v2736, 0
        %v2740 = vadd.f32 %v2682, %v2738
        %v2741 = vadd.f32 %v2683, %v2738
        %v2742 = vadd.f32 %v2684, %v2738
        %v2743 = vadd.f32 %v2685, %v2738
        %v2744 = vadd.f32 %v2686, %v2738
        %v2745 = vadd.f32 %v2687, %v2738
        %v2746 = vadd.f32 %v2688, %v2738
        %v2747 = vadd.f32 %v2689, %v2738
        %v2748 = vadd.f32 %v2690, %v2738
        %v2749 = vadd.f32 %v2691, %v2738
        %v2750 = vadd.f32 %v2692, %v2738
        %v2751 = vadd.f32 %v2693, %v2738
        %v2752 = vadd.f32 %v2694, %v2738
        %v2753 = vadd.f32 %v2695, %v2738
        %v2754 = vadd.f32 %v2696, %v2738
        %v2755 = vadd.f32 %v2697, %v2738
        %v2756 = vadd.f32 %v2698, %v2738
        %v2757 = vadd.f32 %v2699, %v2738
        %v2758 = vadd.f32 %v2700, %v2738
        %v2759 = vadd.f32 %v2701, %v2738
        %v2760 = vadd.f32 %v2702, %v2738
        %v2761 = vadd.f32 %v2703, %v2738
        %v2762 = vadd.f32 %v2704, %v2738
        %v2763 = vadd.f32 %v2705, %v2738
        %v2764 = vadd.f32 %v2706, %v2738
        %v2765 = vadd.f32 %v2707, %v2738
        %v2766 = vadd.f32 %v2708, %v2738
        %v2767 = vadd.f32 %v2709, %v2738
        %v2768 = vadd.f32 %v2710, %v2738
        %v2769 = vadd.f32 %v2711, %v2738
        %v2770 = vadd.f32 %v2712, %v2738
        %v2771 = vadd.f32 %v2713, %v2738
        %v2772 = vadd.f32 %v2714, %v2738
        %v2773 = vadd.f32 %v2715, %v2738
        %v2774 = vadd.f32 %v2716, %v2738
        %v2775 = vadd.f32 %v2717, %v2738
        %v2776 = vadd.f32 %v2718, %v2738
        %v2777 = vadd.f32 %v2719, %v2738
        %v2778 = vadd.f32 %v2720, %v2738
        %v2779 = vadd.f32 %v2721, %v2738
        %v2780 = vadd.f32 %v2722, %v2738
        %v2781 = vadd.f32 %v2723, %v2738
        %v2782 = vadd.f32 %v2724, %v2738
        %v2783 = vadd.f32 %v2725, %v2738
        %v2784 = vadd.f32 %v2726, %v2738
        %v2785 = vadd.f32 %v2727, %v2738
        %v2786 = vadd.f32 %v2728, %v2738
        %v2787 = vadd.f32 %v2729, %v2738
        %v2788 = vadd.f32 %v2730, %v2738
        %v2789 = vadd.f32 %v2731, %v2738
        %v2790 = vadd.f32 %v2732, %v2738
        %v2791 = vadd.f32 %v2733, %v2738
        %v2792 = vadd.f32 %v2734, %v2738
        %v2793 = vadd.f32 %v2735, %v2738
        %v2794 = vld [vmem:[#allocation7] sm:$0xff]
        %v2795 = vld [vmem:[#allocation7 + $0x8] sm:$0xff]
        %v2796 = vld [vmem:[#allocation7 + $0x10] sm:$0xff]
        %v2797 = vld [vmem:[#allocation7 + $0x18] sm:$0xff]
        %v2798 = vld [vmem:[#allocation7 + $0x20] sm:$0xff]
        %v2799 = vld [vmem:[#allocation7 + $0x28] sm:$0xff]
        %v2800 = vld [vmem:[#allocation7 + $0x30] sm:$0xff]
        %v2801 = vld [vmem:[#allocation7 + $0x38] sm:$0xff]
        %v2802 = vld [vmem:[#allocation7 + $0x40] sm:$0xff]
        %v2803 = vld [vmem:[#allocation7 + $0x48] sm:$0xff]
        %v2804 = vld [vmem:[#allocation7 + $0x50] sm:$0xff]
        %v2805 = vld [vmem:[#allocation7 + $0x58] sm:$0xff]
        %v2806 = vld [vmem:[#allocation7 + $0x60] sm:$0xff]
        %v2807 = vld [vmem:[#allocation7 + $0x68] sm:$0xff]
        %v2808 = vld [vmem:[#allocation7 + $0x70] sm:$0xff]
        %v2809 = vld [vmem:[#allocation7 + $0x78] sm:$0xff]
        %v2810 = vld [vmem:[#allocation7 + $0x80] sm:$0xff]
        %v2811 = vld [vmem:[#allocation7 + $0x88] sm:$0xff]
        %v2812 = vld [vmem:[#allocation7 + $0x90] sm:$0xff]
        %v2813 = vld [vmem:[#allocation7 + $0x98] sm:$0xff]
        %v2814 = vld [vmem:[#allocation7 + $0xa0] sm:$0xff]
        %v2815 = vld [vmem:[#allocation7 + $0xa8] sm:$0xff]
        %v2816 = vld [vmem:[#allocation7 + $0xb0] sm:$0xff]
        %v2817 = vld [vmem:[#allocation7 + $0xb8] sm:$0xff]
        %v2818 = vld [vmem:[#allocation7 + $0xc0] sm:$0xff]
        %v2819 = vld [vmem:[#allocation7 + $0xc8] sm:$0xff]
        %v2820 = vld [vmem:[#allocation7 + $0xd0] sm:$0xff]
        %v2821 = vld [vmem:[#allocation7 + $0xd8] sm:$0xff]
        %v2822 = vld [vmem:[#allocation7 + $0xe0] sm:$0xff]
        %v2823 = vld [vmem:[#allocation7 + $0xe8] sm:$0xff]
        %v2824 = vld [vmem:[#allocation7 + $0xf0] sm:$0xff]
        %v2825 = vld [vmem:[#allocation7 + $0xf8] sm:$0xff]
        %v2826 = vld [vmem:[#allocation7 + $0x100] sm:$0xff]
        %v2827 = vld [vmem:[#allocation7 + $0x108] sm:$0xff]
        %v2828 = vld [vmem:[#allocation7 + $0x110] sm:$0xff]
        %v2829 = vld [vmem:[#allocation7 + $0x118] sm:$0xff]
        %v2830 = vld [vmem:[#allocation7 + $0x120] sm:$0xff]
        %v2831 = vld [vmem:[#allocation7 + $0x128] sm:$0xff]
        %v2832 = vld [vmem:[#allocation7 + $0x130] sm:$0xff]
        %v2833 = vld [vmem:[#allocation7 + $0x138] sm:$0xff]
        %v2834 = vld [vmem:[#allocation7 + $0x140] sm:$0xff]
        %v2835 = vld [vmem:[#allocation7 + $0x148] sm:$0xff]
        %v2836 = vld [vmem:[#allocation7 + $0x150] sm:$0xff]
        %v2837 = vld [vmem:[#allocation7 + $0x158] sm:$0xff]
        %v2838 = vld [vmem:[#allocation7 + $0x160] sm:$0xff]
        %v2839 = vld [vmem:[#allocation7 + $0x168] sm:$0xff]
        %v2840 = vld [vmem:[#allocation7 + $0x170] sm:$0xff]
        %v2841 = vld [vmem:[#allocation7 + $0x178] sm:$0xff]
        %v2842 = vld [vmem:[#allocation7 + $0x180] sm:$0xff]
        %v2843 = vld [vmem:[#allocation7 + $0x188] sm:$0xff]
        %v2844 = vld [vmem:[#allocation7 + $0x190] sm:$0xff]
        %v2845 = vld [vmem:[#allocation7 + $0x198] sm:$0xff]
        %v2846 = vld [vmem:[#allocation7 + $0x1a0] sm:$0xff]
        %v2847 = vld [vmem:[#allocation7 + $0x1a8] sm:$0xff]
        %v2848 = vmul.f32 %v2740, %v2794
        %v2849 = vmul.f32 %v2741, %v2795
        %v2850 = vmul.f32 %v2742, %v2796
        %v2851 = vmul.f32 %v2743, %v2797
        %v2852 = vmul.f32 %v2744, %v2798
        %v2853 = vmul.f32 %v2745, %v2799
        %v2854 = vmul.f32 %v2746, %v2800
        %v2855 = vmul.f32 %v2747, %v2801
        %v2856 = vmul.f32 %v2748, %v2802
        %v2857 = vmul.f32 %v2749, %v2803
        %v2858 = vmul.f32 %v2750, %v2804
        %v2859 = vmul.f32 %v2751, %v2805
        %v2860 = vmul.f32 %v2752, %v2806
        %v2861 = vmul.f32 %v2753, %v2807
        %v2862 = vmul.f32 %v2754, %v2808
        %v2863 = vmul.f32 %v2755, %v2809
        %v2864 = vmul.f32 %v2756, %v2810
        %v2865 = vmul.f32 %v2757, %v2811
        %v2866 = vmul.f32 %v2758, %v2812
        %v2867 = vmul.f32 %v2759, %v2813
        %v2868 = vmul.f32 %v2760, %v2814
        %v2869 = vmul.f32 %v2761, %v2815
        %v2870 = vmul.f32 %v2762, %v2816
        %v2871 = vmul.f32 %v2763, %v2817
        %v2872 = vmul.f32 %v2764, %v2818
        %v2873 = vmul.f32 %v2765, %v2819
        %v2874 = vmul.f32 %v2766, %v2820
        %v2875 = vmul.f32 %v2767, %v2821
        %v2876 = vmul.f32 %v2768, %v2822
        %v2877 = vmul.f32 %v2769, %v2823
        %v2878 = vmul.f32 %v2770, %v2824
        %v2879 = vmul.f32 %v2771, %v2825
        %v2880 = vmul.f32 %v2772, %v2826
        %v2881 = vmul.f32 %v2773, %v2827
        %v2882 = vmul.f32 %v2774, %v2828
        %v2883 = vmul.f32 %v2775, %v2829
        %v2884 = vmul.f32 %v2776, %v2830
        %v2885 = vmul.f32 %v2777, %v2831
        %v2886 = vmul.f32 %v2778, %v2832
        %v2887 = vmul.f32 %v2779, %v2833
        %v2888 = vmul.f32 %v2780, %v2834
        %v2889 = vmul.f32 %v2781, %v2835
        %v2890 = vmul.f32 %v2782, %v2836
        %v2891 = vmul.f32 %v2783, %v2837
        %v2892 = vmul.f32 %v2784, %v2838
        %v2893 = vmul.f32 %v2785, %v2839
        %v2894 = vmul.f32 %v2786, %v2840
        %v2895 = vmul.f32 %v2787, %v2841
        %v2896 = vmul.f32 %v2788, %v2842
        %v2897 = vmul.f32 %v2789, %v2843
        %v2898 = vmul.f32 %v2790, %v2844
        %v2899 = vmul.f32 %v2791, %v2845
        %v2900 = vmul.f32 %v2792, %v2846
        %v2901 = vmul.f32 %v2793, %v2847
        %2902 = vst [vmem:[%s308] sm:$0xff] %v2848
        %2903 = vst [vmem:[%s308 + $0x8] sm:$0xff] %v2849
        %2904 = vst [vmem:[%s308 + $0x10] sm:$0xff] %v2850
        %2905 = vst [vmem:[%s308 + $0x18] sm:$0xff] %v2851
        %2906 = vst [vmem:[%s308 + $0x20] sm:$0xff] %v2852
        %2907 = vst [vmem:[%s308 + $0x28] sm:$0xff] %v2853
        %2908 = vst [vmem:[%s308 + $0x30] sm:$0xff] %v2854
        %2909 = vst [vmem:[%s308 + $0x38] sm:$0xff] %v2855
        %2910 = vst [vmem:[%s308 + $0x40] sm:$0xff] %v2856
        %2911 = vst [vmem:[%s308 + $0x48] sm:$0xff] %v2857
        %2912 = vst [vmem:[%s308 + $0x50] sm:$0xff] %v2858
        %2913 = vst [vmem:[%s308 + $0x58] sm:$0xff] %v2859
        %2914 = vst [vmem:[%s308 + $0x60] sm:$0xff] %v2860
        %2915 = vst [vmem:[%s308 + $0x68] sm:$0xff] %v2861
        %2916 = vst [vmem:[%s308 + $0x70] sm:$0xff] %v2862
        %2917 = vst [vmem:[%s308 + $0x78] sm:$0xff] %v2863
        %2918 = vst [vmem:[%s308 + $0x80] sm:$0xff] %v2864
        %2919 = vst [vmem:[%s308 + $0x88] sm:$0xff] %v2865
        %2920 = vst [vmem:[%s308 + $0x90] sm:$0xff] %v2866
        %2921 = vst [vmem:[%s308 + $0x98] sm:$0xff] %v2867
        %2922 = vst [vmem:[%s308 + $0xa0] sm:$0xff] %v2868
        %2923 = vst [vmem:[%s308 + $0xa8] sm:$0xff] %v2869
        %2924 = vst [vmem:[%s308 + $0xb0] sm:$0xff] %v2870
        %2925 = vst [vmem:[%s308 + $0xb8] sm:$0xff] %v2871
        %2926 = vst [vmem:[%s308 + $0xc0] sm:$0xff] %v2872
        %2927 = vst [vmem:[%s308 + $0xc8] sm:$0xff] %v2873
        %2928 = vst [vmem:[%s308 + $0xd0] sm:$0xff] %v2874
        %2929 = vst [vmem:[%s308 + $0xd8] sm:$0xff] %v2875
        %2930 = vst [vmem:[%s308 + $0xe0] sm:$0xff] %v2876
        %2931 = vst [vmem:[%s308 + $0xe8] sm:$0xff] %v2877
        %2932 = vst [vmem:[%s308 + $0xf0] sm:$0xff] %v2878
        %2933 = vst [vmem:[%s308 + $0xf8] sm:$0xff] %v2879
        %2934 = vst [vmem:[%s308 + $0x100] sm:$0xff] %v2880
        %2935 = vst [vmem:[%s308 + $0x108] sm:$0xff] %v2881
        %2936 = vst [vmem:[%s308 + $0x110] sm:$0xff] %v2882
        %2937 = vst [vmem:[%s308 + $0x118] sm:$0xff] %v2883
        %2938 = vst [vmem:[%s308 + $0x120] sm:$0xff] %v2884
        %2939 = vst [vmem:[%s308 + $0x128] sm:$0xff] %v2885
        %2940 = vst [vmem:[%s308 + $0x130] sm:$0xff] %v2886
        %2941 = vst [vmem:[%s308 + $0x138] sm:$0xff] %v2887
        %2942 = vst [vmem:[%s308 + $0x140] sm:$0xff] %v2888
        %2943 = vst [vmem:[%s308 + $0x148] sm:$0xff] %v2889
        %2944 = vst [vmem:[%s308 + $0x150] sm:$0xff] %v2890
        %2945 = vst [vmem:[%s308 + $0x158] sm:$0xff] %v2891
        %2946 = vst [vmem:[%s308 + $0x160] sm:$0xff] %v2892
        %2947 = vst [vmem:[%s308 + $0x168] sm:$0xff] %v2893
        %2948 = vst [vmem:[%s308 + $0x170] sm:$0xff] %v2894
        %2949 = vst [vmem:[%s308 + $0x178] sm:$0xff] %v2895
        %2950 = vst [vmem:[%s308 + $0x180] sm:$0xff] %v2896
        %2951 = vst [vmem:[%s308 + $0x188] sm:$0xff] %v2897
        %2952 = vst [vmem:[%s308 + $0x190] sm:$0xff] %v2898
        %2953 = vst [vmem:[%s308 + $0x198] sm:$0xff] %v2899
        %2954 = vst [vmem:[%s308 + $0x1a0] sm:$0xff] %v2900
        %2955 = vst [vmem:[%s308 + $0x1a8] sm:$0xff] %v2901
        %v2956 = vadd.f32 %v2848, %v2849
        %v2957 = vadd.f32 %v2956, %v2850
        %v2958 = vadd.f32 %v2957, %v2851
        %v2959 = vadd.f32 %v2958, %v2852
        %v2960 = vadd.f32 %v2959, %v2853
        %v2961 = vadd.f32 %v2960, %v2854
        %v2962 = vadd.f32 %v2961, %v2855
        %v2963 = vadd.f32 %v2962, %v2856
        %v2964 = vadd.f32 %v2963, %v2857
        %v2965 = vadd.f32 %v2964, %v2858
        %v2966 = vadd.f32 %v2965, %v2859
        %v2967 = vadd.f32 %v2966, %v2860
        %v2968 = vadd.f32 %v2967, %v2861
        %v2969 = vadd.f32 %v2968, %v2862
        %v2970 = vadd.f32 %v2969, %v2863
        %v2971 = vadd.f32 %v2970, %v2864
        %v2972 = vadd.f32 %v2971, %v2865
        %v2973 = vadd.f32 %v2972, %v2866
        %v2974 = vadd.f32 %v2973, %v2867
        %v2975 = vadd.f32 %v2974, %v2868
        %v2976 = vadd.f32 %v2975, %v2869
        %v2977 = vadd.f32 %v2976, %v2870
        %v2978 = vadd.f32 %v2977, %v2871
        %v2979 = vadd.f32 %v2978, %v2872
        %v2980 = vadd.f32 %v2979, %v2873
        %v2981 = vadd.f32 %v2980, %v2874
        %v2982 = vadd.f32 %v2981, %v2875
        %v2983 = vadd.f32 %v2982, %v2876
        %v2984 = vadd.f32 %v2983, %v2877
        %v2985 = vadd.f32 %v2984, %v2878
        %v2986 = vadd.f32 %v2985, %v2879
        %v2987 = vadd.f32 %v2986, %v2880
        %v2988 = vadd.f32 %v2987, %v2881
        %v2989 = vadd.f32 %v2988, %v2882
        %v2990 = vadd.f32 %v2989, %v2883
        %v2991 = vadd.f32 %v2990, %v2884
        %v2992 = vadd.f32 %v2991, %v2885
        %v2993 = vadd.f32 %v2992, %v2886
        %v2994 = vadd.f32 %v2993, %v2887
        %v2995 = vadd.f32 %v2994, %v2888
        %v2996 = vadd.f32 %v2995, %v2889
        %v2997 = vadd.f32 %v2996, %v2890
        %v2998 = vadd.f32 %v2997, %v2891
        %v2999 = vadd.f32 %v2998, %v2892
        %v3000 = vadd.f32 %v2999, %v2893
        %v3001 = vadd.f32 %v3000, %v2894
        %v3002 = vadd.f32 %v3001, %v2895
        %v3003 = vadd.f32 %v3002, %v2896
        %v3004 = vadd.f32 %v3003, %v2897
        %v3005 = vadd.f32 %v3004, %v2898
        %v3006 = vadd.f32 %v3005, %v2899
        %v3007 = vadd.f32 %v3006, %v2900
        %v3008 = vadd.f32 %v3007, %v2901
        %v3009 = vrot.slane %v3008, 4
        %v3010 = vadd.f32 %v3008, %v3009
        %v3011 = vrot.slane %v3010, 2
        %v3012 = vadd.f32 %v3010, %v3011
        %v3013 = vrot.slane %v3012, 1
        %v3014 = vadd.f32 %v3012, %v3013
        %3015 = vst [vmem:[%s314] sm:$0x1] %v3014
        %v3016 = vmul.f32 %v2848, %v2848
        %v3017 = vmul.f32 %v2849, %v2849
        %v3018 = vmul.f32 %v2850, %v2850
        %v3019 = vmul.f32 %v2851, %v2851
        %v3020 = vmul.f32 %v2852, %v2852
        %v3021 = vmul.f32 %v2853, %v2853
        %v3022 = vmul.f32 %v2854, %v2854
        %v3023 = vmul.f32 %v2855, %v2855
        %v3024 = vmul.f32 %v2856, %v2856
        %v3025 = vmul.f32 %v2857, %v2857
        %v3026 = vmul.f32 %v2858, %v2858
        %v3027 = vmul.f32 %v2859, %v2859
        %v3028 = vmul.f32 %v2860, %v2860
        %v3029 = vmul.f32 %v2861, %v2861
        %v3030 = vmul.f32 %v2862, %v2862
        %v3031 = vmul.f32 %v2863, %v2863
        %v3032 = vmul.f32 %v2864, %v2864
        %v3033 = vmul.f32 %v2865, %v2865
        %v3034 = vmul.f32 %v2866, %v2866
        %v3035 = vmul.f32 %v2867, %v2867
        %v3036 = vmul.f32 %v2868, %v2868
        %v3037 = vmul.f32 %v2869, %v2869
        %v3038 = vmul.f32 %v2870, %v2870
        %v3039 = vmul.f32 %v2871, %v2871
        %v3040 = vmul.f32 %v2872, %v2872
        %v3041 = vmul.f32 %v2873, %v2873
        %v3042 = vmul.f32 %v2874, %v2874
        %v3043 = vmul.f32 %v2875, %v2875
        %v3044 = vmul.f32 %v2876, %v2876
        %v3045 = vmul.f32 %v2877, %v2877
        %v3046 = vmul.f32 %v2878, %v2878
        %v3047 = vmul.f32 %v2879, %v2879
        %v3048 = vmul.f32 %v2880, %v2880
        %v3049 = vmul.f32 %v2881, %v2881
        %v3050 = vmul.f32 %v2882, %v2882
        %v3051 = vmul.f32 %v2883, %v2883
        %v3052 = vmul.f32 %v2884, %v2884
        %v3053 = vmul.f32 %v2885, %v2885
        %v3054 = vmul.f32 %v2886, %v2886
        %v3055 = vmul.f32 %v2887, %v2887
        %v3056 = vmul.f32 %v2888, %v2888
        %v3057 = vmul.f32 %v2889, %v2889
        %v3058 = vmul.f32 %v2890, %v2890
        %v3059 = vmul.f32 %v2891, %v2891
        %v3060 = vmul.f32 %v2892, %v2892
        %v3061 = vmul.f32 %v2893, %v2893
        %v3062 = vmul.f32 %v2894, %v2894
        %v3063 = vmul.f32 %v2895, %v2895
        %v3064 = vmul.f32 %v2896, %v2896
        %v3065 = vmul.f32 %v2897, %v2897
        %v3066 = vmul.f32 %v2898, %v2898
        %v3067 = vmul.f32 %v2899, %v2899
        %v3068 = vmul.f32 %v2900, %v2900
        %v3069 = vmul.f32 %v2901, %v2901
        %v3070 = vadd.f32 %v3016, %v3017
        %v3071 = vadd.f32 %v3070, %v3018
        %v3072 = vadd.f32 %v3071, %v3019
        %v3073 = vadd.f32 %v3072, %v3020
        %v3074 = vadd.f32 %v3073, %v3021
        %v3075 = vadd.f32 %v3074, %v3022
        %v3076 = vadd.f32 %v3075, %v3023
        %v3077 = vadd.f32 %v3076, %v3024
        %v3078 = vadd.f32 %v3077, %v3025
        %v3079 = vadd.f32 %v3078, %v3026
        %v3080 = vadd.f32 %v3079, %v3027
        %v3081 = vadd.f32 %v3080, %v3028
        %v3082 = vadd.f32 %v3081, %v3029
        %v3083 = vadd.f32 %v3082, %v3030
        %v3084 = vadd.f32 %v3083, %v3031
        %v3085 = vadd.f32 %v3084, %v3032
        %v3086 = vadd.f32 %v3085, %v3033
        %v3087 = vadd.f32 %v3086, %v3034
        %v3088 = vadd.f32 %v3087, %v3035
        %v3089 = vadd.f32 %v3088, %v3036
        %v3090 = vadd.f32 %v3089, %v3037
        %v3091 = vadd.f32 %v3090, %v3038
        %v3092 = vadd.f32 %v3091, %v3039
        %v3093 = vadd.f32 %v3092, %v3040
        %v3094 = vadd.f32 %v3093, %v3041
        %v3095 = vadd.f32 %v3094, %v3042
        %v3096 = vadd.f32 %v3095, %v3043
        %v3097 = vadd.f32 %v3096, %v3044
        %v3098 = vadd.f32 %v3097, %v3045
        %v3099 = vadd.f32 %v3098, %v3046
        %v3100 = vadd.f32 %v3099, %v3047
        %v3101 = vadd.f32 %v3100, %v3048
        %v3102 = vadd.f32 %v3101, %v3049
        %v3103 = vadd.f32 %v3102, %v3050
        %v3104 = vadd.f32 %v3103, %v3051
        %v3105 = vadd.f32 %v3104, %v3052
        %v3106 = vadd.f32 %v3105, %v3053
        %v3107 = vadd.f32 %v3106, %v3054
        %v3108 = vadd.f32 %v3107, %v3055
        %v3109 = vadd.f32 %v3108, %v3056
        %v3110 = vadd.f32 %v3109, %v3057
        %v3111 = vadd.f32 %v3110, %v3058
        %v3112 = vadd.f32 %v3111, %v3059
        %v3113 = vadd.f32 %v3112, %v3060
        %v3114 = vadd.f32 %v3113, %v3061
        %v3115 = vadd.f32 %v3114, %v3062
        %v3116 = vadd.f32 %v3115, %v3063
        %v3117 = vadd.f32 %v3116, %v3064
        %v3118 = vadd.f32 %v3117, %v3065
        %v3119 = vadd.f32 %v3118, %v3066
        %v3120 = vadd.f32 %v3119, %v3067
        %v3121 = vadd.f32 %v3120, %v3068
        %v3122 = vadd.f32 %v3121, %v3069
        %v3123 = vrot.slane %v3122, 4
        %v3124 = vadd.f32 %v3122, %v3123
        %v3125 = vrot.slane %v3124, 2
        %v3126 = vadd.f32 %v3124, %v3125
        %v3127 = vrot.slane %v3126, 1
        %v3128 = vadd.f32 %v3126, %v3127
        %3129 = vst [vmem:[%s320] sm:$0x1] %v3128
        %s3130 = sand.u32 %s125, 1
        %s3131 = scalar_lea.sflag [#allocation4], %s3130
        %s3132 = sand.u32 %s125, 1
        %s3133 = smul.addr %s3132, 432
        %s3134 = scalar_lea.vmem [#allocation8], %s3133
        %s3135 = sand.u32 %s28, 1
        %s3136 = scalar_lea.sflag [#allocation10], %s3135
        %s3137 = sand.u32 %s151, 1
        %s3138 = scalar_lea.vmem [#allocation9], %s3137
        %s3139 = sand.u32 %s28, 1
        %s3140 = scalar_lea.sflag [#allocation10], %s3139
        %s3141 = sand.u32 %s177, 1
        %s3142 = scalar_lea.vmem [#allocation11], %s3141
        // Predicated region
        $region49: #{tpu_custom_call.1} parent=35 // pred_check
          %p3143 = pneg %p135
        $region50: #{tpu_custom_call.1} parent=35 // pred_check_branch
          %3145 = sbr.rel (%p3143) target = $region52
        $region51: #{tpu_custom_call.1} parent=35 // pred_region
          %3147 = vsyncadd %s3131, 0
          %s3148 = smul.addr %s28, 54
          %s3149 = smul.addr %s3148, 8
          %s3150 = scalar_lea.hbm %s4, %s3149
          %s3151 = sshll.u32 %s3134, 4
          %s3152 = int_to_ptr.vmem [resolvable:$true] %s3151
          %s3153 = sshll.u32 %s3150, 4
          %s3154 = int_to_ptr.hbm [resolvable:$true] %s3153
          %3159 = dma.vmem_to_hbm [thread:$0]  %s3152, 6912, %s3154, %s3131, 128, 128, 8
        $region52: #{tpu_custom_call.1} parent=35 // pred_fallthru
          _
        // Predicated region
        $region53: #{tpu_custom_call.1} parent=35 // pred_check
          %p3160 = pneg %p161
        $region54: #{tpu_custom_call.1} parent=35 // pred_check_branch
          %3162 = sbr.rel (%p3160) target = $region56
        $region55: #{tpu_custom_call.1} parent=35 // pred_region
          %3164 = vsyncadd %s3136, 0
          %s3165 = scalar_lea.hbm %s5, %s28
          %s3167 = sshll.u32 %s3138, 4
          %s3168 = int_to_ptr.vmem [resolvable:$true] %s3167
          %s3169 = sshll.u32 %s3165, 4
          %s3170 = int_to_ptr.hbm [resolvable:$true] %s3169
          %3172 = dma.vmem_to_hbm [thread:$0]  %s3168, 16, %s3170, %s3136
        $region56: #{tpu_custom_call.1} parent=35 // pred_fallthru
          _
        // Predicated region
        $region57: #{tpu_custom_call.1} parent=35 // pred_check
          %p3173 = pneg %p187
        $region58: #{tpu_custom_call.1} parent=35 // pred_check_branch
          %3175 = sbr.rel (%p3173) target = $region60
        $region59: #{tpu_custom_call.1} parent=35 // pred_region
          %3177 = vsyncadd %s3140, 0
          %s3178 = scalar_lea.hbm %s6, %s28
          %s3180 = sshll.u32 %s3142, 4
          %s3181 = int_to_ptr.vmem [resolvable:$true] %s3180
          %s3182 = sshll.u32 %s3178, 4
          %s3183 = int_to_ptr.hbm [resolvable:$true] %s3182
          %3185 = dma.vmem_to_hbm [thread:$0]  %s3181, 16, %s3183, %s3140
        $region60: #{tpu_custom_call.1} parent=35 // pred_fallthru
          _
      $region36: #{tpu_custom_call.1} parent=5 // pred_fallthru
        _
      %p3186 = scmp.le.s32.totalorder 2, %s23
      // Predicated region
      $region61: #{tpu_custom_call.1} parent=5 // pred_check
        %p3187 = pneg %p3186
      $region62: #{tpu_custom_call.1} parent=5 // pred_check_branch
        %3189 = sbr.rel (%p3187) target = $region64
      $region63: #{tpu_custom_call.1} parent=5 // pred_region
        %s3190 = ssub.s32 %s23, 2
        // Predicated region
        $region65: #{tpu_custom_call.1} parent=63 // pred_check
          %p3191 = pneg %p141
        $region66: #{tpu_custom_call.1} parent=63 // pred_check_branch
          %3193 = sbr.rel (%p3191) target = $region68
        $region67: #{tpu_custom_call.1} parent=63 // pred_region
          %s3194 = sand.u32 %s126, 1
          %s3195 = scalar_lea.sflag [#allocation4], %s3194
          %s3196 = sand.u32 %s126, 1
          %s3197 = smul.addr %s3196, 432
          %s3198 = scalar_lea.vmem [#allocation8], %s3197
          %3200 = dma.done %s3195, 6912
        $region68: #{tpu_custom_call.1} parent=63 // pred_fallthru
          _
        // Predicated region
        $region69: #{tpu_custom_call.1} parent=63 // pred_check
          %p3201 = pneg %p167
        $region70: #{tpu_custom_call.1} parent=63 // pred_check_branch
          %3203 = sbr.rel (%p3201) target = $region72
        $region71: #{tpu_custom_call.1} parent=63 // pred_region
          %s3204 = sand.u32 %s29, 1
          %s3205 = scalar_lea.sflag [#allocation10], %s3204
          %s3206 = sand.u32 %s152, 1
          %s3207 = scalar_lea.vmem [#allocation9], %s3206
          %3209 = dma.done %s3205, 16
        $region72: #{tpu_custom_call.1} parent=63 // pred_fallthru
          _
        // Predicated region
        $region73: #{tpu_custom_call.1} parent=63 // pred_check
          %p3210 = pneg %p193
        $region74: #{tpu_custom_call.1} parent=63 // pred_check_branch
          %3212 = sbr.rel (%p3210) target = $region76
        $region75: #{tpu_custom_call.1} parent=63 // pred_region
          %s3213 = sand.u32 %s29, 1
          %s3214 = scalar_lea.sflag [#allocation10], %s3213
          %s3215 = sand.u32 %s178, 1
          %s3216 = scalar_lea.vmem [#allocation11], %s3215
          %3218 = dma.done %s3214, 16
        $region76: #{tpu_custom_call.1} parent=63 // pred_fallthru
          _
      $region64: #{tpu_custom_call.1} parent=5 // pred_fallthru
        _
    $region6: #{tpu_custom_call.1} parent=1 // loop_footer
      %s27 = sadd.s32 1, %s23
    $region7: #{tpu_custom_call.1} parent=1 // loop_footer_branch
      %22 = sbr.rel target = $region3
    $region8: #{tpu_custom_call.1} parent=1 // loop_exit
      _
    %3219 = vsyncpa [#allocation3], 1
    %s3220 = scalar_lea.sflag [#allocation3], 1
    %3221 = vsyncpa %s3220, 1
    %3222 = vsyncpa [#allocation6], 1
    %3223 = vsyncpa [#allocation4], 1
    %s3224 = scalar_lea.sflag [#allocation4], 1
    %3225 = vsyncpa %s3224, 1
    %3226 = vsyncpa [#allocation10], 1
    %s3227 = scalar_lea.sflag [#allocation10], 1
    %3228 = vsyncpa %s3227, 1

</llo_original>
